<compile_context>
chip_gen: v7x
topology: tpu7x:2x2x1
jax: 0.10.0
libtpu: 0.0.40
codegen_flags: <defaults>
</compile_context>

<pallas_src>
import functools

import jax
import jax.numpy as jnp
from jax.experimental import pallas as pl
from jax.experimental.pallas import tpu as pltpu


_VMEM = pl.BlockSpec(memory_space=pltpu.MemorySpace.VMEM)


# ----------------------------- helper math -----------------------------

def _sigmoid(x):
    # sigmoid(x) = 0.5 * (tanh(x/2) + 1): transcendental stays on the EUP slot,
    # no f32 divide on the VALU critical path.
    return 0.5 * jnp.tanh(0.5 * x) + 0.5


def _lstm_cell(gates, c_prev, H):
    # PyTorch LSTM gate order: i, f, g, o.
    # NOTE: at H >= 128 these lane slices land on 128-lane boundaries and are free;
    # at tiny H they cost a few XLU lane selects (acceptable at toy sizes).
    i = _sigmoid(gates[:, 0 * H:1 * H])
    f = _sigmoid(gates[:, 1 * H:2 * H])
    g = jnp.tanh(gates[:, 2 * H:3 * H])
    o = _sigmoid(gates[:, 3 * H:4 * H])
    c_new = f * c_prev + i * g
    h_new = o * jnp.tanh(c_new)
    return h_new, c_new


# ----------------------------- Pallas kernels -----------------------------

def _linear_wt_kernel(x_ref, w_ref, b_ref, o_ref):
    # o = x @ w.T + b   (w stored PyTorch-style as (out_features, in_features))
    o_ref[...] = (jnp.dot(x_ref[...], w_ref[...].T,
                          preferred_element_type=jnp.float32) + b_ref[...])


def linear_wt(x, w, b, *, tm=256, tn=512):
    """x: (M, K) , w: (N, K) [PyTorch layout], b: (N,) -> (M, N) float32.

    Tiled over (M, N) so the (tied-embedding) generator weight never has to be
    fully VMEM resident; operands cast to bf16, accumulation in f32.
    """
    M, K = x.shape
    N = w.shape[0]
    tm = M if M <= tm else tm
    tn = N if N <= tn else tn
    grid = (pl.cdiv(M, tm), pl.cdiv(N, tn))
    return pl.pallas_call(
        _linear_wt_kernel,
        out_shape=jax.ShapeDtypeStruct((M, N), jnp.float32),
        grid_spec=pltpu.PrefetchScalarGridSpec(
            num_scalar_prefetch=0,
            grid=grid,
            in_specs=[
                pl.BlockSpec((tm, K), lambda i, j: (i, 0)),
                pl.BlockSpec((tn, K), lambda i, j: (j, 0)),
                pl.BlockSpec((1, tn), lambda i, j: (0, j)),
            ],
            out_specs=pl.BlockSpec((tm, tn), lambda i, j: (i, j)),
        ),
        compiler_params=pltpu.CompilerParams(
            dimension_semantics=("parallel", "parallel")),
    )(x.astype(jnp.bfloat16), w.astype(jnp.bfloat16),
      b.reshape(1, N).astype(jnp.float32))


def _bilstm_enc_kernel(T, Hd, xg_ref, whf_ref, whb_ref, len_ref, hN_ref, cN_ref):
    """Bidirectional encoder recurrence, single invocation, unrolled over T.

    xg_ref : (B, T, 8*Hd) f32  -- [fwd gates | bwd gates] pre-activations
    whf_ref/whb_ref : (Hd, 4*Hd) bf16  -- W_hh^T per direction
    len_ref : (B, 1) int32     -- valid lengths (pack_padded semantics)
    hN_ref/cN_ref : (B, 2*Hd) f32 -- concatenated [fwd, bwd] final states
    """
    B = hN_ref.shape[0]
    whf = whf_ref[...]
    whb = whb_ref[...]
    lengths = jnp.broadcast_to(len_ref[...], (B, Hd))  # hoisted broadcast

    zeros = jnp.zeros((B, Hd), jnp.float32)
    hf, cf, hb, cb = zeros, zeros, zeros, zeros

    for t in range(T):                       # trace-time constant -> fully unrolled
        tb = T - 1 - t
        # ---- forward direction, step t ----
        gf = xg_ref[:, t, 0:4 * Hd] + jnp.dot(
            hf.astype(whf.dtype), whf, preferred_element_type=jnp.float32)
        hf_n, cf_n = _lstm_cell(gf, cf, Hd)
        mf = lengths > t                     # padded steps do not update state
        hf = jnp.where(mf, hf_n, hf)
        cf = jnp.where(mf, cf_n, cf)
        # ---- backward direction, step T-1-t (reversal via index, no data flip) ----
        gb = xg_ref[:, tb, 4 * Hd:8 * Hd] + jnp.dot(
            hb.astype(whb.dtype), whb, preferred_element_type=jnp.float32)
        hb_n, cb_n = _lstm_cell(gb, cb, Hd)
        mb = lengths > tb
        hb = jnp.where(mb, hb_n, hb)
        cb = jnp.where(mb, cb_n, cb)

    hN_ref[...] = jnp.concatenate([hf, hb], axis=-1)
    cN_ref[...] = jnp.concatenate([cf, cb], axis=-1)


def bilstm_encoder_final(xg, whh_f_t, whh_b_t, lengths):
    """xg: (B, T, 8*Hd) fused fwd/bwd gate pre-activations -> final (h, c) (B, 2*Hd)."""
    B, T, _ = xg.shape
    Hd = whh_f_t.shape[0]
    kern = functools.partial(_bilstm_enc_kernel, T, Hd)
    return pl.pallas_call(
        kern,
        out_shape=(jax.ShapeDtypeStruct((B, 2 * Hd), jnp.float32),
                   jax.ShapeDtypeStruct((B, 2 * Hd), jnp.float32)),
        in_specs=[_VMEM, _VMEM, _VMEM, _VMEM],
        out_specs=(_VMEM, _VMEM),
    )(xg, whh_f_t, whh_b_t, lengths.reshape(B, 1).astype(jnp.int32))


def _lstm_dec_kernel(T, H, xg_ref, whh_ref, h0_ref, c0_ref, out_ref, hN_ref, cN_ref):
    """Decoder recurrence: no padding mask (specialized), unrolled over T."""
    whh = whh_ref[...]
    h = h0_ref[...]
    c = c0_ref[...]
    for t in range(T):
        g = xg_ref[:, t, :] + jnp.dot(
            h.astype(whh.dtype), whh, preferred_element_type=jnp.float32)
        h, c = _lstm_cell(g, c, H)
        out_ref[:, t, :] = h
    hN_ref[...] = h
    cN_ref[...] = c


def lstm_decoder(xg, whh_t, h0, c0):
    """xg: (B, T, 4H) gate pre-activations -> outputs (B, T, H), (hN, cN)."""
    B, T, _ = xg.shape
    H = whh_t.shape[0]
    kern = functools.partial(_lstm_dec_kernel, T, H)
    out, hN, cN = pl.pallas_call(
        kern,
        out_shape=(jax.ShapeDtypeStruct((B, T, H), jnp.float32),
                   jax.ShapeDtypeStruct((B, H), jnp.float32),
                   jax.ShapeDtypeStruct((B, H), jnp.float32)),
        in_specs=[_VMEM, _VMEM, _VMEM, _VMEM],
        out_specs=(_VMEM, _VMEM, _VMEM),
    )(xg, whh_t, h0, c0)
    return out, (hN, cN)


# --------------------------- parameters & model ---------------------------

def init_params(key, src_vocab, tgt_vocab, hidden, padding_idx=0):
    H, Hd = hidden, hidden // 2
    keys = jax.random.split(key, 16)

    def rnd(k, shape, scale=0.1):
        return scale * jax.random.normal(k, shape, dtype=jnp.float32)

    p = {}
    p["enc_emb"] = rnd(keys[0], (src_vocab, H)).at[padding_idx].set(0.0)
    # bidirectional encoder LSTM: per-direction hidden size = hidden // 2
    for d, base in (("fwd", 1), ("bwd", 5)):
        p[f"enc_{d}_w_ih"] = rnd(keys[base + 0], (4 * Hd, H))
        p[f"enc_{d}_w_hh"] = rnd(keys[base + 1], (4 * Hd, Hd))
        p[f"enc_{d}_b_ih"] = rnd(keys[base + 2], (4 * Hd,))
        p[f"enc_{d}_b_hh"] = rnd(keys[base + 3], (4 * Hd,))
    p["dec_emb"] = rnd(keys[9], (tgt_vocab, H)).at[padding_idx].set(0.0)
    p["dec_w_ih"] = rnd(keys[10], (4 * H, H))
    p["dec_w_hh"] = rnd(keys[11], (4 * H, H))
    p["dec_b_ih"] = rnd(keys[12], (4 * H,))
    p["dec_b_hh"] = rnd(keys[13], (4 * H,))
    # generator = nn.Linear(hidden, tgt_vocab); weight tied to decoder embedding
    p["gen_b"] = rnd(keys[14], (tgt_vocab,))
    return p


def seq2seq_forward(params, src, src_lengths, tgt, dec_hidden=None):
    B, Ts = src.shape
    H = params["enc_emb"].shape[1]
    Hd = H // 2

    # ----- Encoder: embedding + packed bidirectional LSTM -----
    src_emb = jnp.take(params["enc_emb"], src, axis=0)               # (B, Ts, H)
    # Fused fwd+bwd input projection: one matmul over the embedding.
    w_ih = jnp.concatenate([params["enc_fwd_w_ih"],
                            params["enc_bwd_w_ih"]], axis=0)         # (8Hd, H)
    b_ih = jnp.concatenate([params["enc_fwd_b_ih"] + params["enc_fwd_b_hh"],
                            params["enc_bwd_b_ih"] + params["enc_bwd_b_hh"]])
    xg_enc = linear_wt(src_emb.reshape(B * Ts, H), w_ih,
                       b_ih).reshape(B, Ts, 8 * Hd)
    hN, cN = bilstm_encoder_final(
        xg_enc,
        params["enc_fwd_w_hh"].T.astype(jnp.bfloat16),
        params["enc_bwd_w_hh"].T.astype(jnp.bfloat16),
        src_lengths)
    if dec_hidden is None:
        dec_hidden = (hN, cN)
    # TODO(synk): per-step encoder outputs / attention decoder path (attn != None)
    # are not implemented; the attn=None skeleton never consumes encoder_outputs.

    # ----- Decoder: embedding + LSTM (no mask; dropout=identity in eval) -----
    if tgt.shape[1] > 1:
        tgt = tgt[:, :-1]                    # skeleton drops the last target token
    Bt, Tt = tgt.shape
    tgt_emb = jnp.take(params["dec_emb"], tgt, axis=0)               # (B, Tt, H)
    xg_dec = linear_wt(tgt_emb.reshape(Bt * Tt, H), params["dec_w_ih"],
                       params["dec_b_ih"] + params["dec_b_hh"]
                       ).reshape(Bt, Tt, 4 * H)
    dec_out, dec_hidden = lstm_decoder(
        xg_dec, params["dec_w_hh"].T.astype(jnp.bfloat16),
        dec_hidden[0], dec_hidden[1])

    # ----- Generator: Linear(hidden, tgt_vocab), weight tied to dec embedding ----
    logits = linear_wt(dec_out.reshape(Bt * Tt, H), params["dec_emb"],
                       params["gen_b"]).reshape(Bt, Tt, -1)
    return logits, dec_hidden


# --------------------------------- driver ---------------------------------

if __name__ == "__main__":
    key = jax.random.PRNGKey(0)
    src_vocab, tgt_vocab, hidden = 40, 48, 32
    B, Ts, Tt = 2, 8, 8

    pkey, skey, tkey = jax.random.split(key, 3)
    params = init_params(pkey, src_vocab, tgt_vocab, hidden)

    src_lengths = jnp.array([8, 5], dtype=jnp.int32)
    src = jax.random.randint(skey, (B, Ts), 1, src_vocab).astype(jnp.int32)
    src = jnp.where(jnp.arange(Ts)[None, :] < src_lengths[:, None], src, 0)
    tgt = jax.random.randint(tkey, (B, Tt), 1, tgt_vocab).astype(jnp.int32)

    fwd = jax.jit(seq2seq_forward)
    logits, (hN, cN) = fwd(params, src, src_lengths, tgt)
    jax.block_until_ready((logits, hN, cN))

    assert logits.shape == (B, Tt - 1, tgt_vocab), logits.shape
    assert hN.shape == (B, hidden) and cN.shape == (B, hidden)
    assert bool(jnp.all(jnp.isfinite(logits)))
    print("KERNEL_OK")
</pallas_src>

<mosaic_0001>
module attributes {stable_mosaic.version = 11 : i64} {
  func.func @_linear_wt_kernel(%arg0: i32, %arg1: i32, %arg2: memref<16x32xbf16, #tpu.memory_space<vmem>>, %arg3: memref<128x32xbf16, #tpu.memory_space<vmem>>, %arg4: memref<1x128xf32, #tpu.memory_space<vmem>>, %arg5: memref<16x128xf32, #tpu.memory_space<vmem>>) attributes {dimension_semantics = [#tpu.dimension_semantics<parallel>, #tpu.dimension_semantics<parallel>], iteration_bounds = array<i64: 1, 1>, scalar_prefetch = 0 : i64, scratch_operands = 0 : i64, tpu.core_type = #tpu.core_type<tc>, window_params = [{transform_indices = @transform_0, window_bounds = array<i64: 16, 32>}, {transform_indices = @transform_1, window_bounds = array<i64: 128, 32>}, {transform_indices = @transform_2, window_bounds = array<i64: 1, 128>}, {transform_indices = @transform_3, window_bounds = array<i64: 16, 128>}]} {
    %c0 = arith.constant 0 : index
    %c0_0 = arith.constant 0 : index
    %0 = vector.load %arg2[%c0, %c0_0] : memref<16x32xbf16, #tpu.memory_space<vmem>>, vector<16x32xbf16>
    %c0_1 = arith.constant 0 : index
    %c0_2 = arith.constant 0 : index
    %1 = vector.load %arg3[%c0_1, %c0_2] : memref<128x32xbf16, #tpu.memory_space<vmem>>, vector<128x32xbf16>
    %2 = tpu.transpose %1, [1, 0] : vector<128x32xbf16> -> vector<32x128xbf16>
    %cst = arith.constant dense<0.000000e+00> : vector<16x128xf32>
    %3 = tpu.matmul %0, %2, %cst {dimension_numbers = #tpu.dot_dimension_numbers<[1], [0], [0], [1], [0, 0, 1, 1], [], []>} : vector<16x32xbf16>, vector<32x128xbf16>, vector<16x128xf32> -> vector<16x128xf32>
    %c0_3 = arith.constant 0 : index
    %c0_4 = arith.constant 0 : index
    %4 = vector.load %arg4[%c0_3, %c0_4] : memref<1x128xf32, #tpu.memory_space<vmem>>, vector<1x128xf32>
    %5 = vector.broadcast %4 : vector<1x128xf32> to vector<16x128xf32>
    %6 = arith.addf %3, %5 : vector<16x128xf32>
    %c0_5 = arith.constant 0 : index
    %c0_6 = arith.constant 0 : index
    %7 = vector.load %arg5[%c0_5, %c0_6] : memref<16x128xf32, #tpu.memory_space<vmem>>, vector<16x128xf32>
    tpu.vector_store %arg5[%c0_5, %c0_6], %6 {strides = array<i32>} : memref<16x128xf32, #tpu.memory_space<vmem>>, vector<16x128xf32>,
    return
  }
  func.func @transform_0(%arg0: i32, %arg1: i32) -> (i32, i32) {
    %c0_i32 = arith.constant 0 : i32
    %c0_i32_0 = arith.constant 0 : i32
    return %arg0, %c0_i32 : i32, i32
  }
  func.func @transform_1(%arg0: i32, %arg1: i32) -> (i32, i32) {
    %c0_i32 = arith.constant 0 : i32
    %c0_i32_0 = arith.constant 0 : i32
    return %arg1, %c0_i32 : i32, i32
  }
  func.func @transform_2(%arg0: i32, %arg1: i32) -> (i32, i32) {
    %c0_i32 = arith.constant 0 : i32
    %c0_i32_0 = arith.constant 0 : i32
    return %c0_i32, %arg1 : i32, i32
  }
  func.func @transform_3(%arg0: i32, %arg1: i32) -> (i32, i32) {
    %c0_i32 = arith.constant 0 : i32
    return %arg0, %arg1 : i32, i32
  }
}

module attributes {stable_mosaic.version = 11 : i64} {
  func.func @_bilstm_enc_kernel(%arg0: memref<2x8x128xf32, #tpu.memory_space<vmem>>, %arg1: memref<16x64xbf16, #tpu.memory_space<vmem>>, %arg2: memref<16x64xbf16, #tpu.memory_space<vmem>>, %arg3: memref<2x1xi32, #tpu.memory_space<vmem>>, %arg4: memref<2x32xf32, #tpu.memory_space<vmem>>, %arg5: memref<2x32xf32, #tpu.memory_space<vmem>>) attributes {dimension_semantics = [], scalar_prefetch = 0 : i64, scratch_operands = 0 : i64, tpu.core_type = #tpu.core_type<tc>} {
    %c0 = arith.constant 0 : index
    %c0_0 = arith.constant 0 : index
    %0 = vector.load %arg1[%c0, %c0_0] : memref<16x64xbf16, #tpu.memory_space<vmem>>, vector<16x64xbf16>
    %c0_1 = arith.constant 0 : index
    %c0_2 = arith.constant 0 : index
    %1 = vector.load %arg2[%c0_1, %c0_2] : memref<16x64xbf16, #tpu.memory_space<vmem>>, vector<16x64xbf16>
    %c0_3 = arith.constant 0 : index
    %c0_4 = arith.constant 0 : index
    %2 = vector.load %arg3[%c0_3, %c0_4] : memref<2x1xi32, #tpu.memory_space<vmem>>, vector<2x1xi32>
    %3 = vector.shape_cast %2 : vector<2x1xi32> to vector<2x1xi32>
    %4 = vector.broadcast %3 : vector<2x1xi32> to vector<2x16xi32>
    %cst = arith.constant 0.000000e+00 : f32
    %5 = vector.broadcast %cst : f32 to vector<2x16xf32>
    %c0_5 = arith.constant 0 : index
    %c0_6 = arith.constant 0 : index
    %c0_7 = arith.constant 0 : index
    %6 = vector.load %arg0[%c0_5, %c0_6, %c0_7] : memref<2x8x128xf32, #tpu.memory_space<vmem>>, vector<2x1x64xf32>
    %7 = vector.shape_cast %6 : vector<2x1x64xf32> to vector<2x64xf32>
    %8 = arith.truncf %5 : vector<2x16xf32> to vector<2x16xbf16>
    %cst_8 = arith.constant dense<0.000000e+00> : vector<2x64xf32>
    %9 = tpu.matmul %8, %0, %cst_8 {dimension_numbers = #tpu.dot_dimension_numbers<[1], [0], [0], [1], [0, 0, 1, 1], [], []>} : vector<2x16xbf16>, vector<16x64xbf16>, vector<2x64xf32> -> vector<2x64xf32>
    %10 = arith.addf %7, %9 : vector<2x64xf32>
    %11 = vector.extract_strided_slice %10 {offsets = [0, 0], sizes = [2, 16], strides = [1, 1]} : vector<2x64xf32> to vector<2x16xf32>
    %cst_9 = arith.constant 5.000000e-01 : f32
    %12 = vector.broadcast %cst_9 : f32 to vector<2x16xf32>
    %13 = arith.mulf %12, %11 : vector<2x16xf32>
    %14 = math.tanh %13 : vector<2x16xf32>
    %cst_10 = arith.constant 5.000000e-01 : f32
    %15 = vector.broadcast %cst_10 : f32 to vector<2x16xf32>
    %16 = arith.mulf %15, %14 : vector<2x16xf32>
    %cst_11 = arith.constant 5.000000e-01 : f32
    %17 = vector.broadcast %cst_11 : f32 to vector<2x16xf32>
    %18 = arith.addf %16, %17 : vector<2x16xf32>
    %19 = vector.extract_strided_slice %10 {offsets = [0, 16], sizes = [2, 16], strides = [1, 1]} : vector<2x64xf32> to vector<2x16xf32>
    %cst_12 = arith.constant 5.000000e-01 : f32
    %20 = vector.broadcast %cst_12 : f32 to vector<2x16xf32>
    %21 = arith.mulf %20, %19 : vector<2x16xf32>
    %22 = math.tanh %21 : vector<2x16xf32>
    %cst_13 = arith.constant 5.000000e-01 : f32
    %23 = vector.broadcast %cst_13 : f32 to vector<2x16xf32>
    %24 = arith.mulf %23, %22 : vector<2x16xf32>
    %cst_14 = arith.constant 5.000000e-01 : f32
    %25 = vector.broadcast %cst_14 : f32 to vector<2x16xf32>
    %26 = arith.addf %24, %25 : vector<2x16xf32>
    %27 = vector.extract_strided_slice %10 {offsets = [0, 32], sizes = [2, 16], strides = [1, 1]} : vector<2x64xf32> to vector<2x16xf32>
    %28 = math.tanh %27 : vector<2x16xf32>
    %29 = vector.extract_strided_slice %10 {offsets = [0, 48], sizes = [2, 16], strides = [1, 1]} : vector<2x64xf32> to vector<2x16xf32>
    %cst_15 = arith.constant 5.000000e-01 : f32
    %30 = vector.broadcast %cst_15 : f32 to vector<2x16xf32>
    %31 = arith.mulf %30, %29 : vector<2x16xf32>
    %32 = math.tanh %31 : vector<2x16xf32>
    %cst_16 = arith.constant 5.000000e-01 : f32
    %33 = vector.broadcast %cst_16 : f32 to vector<2x16xf32>
    %34 = arith.mulf %33, %32 : vector<2x16xf32>
    %cst_17 = arith.constant 5.000000e-01 : f32
    %35 = vector.broadcast %cst_17 : f32 to vector<2x16xf32>
    %36 = arith.addf %34, %35 : vector<2x16xf32>
    %37 = arith.mulf %26, %5 : vector<2x16xf32>
    %38 = arith.mulf %18, %28 : vector<2x16xf32>
    %39 = arith.addf %37, %38 : vector<2x16xf32>
    %40 = math.tanh %39 : vector<2x16xf32>
    %41 = arith.mulf %36, %40 : vector<2x16xf32>
    %c0_i32 = arith.constant 0 : i32
    %42 = vector.broadcast %c0_i32 : i32 to vector<2x16xi32>
    %43 = arith.cmpi sgt, %4, %42 : vector<2x16xi32>
    %44 = arith.select %43, %41, %5 : vector<2x16xi1>, vector<2x16xf32>
    %45 = arith.select %43, %39, %5 : vector<2x16xi1>, vector<2x16xf32>
    %c0_18 = arith.constant 0 : index
    %c7 = arith.constant 7 : index
    %c64 = arith.constant 64 : index
    %46 = vector.load %arg0[%c0_18, %c7, %c64] : memref<2x8x128xf32, #tpu.memory_space<vmem>>, vector<2x1x64xf32>
    %47 = vector.shape_cast %46 : vector<2x1x64xf32> to vector<2x64xf32>
    %48 = arith.truncf %5 : vector<2x16xf32> to vector<2x16xbf16>
    %cst_19 = arith.constant dense<0.000000e+00> : vector<2x64xf32>
    %49 = tpu.matmul %48, %1, %cst_19 {dimension_numbers = #tpu.dot_dimension_numbers<[1], [0], [0], [1], [0, 0, 1, 1], [], []>} : vector<2x16xbf16>, vector<16x64xbf16>, vector<2x64xf32> -> vector<2x64xf32>
    %50 = arith.addf %47, %49 : vector<2x64xf32>
    %51 = vector.extract_strided_slice %50 {offsets = [0, 0], sizes = [2, 16], strides = [1, 1]} : vector<2x64xf32> to vector<2x16xf32>
    %cst_20 = arith.constant 5.000000e-01 : f32
    %52 = vector.broadcast %cst_20 : f32 to vector<2x16xf32>
    %53 = arith.mulf %52, %51 : vector<2x16xf32>
    %54 = math.tanh %53 : vector<2x16xf32>
    %cst_21 = arith.constant 5.000000e-01 : f32
    %55 = vector.broadcast %cst_21 : f32 to vector<2x16xf32>
    %56 = arith.mulf %55, %54 : vector<2x16xf32>
    %cst_22 = arith.constant 5.000000e-01 : f32
    %57 = vector.broadcast %cst_22 : f32 to vector<2x16xf32>
    %58 = arith.addf %56, %57 : vector<2x16xf32>
    %59 = vector.extract_strided_slice %50 {offsets = [0, 16], sizes = [2, 16], strides = [1, 1]} : vector<2x64xf32> to vector<2x16xf32>
    %cst_23 = arith.constant 5.000000e-01 : f32
    %60 = vector.broadcast %cst_23 : f32 to vector<2x16xf32>
    %61 = arith.mulf %60, %59 : vector<2x16xf32>
    %62 = math.tanh %61 : vector<2x16xf32>
    %cst_24 = arith.constant 5.000000e-01 : f32
    %63 = vector.broadcast %cst_24 : f32 to vector<2x16xf32>
    %64 = arith.mulf %63, %62 : vector<2x16xf32>
    %cst_25 = arith.constant 5.000000e-01 : f32
    %65 = vector.broadcast %cst_25 : f32 to vector<2x16xf32>
    %66 = arith.addf %64, %65 : vector<2x16xf32>
    %67 = vector.extract_strided_slice %50 {offsets = [0, 32], sizes = [2, 16], strides = [1, 1]} : vector<2x64xf32> to vector<2x16xf32>
    %68 = math.tanh %67 : vector<2x16xf32>
    %69 = vector.extract_strided_slice %50 {offsets = [0, 48], sizes = [2, 16], strides = [1, 1]} : vector<2x64xf32> to vector<2x16xf32>
    %cst_26 = arith.constant 5.000000e-01 : f32
    %70 = vector.broadcast %cst_26 : f32 to vector<2x16xf32>
    %71 = arith.mulf %70, %69 : vector<2x16xf32>
    %72 = math.tanh %71 : vector<2x16xf32>
    %cst_27 = arith.constant 5.000000e-01 : f32
    %73 = vector.broadcast %cst_27 : f32 to vector<2x16xf32>
    %74 = arith.mulf %73, %72 : vector<2x16xf32>
    %cst_28 = arith.constant 5.000000e-01 : f32
    %75 = vector.broadcast %cst_28 : f32 to vector<2x16xf32>
    %76 = arith.addf %74, %75 : vector<2x16xf32>
    %77 = arith.mulf %66, %5 : vector<2x16xf32>
    %78 = arith.mulf %58, %68 : vector<2x16xf32>
    %79 = arith.addf %77, %78 : vector<2x16xf32>
    %80 = math.tanh %79 : vector<2x16xf32>
    %81 = arith.mulf %76, %80 : vector<2x16xf32>
    %c7_i32 = arith.constant 7 : i32
    %82 = vector.broadcast %c7_i32 : i32 to vector<2x16xi32>
    %83 = arith.cmpi sgt, %4, %82 : vector<2x16xi32>
    %84 = arith.select %83, %81, %5 : vector<2x16xi1>, vector<2x16xf32>
    %85 = arith.select %83, %79, %5 : vector<2x16xi1>, vector<2x16xf32>
    %c0_29 = arith.constant 0 : index
    %c1 = arith.constant 1 : index
    %c0_30 = arith.constant 0 : index
    %86 = vector.load %arg0[%c0_29, %c1, %c0_30] : memref<2x8x128xf32, #tpu.memory_space<vmem>>, vector<2x1x64xf32>
    %87 = vector.shape_cast %86 : vector<2x1x64xf32> to vector<2x64xf32>
    %88 = arith.truncf %44 : vector<2x16xf32> to vector<2x16xbf16>
    %cst_31 = arith.constant dense<0.000000e+00> : vector<2x64xf32>
    %89 = tpu.matmul %88, %0, %cst_31 {dimension_numbers = #tpu.dot_dimension_numbers<[1], [0], [0], [1], [0, 0, 1, 1], [], []>} : vector<2x16xbf16>, vector<16x64xbf16>, vector<2x64xf32> -> vector<2x64xf32>
    %90 = arith.addf %87, %89 : vector<2x64xf32>
    %91 = vector.extract_strided_slice %90 {offsets = [0, 0], sizes = [2, 16], strides = [1, 1]} : vector<2x64xf32> to vector<2x16xf32>
    %cst_32 = arith.constant 5.000000e-01 : f32
    %92 = vector.broadcast %cst_32 : f32 to vector<2x16xf32>
    %93 = arith.mulf %92, %91 : vector<2x16xf32>
    %94 = math.tanh %93 : vector<2x16xf32>
    %cst_33 = arith.constant 5.000000e-01 : f32
    %95 = vector.broadcast %cst_33 : f32 to vector<2x16xf32>
    %96 = arith.mulf %95, %94 : vector<2x16xf32>
    %cst_34 = arith.constant 5.000000e-01 : f32
    %97 = vector.broadcast %cst_34 : f32 to vector<2x16xf32>
    %98 = arith.addf %96, %97 : vector<2x16xf32>
    %99 = vector.extract_strided_slice %90 {offsets = [0, 16], sizes = [2, 16], strides = [1, 1]} : vector<2x64xf32> to vector<2x16xf32>
    %cst_35 = arith.constant 5.000000e-01 : f32
    %100 = vector.broadcast %cst_35 : f32 to vector<2x16xf32>
    %101 = arith.mulf %100, %99 : vector<2x16xf32>
    %102 = math.tanh %101 : vector<2x16xf32>
    %cst_36 = arith.constant 5.000000e-01 : f32
    %103 = vector.broadcast %cst_36 : f32 to vector<2x16xf32>
    %104 = arith.mulf %103, %102 : vector<2x16xf32>
    %cst_37 = arith.constant 5.000000e-01 : f32
    %105 = vector.broadcast %cst_37 : f32 to vector<2x16xf32>
    %106 = arith.addf %104, %105 : vector<2x16xf32>
    %107 = vector.extract_strided_slice %90 {offsets = [0, 32], sizes = [2, 16], strides = [1, 1]} : vector<2x64xf32> to vector<2x16xf32>
    %108 = math.tanh %107 : vector<2x16xf32>
    %109 = vector.extract_strided_slice %90 {offsets = [0, 48], sizes = [2, 16], strides = [1, 1]} : vector<2x64xf32> to vector<2x16xf32>
    %cst_38 = arith.constant 5.000000e-01 : f32
    %110 = vector.broadcast %cst_38 : f32 to vector<2x16xf32>
    %111 = arith.mulf %110, %109 : vector<2x16xf32>
    %112 = math.tanh %111 : vector<2x16xf32>
    %cst_39 = arith.constant 5.000000e-01 : f32
    %113 = vector.broadcast %cst_39 : f32 to vector<2x16xf32>
    %114 = arith.mulf %113, %112 : vector<2x16xf32>
    %cst_40 = arith.constant 5.000000e-01 : f32
    %115 = vector.broadcast %cst_40 : f32 to vector<2x16xf32>
    %116 = arith.addf %114, %115 : vector<2x16xf32>
    %117 = arith.mulf %106, %45 : vector<2x16xf32>
    %118 = arith.mulf %98, %108 : vector<2x16xf32>
    %119 = arith.addf %117, %118 : vector<2x16xf32>
    %120 = math.tanh %119 : vector<2x16xf32>
    %121 = arith.mulf %116, %120 : vector<2x16xf32>
    %c1_i32 = arith.constant 1 : i32
    %122 = vector.broadcast %c1_i32 : i32 to vector<2x16xi32>
    %123 = arith.cmpi sgt, %4, %122 : vector<2x16xi32>
    %124 = arith.select %123, %121, %44 : vector<2x16xi1>, vector<2x16xf32>
    %125 = arith.select %123, %119, %45 : vector<2x16xi1>, vector<2x16xf32>
    %c0_41 = arith.constant 0 : index
    %c6 = arith.constant 6 : index
    %c64_42 = arith.constant 64 : index
    %126 = vector.load %arg0[%c0_41, %c6, %c64_42] : memref<2x8x128xf32, #tpu.memory_space<vmem>>, vector<2x1x64xf32>
    %127 = vector.shape_cast %126 : vector<2x1x64xf32> to vector<2x64xf32>
    %128 = arith.truncf %84 : vector<2x16xf32> to vector<2x16xbf16>
    %cst_43 = arith.constant dense<0.000000e+00> : vector<2x64xf32>
    %129 = tpu.matmul %128, %1, %cst_43 {dimension_numbers = #tpu.dot_dimension_numbers<[1], [0], [0], [1], [0, 0, 1, 1], [], []>} : vector<2x16xbf16>, vector<16x64xbf16>, vector<2x64xf32> -> vector<2x64xf32>
    %130 = arith.addf %127, %129 : vector<2x64xf32>
    %131 = vector.extract_strided_slice %130 {offsets = [0, 0], sizes = [2, 16], strides = [1, 1]} : vector<2x64xf32> to vector<2x16xf32>
    %cst_44 = arith.constant 5.000000e-01 : f32
    %132 = vector.broadcast %cst_44 : f32 to vector<2x16xf32>
    %133 = arith.mulf %132, %131 : vector<2x16xf32>
    %134 = math.tanh %133 : vector<2x16xf32>
    %cst_45 = arith.constant 5.000000e-01 : f32
    %135 = vector.broadcast %cst_45 : f32 to vector<2x16xf32>
    %136 = arith.mulf %135, %134 : vector<2x16xf32>
    %cst_46 = arith.constant 5.000000e-01 : f32
    %137 = vector.broadcast %cst_46 : f32 to vector<2x16xf32>
    %138 = arith.addf %136, %137 : vector<2x16xf32>
    %139 = vector.extract_strided_slice %130 {offsets = [0, 16], sizes = [2, 16], strides = [1, 1]} : vector<2x64xf32> to vector<2x16xf32>
    %cst_47 = arith.constant 5.000000e-01 : f32
    %140 = vector.broadcast %cst_47 : f32 to vector<2x16xf32>
    %141 = arith.mulf %140, %139 : vector<2x16xf32>
    %142 = math.tanh %141 : vector<2x16xf32>
    %cst_48 = arith.constant 5.000000e-01 : f32
    %143 = vector.broadcast %cst_48 : f32 to vector<2x16xf32>
    %144 = arith.mulf %143, %142 : vector<2x16xf32>
    %cst_49 = arith.constant 5.000000e-01 : f32
    %145 = vector.broadcast %cst_49 : f32 to vector<2x16xf32>
    %146 = arith.addf %144, %145 : vector<2x16xf32>
    %147 = vector.extract_strided_slice %130 {offsets = [0, 32], sizes = [2, 16], strides = [1, 1]} : vector<2x64xf32> to vector<2x16xf32>
    %148 = math.tanh %147 : vector<2x16xf32>
    %149 = vector.extract_strided_slice %130 {offsets = [0, 48], sizes = [2, 16], strides = [1, 1]} : vector<2x64xf32> to vector<2x16xf32>
    %cst_50 = arith.constant 5.000000e-01 : f32
    %150 = vector.broadcast %cst_50 : f32 to vector<2x16xf32>
    %151 = arith.mulf %150, %149 : vector<2x16xf32>
    %152 = math.tanh %151 : vector<2x16xf32>
    %cst_51 = arith.constant 5.000000e-01 : f32
    %153 = vector.broadcast %cst_51 : f32 to vector<2x16xf32>
    %154 = arith.mulf %153, %152 : vector<2x16xf32>
    %cst_52 = arith.constant 5.000000e-01 : f32
    %155 = vector.broadcast %cst_52 : f32 to vector<2x16xf32>
    %156 = arith.addf %154, %155 : vector<2x16xf32>
    %157 = arith.mulf %146, %85 : vector<2x16xf32>
    %158 = arith.mulf %138, %148 : vector<2x16xf32>
    %159 = arith.addf %157, %158 : vector<2x16xf32>
    %160 = math.tanh %159 : vector<2x16xf32>
    %161 = arith.mulf %156, %160 : vector<2x16xf32>
    %c6_i32 = arith.constant 6 : i32
    %162 = vector.broadcast %c6_i32 : i32 to vector<2x16xi32>
    %163 = arith.cmpi sgt, %4, %162 : vector<2x16xi32>
    %164 = arith.select %163, %161, %84 : vector<2x16xi1>, vector<2x16xf32>
    %165 = arith.select %163, %159, %85 : vector<2x16xi1>, vector<2x16xf32>
    %c0_53 = arith.constant 0 : index
    %c2 = arith.constant 2 : index
    %c0_54 = arith.constant 0 : index
    %166 = vector.load %arg0[%c0_53, %c2, %c0_54] : memref<2x8x128xf32, #tpu.memory_space<vmem>>, vector<2x1x64xf32>
    %167 = vector.shape_cast %166 : vector<2x1x64xf32> to vector<2x64xf32>
    %168 = arith.truncf %124 : vector<2x16xf32> to vector<2x16xbf16>
    %cst_55 = arith.constant dense<0.000000e+00> : vector<2x64xf32>
    %169 = tpu.matmul %168, %0, %cst_55 {dimension_numbers = #tpu.dot_dimension_numbers<[1], [0], [0], [1], [0, 0, 1, 1], [], []>} : vector<2x16xbf16>, vector<16x64xbf16>, vector<2x64xf32> -> vector<2x64xf32>
    %170 = arith.addf %167, %169 : vector<2x64xf32>
    %171 = vector.extract_strided_slice %170 {offsets = [0, 0], sizes = [2, 16], strides = [1, 1]} : vector<2x64xf32> to vector<2x16xf32>
    %cst_56 = arith.constant 5.000000e-01 : f32
    %172 = vector.broadcast %cst_56 : f32 to vector<2x16xf32>
    %173 = arith.mulf %172, %171 : vector<2x16xf32>
    %174 = math.tanh %173 : vector<2x16xf32>
    %cst_57 = arith.constant 5.000000e-01 : f32
    %175 = vector.broadcast %cst_57 : f32 to vector<2x16xf32>
    %176 = arith.mulf %175, %174 : vector<2x16xf32>
    %cst_58 = arith.constant 5.000000e-01 : f32
    %177 = vector.broadcast %cst_58 : f32 to vector<2x16xf32>
    %178 = arith.addf %176, %177 : vector<2x16xf32>
    %179 = vector.extract_strided_slice %170 {offsets = [0, 16], sizes = [2, 16], strides = [1, 1]} : vector<2x64xf32> to vector<2x16xf32>
    %cst_59 = arith.constant 5.000000e-01 : f32
    %180 = vector.broadcast %cst_59 : f32 to vector<2x16xf32>
    %181 = arith.mulf %180, %179 : vector<2x16xf32>
    %182 = math.tanh %181 : vector<2x16xf32>
    %cst_60 = arith.constant 5.000000e-01 : f32
    %183 = vector.broadcast %cst_60 : f32 to vector<2x16xf32>
    %184 = arith.mulf %183, %182 : vector<2x16xf32>
    %cst_61 = arith.constant 5.000000e-01 : f32
    %185 = vector.broadcast %cst_61 : f32 to vector<2x16xf32>
    %186 = arith.addf %184, %185 : vector<2x16xf32>
    %187 = vector.extract_strided_slice %170 {offsets = [0, 32], sizes = [2, 16], strides = [1, 1]} : vector<2x64xf32> to vector<2x16xf32>
    %188 = math.tanh %187 : vector<2x16xf32>
    %189 = vector.extract_strided_slice %170 {offsets = [0, 48], sizes = [2, 16], strides = [1, 1]} : vector<2x64xf32> to vector<2x16xf32>
    %cst_62 = arith.constant 5.000000e-01 : f32
    %190 = vector.broadcast %cst_62 : f32 to vector<2x16xf32>
    %191 = arith.mulf %190, %189 : vector<2x16xf32>
    %192 = math.tanh %191 : vector<2x16xf32>
    %cst_63 = arith.constant 5.000000e-01 : f32
    %193 = vector.broadcast %cst_63 : f32 to vector<2x16xf32>
    %194 = arith.mulf %193, %192 : vector<2x16xf32>
    %cst_64 = arith.constant 5.000000e-01 : f32
    %195 = vector.broadcast %cst_64 : f32 to vector<2x16xf32>
    %196 = arith.addf %194, %195 : vector<2x16xf32>
    %197 = arith.mulf %186, %125 : vector<2x16xf32>
    %198 = arith.mulf %178, %188 : vector<2x16xf32>
    %199 = arith.addf %197, %198 : vector<2x16xf32>
    %200 = math.tanh %199 : vector<2x16xf32>
    %201 = arith.mulf %196, %200 : vector<2x16xf32>
    %c2_i32 = arith.constant 2 : i32
    %202 = vector.broadcast %c2_i32 : i32 to vector<2x16xi32>
    %203 = arith.cmpi sgt, %4, %202 : vector<2x16xi32>
    %204 = arith.select %203, %201, %124 : vector<2x16xi1>, vector<2x16xf32>
    %205 = arith.select %203, %199, %125 : vector<2x16xi1>, vector<2x16xf32>
    %c0_65 = arith.constant 0 : index
    %c5 = arith.constant 5 : index
    %c64_66 = arith.constant 64 : index
    %206 = vector.load %arg0[%c0_65, %c5, %c64_66] : memref<2x8x128xf32, #tpu.memory_space<vmem>>, vector<2x1x64xf32>
    %207 = vector.shape_cast %206 : vector<2x1x64xf32> to vector<2x64xf32>
    %208 = arith.truncf %164 : vector<2x16xf32> to vector<2x16xbf16>
    %cst_67 = arith.constant dense<0.000000e+00> : vector<2x64xf32>
    %209 = tpu.matmul %208, %1, %cst_67 {dimension_numbers = #tpu.dot_dimension_numbers<[1], [0], [0], [1], [0, 0, 1, 1], [], []>} : vector<2x16xbf16>, vector<16x64xbf16>, vector<2x64xf32> -> vector<2x64xf32>
    %210 = arith.addf %207, %209 : vector<2x64xf32>
    %211 = vector.extract_strided_slice %210 {offsets = [0, 0], sizes = [2, 16], strides = [1, 1]} : vector<2x64xf32> to vector<2x16xf32>
    %cst_68 = arith.constant 5.000000e-01 : f32
    %212 = vector.broadcast %cst_68 : f32 to vector<2x16xf32>
    %213 = arith.mulf %212, %211 : vector<2x16xf32>
    %214 = math.tanh %213 : vector<2x16xf32>
    %cst_69 = arith.constant 5.000000e-01 : f32
    %215 = vector.broadcast %cst_69 : f32 to vector<2x16xf32>
    %216 = arith.mulf %215, %214 : vector<2x16xf32>
    %cst_70 = arith.constant 5.000000e-01 : f32
    %217 = vector.broadcast %cst_70 : f32 to vector<2x16xf32>
    %218 = arith.addf %216, %217 : vector<2x16xf32>
    %219 = vector.extract_strided_slice %210 {offsets = [0, 16], sizes = [2, 16], strides = [1, 1]} : vector<2x64xf32> to vector<2x16xf32>
    %cst_71 = arith.constant 5.000000e-01 : f32
    %220 = vector.broadcast %cst_71 : f32 to vector<2x16xf32>
    %221 = arith.mulf %220, %219 : vector<2x16xf32>
    %222 = math.tanh %221 : vector<2x16xf32>
    %cst_72 = arith.constant 5.000000e-01 : f32
    %223 = vector.broadcast %cst_72 : f32 to vector<2x16xf32>
    %224 = arith.mulf %223, %222 : vector<2x16xf32>
    %cst_73 = arith.constant 5.000000e-01 : f32
    %225 = vector.broadcast %cst_73 : f32 to vector<2x16xf32>
    %226 = arith.addf %224, %225 : vector<2x16xf32>
    %227 = vector.extract_strided_slice %210 {offsets = [0, 32], sizes = [2, 16], strides = [1, 1]} : vector<2x64xf32> to vector<2x16xf32>
    %228 = math.tanh %227 : vector<2x16xf32>
    %229 = vector.extract_strided_slice %210 {offsets = [0, 48], sizes = [2, 16], strides = [1, 1]} : vector<2x64xf32> to vector<2x16xf32>
    %cst_74 = arith.constant 5.000000e-01 : f32
    %230 = vector.broadcast %cst_74 : f32 to vector<2x16xf32>
    %231 = arith.mulf %230, %229 : vector<2x16xf32>
    %232 = math.tanh %231 : vector<2x16xf32>
    %cst_75 = arith.constant 5.000000e-01 : f32
    %233 = vector.broadcast %cst_75 : f32 to vector<2x16xf32>
    %234 = arith.mulf %233, %232 : vector<2x16xf32>
    %cst_76 = arith.constant 5.000000e-01 : f32
    %235 = vector.broadcast %cst_76 : f32 to vector<2x16xf32>
    %236 = arith.addf %234, %235 : vector<2x16xf32>
    %237 = arith.mulf %226, %165 : vector<2x16xf32>
    %238 = arith.mulf %218, %228 : vector<2x16xf32>
    %239 = arith.addf %237, %238 : vector<2x16xf32>
    %240 = math.tanh %239 : vector<2x16xf32>
    %241 = arith.mulf %236, %240 : vector<2x16xf32>
    %c5_i32 = arith.constant 5 : i32
    %242 = vector.broadcast %c5_i32 : i32 to vector<2x16xi32>
    %243 = arith.cmpi sgt, %4, %242 : vector<2x16xi32>
    %244 = arith.select %243, %241, %164 : vector<2x16xi1>, vector<2x16xf32>
    %245 = arith.select %243, %239, %165 : vector<2x16xi1>, vector<2x16xf32>
    %c0_77 = arith.constant 0 : index
    %c3 = arith.constant 3 : index
    %c0_78 = arith.constant 0 : index
    %246 = vector.load %arg0[%c0_77, %c3, %c0_78] : memref<2x8x128xf32, #tpu.memory_space<vmem>>, vector<2x1x64xf32>
    %247 = vector.shape_cast %246 : vector<2x1x64xf32> to vector<2x64xf32>
    %248 = arith.truncf %204 : vector<2x16xf32> to vector<2x16xbf16>
    %cst_79 = arith.constant dense<0.000000e+00> : vector<2x64xf32>
    %249 = tpu.matmul %248, %0, %cst_79 {dimension_numbers = #tpu.dot_dimension_numbers<[1], [0], [0], [1], [0, 0, 1, 1], [], []>} : vector<2x16xbf16>, vector<16x64xbf16>, vector<2x64xf32> -> vector<2x64xf32>
    %250 = arith.addf %247, %249 : vector<2x64xf32>
    %251 = vector.extract_strided_slice %250 {offsets = [0, 0], sizes = [2, 16], strides = [1, 1]} : vector<2x64xf32> to vector<2x16xf32>
    %cst_80 = arith.constant 5.000000e-01 : f32
    %252 = vector.broadcast %cst_80 : f32 to vector<2x16xf32>
    %253 = arith.mulf %252, %251 : vector<2x16xf32>
    %254 = math.tanh %253 : vector<2x16xf32>
    %cst_81 = arith.constant 5.000000e-01 : f32
    %255 = vector.broadcast %cst_81 : f32 to vector<2x16xf32>
    %256 = arith.mulf %255, %254 : vector<2x16xf32>
    %cst_82 = arith.constant 5.000000e-01 : f32
    %257 = vector.broadcast %cst_82 : f32 to vector<2x16xf32>
    %258 = arith.addf %256, %257 : vector<2x16xf32>
    %259 = vector.extract_strided_slice %250 {offsets = [0, 16], sizes = [2, 16], strides = [1, 1]} : vector<2x64xf32> to vector<2x16xf32>
    %cst_83 = arith.constant 5.000000e-01 : f32
    %260 = vector.broadcast %cst_83 : f32 to vector<2x16xf32>
    %261 = arith.mulf %260, %259 : vector<2x16xf32>
    %262 = math.tanh %261 : vector<2x16xf32>
    %cst_84 = arith.constant 5.000000e-01 : f32
    %263 = vector.broadcast %cst_84 : f32 to vector<2x16xf32>
    %264 = arith.mulf %263, %262 : vector<2x16xf32>
    %cst_85 = arith.constant 5.000000e-01 : f32
    %265 = vector.broadcast %cst_85 : f32 to vector<2x16xf32>
    %266 = arith.addf %264, %265 : vector<2x16xf32>
    %267 = vector.extract_strided_slice %250 {offsets = [0, 32], sizes = [2, 16], strides = [1, 1]} : vector<2x64xf32> to vector<2x16xf32>
    %268 = math.tanh %267 : vector<2x16xf32>
    %269 = vector.extract_strided_slice %250 {offsets = [0, 48], sizes = [2, 16], strides = [1, 1]} : vector<2x64xf32> to vector<2x16xf32>
    %cst_86 = arith.constant 5.000000e-01 : f32
    %270 = vector.broadcast %cst_86 : f32 to vector<2x16xf32>
    %271 = arith.mulf %270, %269 : vector<2x16xf32>
    %272 = math.tanh %271 : vector<2x16xf32>
    %cst_87 = arith.constant 5.000000e-01 : f32
    %273 = vector.broadcast %cst_87 : f32 to vector<2x16xf32>
    %274 = arith.mulf %273, %272 : vector<2x16xf32>
    %cst_88 = arith.constant 5.000000e-01 : f32
    %275 = vector.broadcast %cst_88 : f32 to vector<2x16xf32>
    %276 = arith.addf %274, %275 : vector<2x16xf32>
    %277 = arith.mulf %266, %205 : vector<2x16xf32>
    %278 = arith.mulf %258, %268 : vector<2x16xf32>
    %279 = arith.addf %277, %278 : vector<2x16xf32>
    %280 = math.tanh %279 : vector<2x16xf32>
    %281 = arith.mulf %276, %280 : vector<2x16xf32>
    %c3_i32 = arith.constant 3 : i32
    %282 = vector.broadcast %c3_i32 : i32 to vector<2x16xi32>
    %283 = arith.cmpi sgt, %4, %282 : vector<2x16xi32>
    %284 = arith.select %283, %281, %204 : vector<2x16xi1>, vector<2x16xf32>
    %285 = arith.select %283, %279, %205 : vector<2x16xi1>, vector<2x16xf32>
    %c0_89 = arith.constant 0 : index
    %c4 = arith.constant 4 : index
    %c64_90 = arith.constant 64 : index
    %286 = vector.load %arg0[%c0_89, %c4, %c64_90] : memref<2x8x128xf32, #tpu.memory_space<vmem>>, vector<2x1x64xf32>
    %287 = vector.shape_cast %286 : vector<2x1x64xf32> to vector<2x64xf32>
    %288 = arith.truncf %244 : vector<2x16xf32> to vector<2x16xbf16>
    %cst_91 = arith.constant dense<0.000000e+00> : vector<2x64xf32>
    %289 = tpu.matmul %288, %1, %cst_91 {dimension_numbers = #tpu.dot_dimension_numbers<[1], [0], [0], [1], [0, 0, 1, 1], [], []>} : vector<2x16xbf16>, vector<16x64xbf16>, vector<2x64xf32> -> vector<2x64xf32>
    %290 = arith.addf %287, %289 : vector<2x64xf32>
    %291 = vector.extract_strided_slice %290 {offsets = [0, 0], sizes = [2, 16], strides = [1, 1]} : vector<2x64xf32> to vector<2x16xf32>
    %cst_92 = arith.constant 5.000000e-01 : f32
    %292 = vector.broadcast %cst_92 : f32 to vector<2x16xf32>
    %293 = arith.mulf %292, %291 : vector<2x16xf32>
    %294 = math.tanh %293 : vector<2x16xf32>
    %cst_93 = arith.constant 5.000000e-01 : f32
    %295 = vector.broadcast %cst_93 : f32 to vector<2x16xf32>
    %296 = arith.mulf %295, %294 : vector<2x16xf32>
    %cst_94 = arith.constant 5.000000e-01 : f32
    %297 = vector.broadcast %cst_94 : f32 to vector<2x16xf32>
    %298 = arith.addf %296, %297 : vector<2x16xf32>
    %299 = vector.extract_strided_slice %290 {offsets = [0, 16], sizes = [2, 16], strides = [1, 1]} : vector<2x64xf32> to vector<2x16xf32>
    %cst_95 = arith.constant 5.000000e-01 : f32
    %300 = vector.broadcast %cst_95 : f32 to vector<2x16xf32>
    %301 = arith.mulf %300, %299 : vector<2x16xf32>
    %302 = math.tanh %301 : vector<2x16xf32>
    %cst_96 = arith.constant 5.000000e-01 : f32
    %303 = vector.broadcast %cst_96 : f32 to vector<2x16xf32>
    %304 = arith.mulf %303, %302 : vector<2x16xf32>
    %cst_97 = arith.constant 5.000000e-01 : f32
    %305 = vector.broadcast %cst_97 : f32 to vector<2x16xf32>
    %306 = arith.addf %304, %305 : vector<2x16xf32>
    %307 = vector.extract_strided_slice %290 {offsets = [0, 32], sizes = [2, 16], strides = [1, 1]} : vector<2x64xf32> to vector<2x16xf32>
    %308 = math.tanh %307 : vector<2x16xf32>
    %309 = vector.extract_strided_slice %290 {offsets = [0, 48], sizes = [2, 16], strides = [1, 1]} : vector<2x64xf32> to vector<2x16xf32>
    %cst_98 = arith.constant 5.000000e-01 : f32
    %310 = vector.broadcast %cst_98 : f32 to vector<2x16xf32>
    %311 = arith.mulf %310, %309 : vector<2x16xf32>
    %312 = math.tanh %311 : vector<2x16xf32>
    %cst_99 = arith.constant 5.000000e-01 : f32
    %313 = vector.broadcast %cst_99 : f32 to vector<2x16xf32>
    %314 = arith.mulf %313, %312 : vector<2x16xf32>
    %cst_100 = arith.constant 5.000000e-01 : f32
    %315 = vector.broadcast %cst_100 : f32 to vector<2x16xf32>
    %316 = arith.addf %314, %315 : vector<2x16xf32>
    %317 = arith.mulf %306, %245 : vector<2x16xf32>
    %318 = arith.mulf %298, %308 : vector<2x16xf32>
    %319 = arith.addf %317, %318 : vector<2x16xf32>
    %320 = math.tanh %319 : vector<2x16xf32>
    %321 = arith.mulf %316, %320 : vector<2x16xf32>
    %c4_i32 = arith.constant 4 : i32
    %322 = vector.broadcast %c4_i32 : i32 to vector<2x16xi32>
    %323 = arith.cmpi sgt, %4, %322 : vector<2x16xi32>
    %324 = arith.select %323, %321, %244 : vector<2x16xi1>, vector<2x16xf32>
    %325 = arith.select %323, %319, %245 : vector<2x16xi1>, vector<2x16xf32>
    %c0_101 = arith.constant 0 : index
    %c4_102 = arith.constant 4 : index
    %c0_103 = arith.constant 0 : index
    %326 = vector.load %arg0[%c0_101, %c4_102, %c0_103] : memref<2x8x128xf32, #tpu.memory_space<vmem>>, vector<2x1x64xf32>
    %327 = vector.shape_cast %326 : vector<2x1x64xf32> to vector<2x64xf32>
    %328 = arith.truncf %284 : vector<2x16xf32> to vector<2x16xbf16>
    %cst_104 = arith.constant dense<0.000000e+00> : vector<2x64xf32>
    %329 = tpu.matmul %328, %0, %cst_104 {dimension_numbers = #tpu.dot_dimension_numbers<[1], [0], [0], [1], [0, 0, 1, 1], [], []>} : vector<2x16xbf16>, vector<16x64xbf16>, vector<2x64xf32> -> vector<2x64xf32>
    %330 = arith.addf %327, %329 : vector<2x64xf32>
    %331 = vector.extract_strided_slice %330 {offsets = [0, 0], sizes = [2, 16], strides = [1, 1]} : vector<2x64xf32> to vector<2x16xf32>
    %cst_105 = arith.constant 5.000000e-01 : f32
    %332 = vector.broadcast %cst_105 : f32 to vector<2x16xf32>
    %333 = arith.mulf %332, %331 : vector<2x16xf32>
    %334 = math.tanh %333 : vector<2x16xf32>
    %cst_106 = arith.constant 5.000000e-01 : f32
    %335 = vector.broadcast %cst_106 : f32 to vector<2x16xf32>
    %336 = arith.mulf %335, %334 : vector<2x16xf32>
    %cst_107 = arith.constant 5.000000e-01 : f32
    %337 = vector.broadcast %cst_107 : f32 to vector<2x16xf32>
    %338 = arith.addf %336, %337 : vector<2x16xf32>
    %339 = vector.extract_strided_slice %330 {offsets = [0, 16], sizes = [2, 16], strides = [1, 1]} : vector<2x64xf32> to vector<2x16xf32>
    %cst_108 = arith.constant 5.000000e-01 : f32
    %340 = vector.broadcast %cst_108 : f32 to vector<2x16xf32>
    %341 = arith.mulf %340, %339 : vector<2x16xf32>
    %342 = math.tanh %341 : vector<2x16xf32>
    %cst_109 = arith.constant 5.000000e-01 : f32
    %343 = vector.broadcast %cst_109 : f32 to vector<2x16xf32>
    %344 = arith.mulf %343, %342 : vector<2x16xf32>
    %cst_110 = arith.constant 5.000000e-01 : f32
    %345 = vector.broadcast %cst_110 : f32 to vector<2x16xf32>
    %346 = arith.addf %344, %345 : vector<2x16xf32>
    %347 = vector.extract_strided_slice %330 {offsets = [0, 32], sizes = [2, 16], strides = [1, 1]} : vector<2x64xf32> to vector<2x16xf32>
    %348 = math.tanh %347 : vector<2x16xf32>
    %349 = vector.extract_strided_slice %330 {offsets = [0, 48], sizes = [2, 16], strides = [1, 1]} : vector<2x64xf32> to vector<2x16xf32>
    %cst_111 = arith.constant 5.000000e-01 : f32
    %350 = vector.broadcast %cst_111 : f32 to vector<2x16xf32>
    %351 = arith.mulf %350, %349 : vector<2x16xf32>
    %352 = math.tanh %351 : vector<2x16xf32>
    %cst_112 = arith.constant 5.000000e-01 : f32
    %353 = vector.broadcast %cst_112 : f32 to vector<2x16xf32>
    %354 = arith.mulf %353, %352 : vector<2x16xf32>
    %cst_113 = arith.constant 5.000000e-01 : f32
    %355 = vector.broadcast %cst_113 : f32 to vector<2x16xf32>
    %356 = arith.addf %354, %355 : vector<2x16xf32>
    %357 = arith.mulf %346, %285 : vector<2x16xf32>
    %358 = arith.mulf %338, %348 : vector<2x16xf32>
    %359 = arith.addf %357, %358 : vector<2x16xf32>
    %360 = math.tanh %359 : vector<2x16xf32>
    %361 = arith.mulf %356, %360 : vector<2x16xf32>
    %c4_i32_114 = arith.constant 4 : i32
    %362 = vector.broadcast %c4_i32_114 : i32 to vector<2x16xi32>
    %363 = arith.cmpi sgt, %4, %362 : vector<2x16xi32>
    %364 = arith.select %363, %361, %284 : vector<2x16xi1>, vector<2x16xf32>
    %365 = arith.select %363, %359, %285 : vector<2x16xi1>, vector<2x16xf32>
    %c0_115 = arith.constant 0 : index
    %c3_116 = arith.constant 3 : index
    %c64_117 = arith.constant 64 : index
    %366 = vector.load %arg0[%c0_115, %c3_116, %c64_117] : memref<2x8x128xf32, #tpu.memory_space<vmem>>, vector<2x1x64xf32>
    %367 = vector.shape_cast %366 : vector<2x1x64xf32> to vector<2x64xf32>
    %368 = arith.truncf %324 : vector<2x16xf32> to vector<2x16xbf16>
    %cst_118 = arith.constant dense<0.000000e+00> : vector<2x64xf32>
    %369 = tpu.matmul %368, %1, %cst_118 {dimension_numbers = #tpu.dot_dimension_numbers<[1], [0], [0], [1], [0, 0, 1, 1], [], []>} : vector<2x16xbf16>, vector<16x64xbf16>, vector<2x64xf32> -> vector<2x64xf32>
    %370 = arith.addf %367, %369 : vector<2x64xf32>
    %371 = vector.extract_strided_slice %370 {offsets = [0, 0], sizes = [2, 16], strides = [1, 1]} : vector<2x64xf32> to vector<2x16xf32>
    %cst_119 = arith.constant 5.000000e-01 : f32
    %372 = vector.broadcast %cst_119 : f32 to vector<2x16xf32>
    %373 = arith.mulf %372, %371 : vector<2x16xf32>
    %374 = math.tanh %373 : vector<2x16xf32>
    %cst_120 = arith.constant 5.000000e-01 : f32
    %375 = vector.broadcast %cst_120 : f32 to vector<2x16xf32>
    %376 = arith.mulf %375, %374 : vector<2x16xf32>
    %cst_121 = arith.constant 5.000000e-01 : f32
    %377 = vector.broadcast %cst_121 : f32 to vector<2x16xf32>
    %378 = arith.addf %376, %377 : vector<2x16xf32>
    %379 = vector.extract_strided_slice %370 {offsets = [0, 16], sizes = [2, 16], strides = [1, 1]} : vector<2x64xf32> to vector<2x16xf32>
    %cst_122 = arith.constant 5.000000e-01 : f32
    %380 = vector.broadcast %cst_122 : f32 to vector<2x16xf32>
    %381 = arith.mulf %380, %379 : vector<2x16xf32>
    %382 = math.tanh %381 : vector<2x16xf32>
    %cst_123 = arith.constant 5.000000e-01 : f32
    %383 = vector.broadcast %cst_123 : f32 to vector<2x16xf32>
    %384 = arith.mulf %383, %382 : vector<2x16xf32>
    %cst_124 = arith.constant 5.000000e-01 : f32
    %385 = vector.broadcast %cst_124 : f32 to vector<2x16xf32>
    %386 = arith.addf %384, %385 : vector<2x16xf32>
    %387 = vector.extract_strided_slice %370 {offsets = [0, 32], sizes = [2, 16], strides = [1, 1]} : vector<2x64xf32> to vector<2x16xf32>
    %388 = math.tanh %387 : vector<2x16xf32>
    %389 = vector.extract_strided_slice %370 {offsets = [0, 48], sizes = [2, 16], strides = [1, 1]} : vector<2x64xf32> to vector<2x16xf32>
    %cst_125 = arith.constant 5.000000e-01 : f32
    %390 = vector.broadcast %cst_125 : f32 to vector<2x16xf32>
    %391 = arith.mulf %390, %389 : vector<2x16xf32>
    %392 = math.tanh %391 : vector<2x16xf32>
    %cst_126 = arith.constant 5.000000e-01 : f32
    %393 = vector.broadcast %cst_126 : f32 to vector<2x16xf32>
    %394 = arith.mulf %393, %392 : vector<2x16xf32>
    %cst_127 = arith.constant 5.000000e-01 : f32
    %395 = vector.broadcast %cst_127 : f32 to vector<2x16xf32>
    %396 = arith.addf %394, %395 : vector<2x16xf32>
    %397 = arith.mulf %386, %325 : vector<2x16xf32>
    %398 = arith.mulf %378, %388 : vector<2x16xf32>
    %399 = arith.addf %397, %398 : vector<2x16xf32>
    %400 = math.tanh %399 : vector<2x16xf32>
    %401 = arith.mulf %396, %400 : vector<2x16xf32>
    %c3_i32_128 = arith.constant 3 : i32
    %402 = vector.broadcast %c3_i32_128 : i32 to vector<2x16xi32>
    %403 = arith.cmpi sgt, %4, %402 : vector<2x16xi32>
    %404 = arith.select %403, %401, %324 : vector<2x16xi1>, vector<2x16xf32>
    %405 = arith.select %403, %399, %325 : vector<2x16xi1>, vector<2x16xf32>
    %c0_129 = arith.constant 0 : index
    %c5_130 = arith.constant 5 : index
    %c0_131 = arith.constant 0 : index
    %406 = vector.load %arg0[%c0_129, %c5_130, %c0_131] : memref<2x8x128xf32, #tpu.memory_space<vmem>>, vector<2x1x64xf32>
    %407 = vector.shape_cast %406 : vector<2x1x64xf32> to vector<2x64xf32>
    %408 = arith.truncf %364 : vector<2x16xf32> to vector<2x16xbf16>
    %cst_132 = arith.constant dense<0.000000e+00> : vector<2x64xf32>
    %409 = tpu.matmul %408, %0, %cst_132 {dimension_numbers = #tpu.dot_dimension_numbers<[1], [0], [0], [1], [0, 0, 1, 1], [], []>} : vector<2x16xbf16>, vector<16x64xbf16>, vector<2x64xf32> -> vector<2x64xf32>
    %410 = arith.addf %407, %409 : vector<2x64xf32>
    %411 = vector.extract_strided_slice %410 {offsets = [0, 0], sizes = [2, 16], strides = [1, 1]} : vector<2x64xf32> to vector<2x16xf32>
    %cst_133 = arith.constant 5.000000e-01 : f32
    %412 = vector.broadcast %cst_133 : f32 to vector<2x16xf32>
    %413 = arith.mulf %412, %411 : vector<2x16xf32>
    %414 = math.tanh %413 : vector<2x16xf32>
    %cst_134 = arith.constant 5.000000e-01 : f32
    %415 = vector.broadcast %cst_134 : f32 to vector<2x16xf32>
    %416 = arith.mulf %415, %414 : vector<2x16xf32>
    %cst_135 = arith.constant 5.000000e-01 : f32
    %417 = vector.broadcast %cst_135 : f32 to vector<2x16xf32>
    %418 = arith.addf %416, %417 : vector<2x16xf32>
    %419 = vector.extract_strided_slice %410 {offsets = [0, 16], sizes = [2, 16], strides = [1, 1]} : vector<2x64xf32> to vector<2x16xf32>
    %cst_136 = arith.constant 5.000000e-01 : f32
    %420 = vector.broadcast %cst_136 : f32 to vector<2x16xf32>
    %421 = arith.mulf %420, %419 : vector<2x16xf32>
    %422 = math.tanh %421 : vector<2x16xf32>
    %cst_137 = arith.constant 5.000000e-01 : f32
    %423 = vector.broadcast %cst_137 : f32 to vector<2x16xf32>
    %424 = arith.mulf %423, %422 : vector<2x16xf32>
    %cst_138 = arith.constant 5.000000e-01 : f32
    %425 = vector.broadcast %cst_138 : f32 to vector<2x16xf32>
    %426 = arith.addf %424, %425 : vector<2x16xf32>
    %427 = vector.extract_strided_slice %410 {offsets = [0, 32], sizes = [2, 16], strides = [1, 1]} : vector<2x64xf32> to vector<2x16xf32>
    %428 = math.tanh %427 : vector<2x16xf32>
    %429 = vector.extract_strided_slice %410 {offsets = [0, 48], sizes = [2, 16], strides = [1, 1]} : vector<2x64xf32> to vector<2x16xf32>
    %cst_139 = arith.constant 5.000000e-01 : f32
    %430 = vector.broadcast %cst_139 : f32 to vector<2x16xf32>
    %431 = arith.mulf %430, %429 : vector<2x16xf32>
    %432 = math.tanh %431 : vector<2x16xf32>
    %cst_140 = arith.constant 5.000000e-01 : f32
    %433 = vector.broadcast %cst_140 : f32 to vector<2x16xf32>
    %434 = arith.mulf %433, %432 : vector<2x16xf32>
    %cst_141 = arith.constant 5.000000e-01 : f32
    %435 = vector.broadcast %cst_141 : f32 to vector<2x16xf32>
    %436 = arith.addf %434, %435 : vector<2x16xf32>
    %437 = arith.mulf %426, %365 : vector<2x16xf32>
    %438 = arith.mulf %418, %428 : vector<2x16xf32>
    %439 = arith.addf %437, %438 : vector<2x16xf32>
    %440 = math.tanh %439 : vector<2x16xf32>
    %441 = arith.mulf %436, %440 : vector<2x16xf32>
    %c5_i32_142 = arith.constant 5 : i32
    %442 = vector.broadcast %c5_i32_142 : i32 to vector<2x16xi32>
    %443 = arith.cmpi sgt, %4, %442 : vector<2x16xi32>
    %444 = arith.select %443, %441, %364 : vector<2x16xi1>, vector<2x16xf32>
    %445 = arith.select %443, %439, %365 : vector<2x16xi1>, vector<2x16xf32>
    %c0_143 = arith.constant 0 : index
    %c2_144 = arith.constant 2 : index
    %c64_145 = arith.constant 64 : index
    %446 = vector.load %arg0[%c0_143, %c2_144, %c64_145] : memref<2x8x128xf32, #tpu.memory_space<vmem>>, vector<2x1x64xf32>
    %447 = vector.shape_cast %446 : vector<2x1x64xf32> to vector<2x64xf32>
    %448 = arith.truncf %404 : vector<2x16xf32> to vector<2x16xbf16>
    %cst_146 = arith.constant dense<0.000000e+00> : vector<2x64xf32>
    %449 = tpu.matmul %448, %1, %cst_146 {dimension_numbers = #tpu.dot_dimension_numbers<[1], [0], [0], [1], [0, 0, 1, 1], [], []>} : vector<2x16xbf16>, vector<16x64xbf16>, vector<2x64xf32> -> vector<2x64xf32>
    %450 = arith.addf %447, %449 : vector<2x64xf32>
    %451 = vector.extract_strided_slice %450 {offsets = [0, 0], sizes = [2, 16], strides = [1, 1]} : vector<2x64xf32> to vector<2x16xf32>
    %cst_147 = arith.constant 5.000000e-01 : f32
    %452 = vector.broadcast %cst_147 : f32 to vector<2x16xf32>
    %453 = arith.mulf %452, %451 : vector<2x16xf32>
    %454 = math.tanh %453 : vector<2x16xf32>
    %cst_148 = arith.constant 5.000000e-01 : f32
    %455 = vector.broadcast %cst_148 : f32 to vector<2x16xf32>
    %456 = arith.mulf %455, %454 : vector<2x16xf32>
    %cst_149 = arith.constant 5.000000e-01 : f32
    %457 = vector.broadcast %cst_149 : f32 to vector<2x16xf32>
    %458 = arith.addf %456, %457 : vector<2x16xf32>
    %459 = vector.extract_strided_slice %450 {offsets = [0, 16], sizes = [2, 16], strides = [1, 1]} : vector<2x64xf32> to vector<2x16xf32>
    %cst_150 = arith.constant 5.000000e-01 : f32
    %460 = vector.broadcast %cst_150 : f32 to vector<2x16xf32>
    %461 = arith.mulf %460, %459 : vector<2x16xf32>
    %462 = math.tanh %461 : vector<2x16xf32>
    %cst_151 = arith.constant 5.000000e-01 : f32
    %463 = vector.broadcast %cst_151 : f32 to vector<2x16xf32>
    %464 = arith.mulf %463, %462 : vector<2x16xf32>
    %cst_152 = arith.constant 5.000000e-01 : f32
    %465 = vector.broadcast %cst_152 : f32 to vector<2x16xf32>
    %466 = arith.addf %464, %465 : vector<2x16xf32>
    %467 = vector.extract_strided_slice %450 {offsets = [0, 32], sizes = [2, 16], strides = [1, 1]} : vector<2x64xf32> to vector<2x16xf32>
    %468 = math.tanh %467 : vector<2x16xf32>
    %469 = vector.extract_strided_slice %450 {offsets = [0, 48], sizes = [2, 16], strides = [1, 1]} : vector<2x64xf32> to vector<2x16xf32>
    %cst_153 = arith.constant 5.000000e-01 : f32
    %470 = vector.broadcast %cst_153 : f32 to vector<2x16xf32>
    %471 = arith.mulf %470, %469 : vector<2x16xf32>
    %472 = math.tanh %471 : vector<2x16xf32>
    %cst_154 = arith.constant 5.000000e-01 : f32
    %473 = vector.broadcast %cst_154 : f32 to vector<2x16xf32>
    %474 = arith.mulf %473, %472 : vector<2x16xf32>
    %cst_155 = arith.constant 5.000000e-01 : f32
    %475 = vector.broadcast %cst_155 : f32 to vector<2x16xf32>
    %476 = arith.addf %474, %475 : vector<2x16xf32>
    %477 = arith.mulf %466, %405 : vector<2x16xf32>
    %478 = arith.mulf %458, %468 : vector<2x16xf32>
    %479 = arith.addf %477, %478 : vector<2x16xf32>
    %480 = math.tanh %479 : vector<2x16xf32>
    %481 = arith.mulf %476, %480 : vector<2x16xf32>
    %c2_i32_156 = arith.constant 2 : i32
    %482 = vector.broadcast %c2_i32_156 : i32 to vector<2x16xi32>
    %483 = arith.cmpi sgt, %4, %482 : vector<2x16xi32>
    %484 = arith.select %483, %481, %404 : vector<2x16xi1>, vector<2x16xf32>
    %485 = arith.select %483, %479, %405 : vector<2x16xi1>, vector<2x16xf32>
    %c0_157 = arith.constant 0 : index
    %c6_158 = arith.constant 6 : index
    %c0_159 = arith.constant 0 : index
    %486 = vector.load %arg0[%c0_157, %c6_158, %c0_159] : memref<2x8x128xf32, #tpu.memory_space<vmem>>, vector<2x1x64xf32>
    %487 = vector.shape_cast %486 : vector<2x1x64xf32> to vector<2x64xf32>
    %488 = arith.truncf %444 : vector<2x16xf32> to vector<2x16xbf16>
    %cst_160 = arith.constant dense<0.000000e+00> : vector<2x64xf32>
    %489 = tpu.matmul %488, %0, %cst_160 {dimension_numbers = #tpu.dot_dimension_numbers<[1], [0], [0], [1], [0, 0, 1, 1], [], []>} : vector<2x16xbf16>, vector<16x64xbf16>, vector<2x64xf32> -> vector<2x64xf32>
    %490 = arith.addf %487, %489 : vector<2x64xf32>
    %491 = vector.extract_strided_slice %490 {offsets = [0, 0], sizes = [2, 16], strides = [1, 1]} : vector<2x64xf32> to vector<2x16xf32>
    %cst_161 = arith.constant 5.000000e-01 : f32
    %492 = vector.broadcast %cst_161 : f32 to vector<2x16xf32>
    %493 = arith.mulf %492, %491 : vector<2x16xf32>
    %494 = math.tanh %493 : vector<2x16xf32>
    %cst_162 = arith.constant 5.000000e-01 : f32
    %495 = vector.broadcast %cst_162 : f32 to vector<2x16xf32>
    %496 = arith.mulf %495, %494 : vector<2x16xf32>
    %cst_163 = arith.constant 5.000000e-01 : f32
    %497 = vector.broadcast %cst_163 : f32 to vector<2x16xf32>
    %498 = arith.addf %496, %497 : vector<2x16xf32>
    %499 = vector.extract_strided_slice %490 {offsets = [0, 16], sizes = [2, 16], strides = [1, 1]} : vector<2x64xf32> to vector<2x16xf32>
    %cst_164 = arith.constant 5.000000e-01 : f32
    %500 = vector.broadcast %cst_164 : f32 to vector<2x16xf32>
    %501 = arith.mulf %500, %499 : vector<2x16xf32>
    %502 = math.tanh %501 : vector<2x16xf32>
    %cst_165 = arith.constant 5.000000e-01 : f32
    %503 = vector.broadcast %cst_165 : f32 to vector<2x16xf32>
    %504 = arith.mulf %503, %502 : vector<2x16xf32>
    %cst_166 = arith.constant 5.000000e-01 : f32
    %505 = vector.broadcast %cst_166 : f32 to vector<2x16xf32>
    %506 = arith.addf %504, %505 : vector<2x16xf32>
    %507 = vector.extract_strided_slice %490 {offsets = [0, 32], sizes = [2, 16], strides = [1, 1]} : vector<2x64xf32> to vector<2x16xf32>
    %508 = math.tanh %507 : vector<2x16xf32>
    %509 = vector.extract_strided_slice %490 {offsets = [0, 48], sizes = [2, 16], strides = [1, 1]} : vector<2x64xf32> to vector<2x16xf32>
    %cst_167 = arith.constant 5.000000e-01 : f32
    %510 = vector.broadcast %cst_167 : f32 to vector<2x16xf32>
    %511 = arith.mulf %510, %509 : vector<2x16xf32>
    %512 = math.tanh %511 : vector<2x16xf32>
    %cst_168 = arith.constant 5.000000e-01 : f32
    %513 = vector.broadcast %cst_168 : f32 to vector<2x16xf32>
    %514 = arith.mulf %513, %512 : vector<2x16xf32>
    %cst_169 = arith.constant 5.000000e-01 : f32
    %515 = vector.broadcast %cst_169 : f32 to vector<2x16xf32>
    %516 = arith.addf %514, %515 : vector<2x16xf32>
    %517 = arith.mulf %506, %445 : vector<2x16xf32>
    %518 = arith.mulf %498, %508 : vector<2x16xf32>
    %519 = arith.addf %517, %518 : vector<2x16xf32>
    %520 = math.tanh %519 : vector<2x16xf32>
    %521 = arith.mulf %516, %520 : vector<2x16xf32>
    %c6_i32_170 = arith.constant 6 : i32
    %522 = vector.broadcast %c6_i32_170 : i32 to vector<2x16xi32>
    %523 = arith.cmpi sgt, %4, %522 : vector<2x16xi32>
    %524 = arith.select %523, %521, %444 : vector<2x16xi1>, vector<2x16xf32>
    %525 = arith.select %523, %519, %445 : vector<2x16xi1>, vector<2x16xf32>
    %c0_171 = arith.constant 0 : index
    %c1_172 = arith.constant 1 : index
    %c64_173 = arith.constant 64 : index
    %526 = vector.load %arg0[%c0_171, %c1_172, %c64_173] : memref<2x8x128xf32, #tpu.memory_space<vmem>>, vector<2x1x64xf32>
    %527 = vector.shape_cast %526 : vector<2x1x64xf32> to vector<2x64xf32>
    %528 = arith.truncf %484 : vector<2x16xf32> to vector<2x16xbf16>
    %cst_174 = arith.constant dense<0.000000e+00> : vector<2x64xf32>
    %529 = tpu.matmul %528, %1, %cst_174 {dimension_numbers = #tpu.dot_dimension_numbers<[1], [0], [0], [1], [0, 0, 1, 1], [], []>} : vector<2x16xbf16>, vector<16x64xbf16>, vector<2x64xf32> -> vector<2x64xf32>
    %530 = arith.addf %527, %529 : vector<2x64xf32>
    %531 = vector.extract_strided_slice %530 {offsets = [0, 0], sizes = [2, 16], strides = [1, 1]} : vector<2x64xf32> to vector<2x16xf32>
    %cst_175 = arith.constant 5.000000e-01 : f32
    %532 = vector.broadcast %cst_175 : f32 to vector<2x16xf32>
    %533 = arith.mulf %532, %531 : vector<2x16xf32>
    %534 = math.tanh %533 : vector<2x16xf32>
    %cst_176 = arith.constant 5.000000e-01 : f32
    %535 = vector.broadcast %cst_176 : f32 to vector<2x16xf32>
    %536 = arith.mulf %535, %534 : vector<2x16xf32>
    %cst_177 = arith.constant 5.000000e-01 : f32
    %537 = vector.broadcast %cst_177 : f32 to vector<2x16xf32>
    %538 = arith.addf %536, %537 : vector<2x16xf32>
    %539 = vector.extract_strided_slice %530 {offsets = [0, 16], sizes = [2, 16], strides = [1, 1]} : vector<2x64xf32> to vector<2x16xf32>
    %cst_178 = arith.constant 5.000000e-01 : f32
    %540 = vector.broadcast %cst_178 : f32 to vector<2x16xf32>
    %541 = arith.mulf %540, %539 : vector<2x16xf32>
    %542 = math.tanh %541 : vector<2x16xf32>
    %cst_179 = arith.constant 5.000000e-01 : f32
    %543 = vector.broadcast %cst_179 : f32 to vector<2x16xf32>
    %544 = arith.mulf %543, %542 : vector<2x16xf32>
    %cst_180 = arith.constant 5.000000e-01 : f32
    %545 = vector.broadcast %cst_180 : f32 to vector<2x16xf32>
    %546 = arith.addf %544, %545 : vector<2x16xf32>
    %547 = vector.extract_strided_slice %530 {offsets = [0, 32], sizes = [2, 16], strides = [1, 1]} : vector<2x64xf32> to vector<2x16xf32>
    %548 = math.tanh %547 : vector<2x16xf32>
    %549 = vector.extract_strided_slice %530 {offsets = [0, 48], sizes = [2, 16], strides = [1, 1]} : vector<2x64xf32> to vector<2x16xf32>
    %cst_181 = arith.constant 5.000000e-01 : f32
    %550 = vector.broadcast %cst_181 : f32 to vector<2x16xf32>
    %551 = arith.mulf %550, %549 : vector<2x16xf32>
    %552 = math.tanh %551 : vector<2x16xf32>
    %cst_182 = arith.constant 5.000000e-01 : f32
    %553 = vector.broadcast %cst_182 : f32 to vector<2x16xf32>
    %554 = arith.mulf %553, %552 : vector<2x16xf32>
    %cst_183 = arith.constant 5.000000e-01 : f32
    %555 = vector.broadcast %cst_183 : f32 to vector<2x16xf32>
    %556 = arith.addf %554, %555 : vector<2x16xf32>
    %557 = arith.mulf %546, %485 : vector<2x16xf32>
    %558 = arith.mulf %538, %548 : vector<2x16xf32>
    %559 = arith.addf %557, %558 : vector<2x16xf32>
    %560 = math.tanh %559 : vector<2x16xf32>
    %561 = arith.mulf %556, %560 : vector<2x16xf32>
    %c1_i32_184 = arith.constant 1 : i32
    %562 = vector.broadcast %c1_i32_184 : i32 to vector<2x16xi32>
    %563 = arith.cmpi sgt, %4, %562 : vector<2x16xi32>
    %564 = arith.select %563, %561, %484 : vector<2x16xi1>, vector<2x16xf32>
    %565 = arith.select %563, %559, %485 : vector<2x16xi1>, vector<2x16xf32>
    %c0_185 = arith.constant 0 : index
    %c7_186 = arith.constant 7 : index
    %c0_187 = arith.constant 0 : index
    %566 = vector.load %arg0[%c0_185, %c7_186, %c0_187] : memref<2x8x128xf32, #tpu.memory_space<vmem>>, vector<2x1x64xf32>
    %567 = vector.shape_cast %566 : vector<2x1x64xf32> to vector<2x64xf32>
    %568 = arith.truncf %524 : vector<2x16xf32> to vector<2x16xbf16>
    %cst_188 = arith.constant dense<0.000000e+00> : vector<2x64xf32>
    %569 = tpu.matmul %568, %0, %cst_188 {dimension_numbers = #tpu.dot_dimension_numbers<[1], [0], [0], [1], [0, 0, 1, 1], [], []>} : vector<2x16xbf16>, vector<16x64xbf16>, vector<2x64xf32> -> vector<2x64xf32>
    %570 = arith.addf %567, %569 : vector<2x64xf32>
    %571 = vector.extract_strided_slice %570 {offsets = [0, 0], sizes = [2, 16], strides = [1, 1]} : vector<2x64xf32> to vector<2x16xf32>
    %cst_189 = arith.constant 5.000000e-01 : f32
    %572 = vector.broadcast %cst_189 : f32 to vector<2x16xf32>
    %573 = arith.mulf %572, %571 : vector<2x16xf32>
    %574 = math.tanh %573 : vector<2x16xf32>
    %cst_190 = arith.constant 5.000000e-01 : f32
    %575 = vector.broadcast %cst_190 : f32 to vector<2x16xf32>
    %576 = arith.mulf %575, %574 : vector<2x16xf32>
    %cst_191 = arith.constant 5.000000e-01 : f32
    %577 = vector.broadcast %cst_191 : f32 to vector<2x16xf32>
    %578 = arith.addf %576, %577 : vector<2x16xf32>
    %579 = vector.extract_strided_slice %570 {offsets = [0, 16], sizes = [2, 16], strides = [1, 1]} : vector<2x64xf32> to vector<2x16xf32>
    %cst_192 = arith.constant 5.000000e-01 : f32
    %580 = vector.broadcast %cst_192 : f32 to vector<2x16xf32>
    %581 = arith.mulf %580, %579 : vector<2x16xf32>
    %582 = math.tanh %581 : vector<2x16xf32>
    %cst_193 = arith.constant 5.000000e-01 : f32
    %583 = vector.broadcast %cst_193 : f32 to vector<2x16xf32>
    %584 = arith.mulf %583, %582 : vector<2x16xf32>
    %cst_194 = arith.constant 5.000000e-01 : f32
    %585 = vector.broadcast %cst_194 : f32 to vector<2x16xf32>
    %586 = arith.addf %584, %585 : vector<2x16xf32>
    %587 = vector.extract_strided_slice %570 {offsets = [0, 32], sizes = [2, 16], strides = [1, 1]} : vector<2x64xf32> to vector<2x16xf32>
    %588 = math.tanh %587 : vector<2x16xf32>
    %589 = vector.extract_strided_slice %570 {offsets = [0, 48], sizes = [2, 16], strides = [1, 1]} : vector<2x64xf32> to vector<2x16xf32>
    %cst_195 = arith.constant 5.000000e-01 : f32
    %590 = vector.broadcast %cst_195 : f32 to vector<2x16xf32>
    %591 = arith.mulf %590, %589 : vector<2x16xf32>
    %592 = math.tanh %591 : vector<2x16xf32>
    %cst_196 = arith.constant 5.000000e-01 : f32
    %593 = vector.broadcast %cst_196 : f32 to vector<2x16xf32>
    %594 = arith.mulf %593, %592 : vector<2x16xf32>
    %cst_197 = arith.constant 5.000000e-01 : f32
    %595 = vector.broadcast %cst_197 : f32 to vector<2x16xf32>
    %596 = arith.addf %594, %595 : vector<2x16xf32>
    %597 = arith.mulf %586, %525 : vector<2x16xf32>
    %598 = arith.mulf %578, %588 : vector<2x16xf32>
    %599 = arith.addf %597, %598 : vector<2x16xf32>
    %600 = math.tanh %599 : vector<2x16xf32>
    %601 = arith.mulf %596, %600 : vector<2x16xf32>
    %c7_i32_198 = arith.constant 7 : i32
    %602 = vector.broadcast %c7_i32_198 : i32 to vector<2x16xi32>
    %603 = arith.cmpi sgt, %4, %602 : vector<2x16xi32>
    %604 = arith.select %603, %601, %524 : vector<2x16xi1>, vector<2x16xf32>
    %605 = arith.select %603, %599, %525 : vector<2x16xi1>, vector<2x16xf32>
    %c0_199 = arith.constant 0 : index
    %c0_200 = arith.constant 0 : index
    %c64_201 = arith.constant 64 : index
    %606 = vector.load %arg0[%c0_199, %c0_200, %c64_201] : memref<2x8x128xf32, #tpu.memory_space<vmem>>, vector<2x1x64xf32>
    %607 = vector.shape_cast %606 : vector<2x1x64xf32> to vector<2x64xf32>
    %608 = arith.truncf %564 : vector<2x16xf32> to vector<2x16xbf16>
    %cst_202 = arith.constant dense<0.000000e+00> : vector<2x64xf32>
    %609 = tpu.matmul %608, %1, %cst_202 {dimension_numbers = #tpu.dot_dimension_numbers<[1], [0], [0], [1], [0, 0, 1, 1], [], []>} : vector<2x16xbf16>, vector<16x64xbf16>, vector<2x64xf32> -> vector<2x64xf32>
    %610 = arith.addf %607, %609 : vector<2x64xf32>
    %611 = vector.extract_strided_slice %610 {offsets = [0, 0], sizes = [2, 16], strides = [1, 1]} : vector<2x64xf32> to vector<2x16xf32>
    %cst_203 = arith.constant 5.000000e-01 : f32
    %612 = vector.broadcast %cst_203 : f32 to vector<2x16xf32>
    %613 = arith.mulf %612, %611 : vector<2x16xf32>
    %614 = math.tanh %613 : vector<2x16xf32>
    %cst_204 = arith.constant 5.000000e-01 : f32
    %615 = vector.broadcast %cst_204 : f32 to vector<2x16xf32>
    %616 = arith.mulf %615, %614 : vector<2x16xf32>
    %cst_205 = arith.constant 5.000000e-01 : f32
    %617 = vector.broadcast %cst_205 : f32 to vector<2x16xf32>
    %618 = arith.addf %616, %617 : vector<2x16xf32>
    %619 = vector.extract_strided_slice %610 {offsets = [0, 16], sizes = [2, 16], strides = [1, 1]} : vector<2x64xf32> to vector<2x16xf32>
    %cst_206 = arith.constant 5.000000e-01 : f32
    %620 = vector.broadcast %cst_206 : f32 to vector<2x16xf32>
    %621 = arith.mulf %620, %619 : vector<2x16xf32>
    %622 = math.tanh %621 : vector<2x16xf32>
    %cst_207 = arith.constant 5.000000e-01 : f32
    %623 = vector.broadcast %cst_207 : f32 to vector<2x16xf32>
    %624 = arith.mulf %623, %622 : vector<2x16xf32>
    %cst_208 = arith.constant 5.000000e-01 : f32
    %625 = vector.broadcast %cst_208 : f32 to vector<2x16xf32>
    %626 = arith.addf %624, %625 : vector<2x16xf32>
    %627 = vector.extract_strided_slice %610 {offsets = [0, 32], sizes = [2, 16], strides = [1, 1]} : vector<2x64xf32> to vector<2x16xf32>
    %628 = math.tanh %627 : vector<2x16xf32>
    %629 = vector.extract_strided_slice %610 {offsets = [0, 48], sizes = [2, 16], strides = [1, 1]} : vector<2x64xf32> to vector<2x16xf32>
    %cst_209 = arith.constant 5.000000e-01 : f32
    %630 = vector.broadcast %cst_209 : f32 to vector<2x16xf32>
    %631 = arith.mulf %630, %629 : vector<2x16xf32>
    %632 = math.tanh %631 : vector<2x16xf32>
    %cst_210 = arith.constant 5.000000e-01 : f32
    %633 = vector.broadcast %cst_210 : f32 to vector<2x16xf32>
    %634 = arith.mulf %633, %632 : vector<2x16xf32>
    %cst_211 = arith.constant 5.000000e-01 : f32
    %635 = vector.broadcast %cst_211 : f32 to vector<2x16xf32>
    %636 = arith.addf %634, %635 : vector<2x16xf32>
    %637 = arith.mulf %626, %565 : vector<2x16xf32>
    %638 = arith.mulf %618, %628 : vector<2x16xf32>
    %639 = arith.addf %637, %638 : vector<2x16xf32>
    %640 = math.tanh %639 : vector<2x16xf32>
    %641 = arith.mulf %636, %640 : vector<2x16xf32>
    %c0_i32_212 = arith.constant 0 : i32
    %642 = vector.broadcast %c0_i32_212 : i32 to vector<2x16xi32>
    %643 = arith.cmpi sgt, %4, %642 : vector<2x16xi32>
    %644 = arith.select %643, %641, %564 : vector<2x16xi1>, vector<2x16xf32>
    %645 = arith.select %643, %639, %565 : vector<2x16xi1>, vector<2x16xf32>
    %646 = tpu.concatenate %604, %644 in 1 : vector<2x16xf32>, vector<2x16xf32> -> vector<2x32xf32>
    %c0_213 = arith.constant 0 : index
    %c0_214 = arith.constant 0 : index
    %647 = vector.load %arg4[%c0_213, %c0_214] : memref<2x32xf32, #tpu.memory_space<vmem>>, vector<2x32xf32>
    tpu.vector_store %arg4[%c0_213, %c0_214], %646 {strides = array<i32>} : memref<2x32xf32, #tpu.memory_space<vmem>>, vector<2x32xf32>,
    %648 = tpu.concatenate %605, %645 in 1 : vector<2x16xf32>, vector<2x16xf32> -> vector<2x32xf32>
    %c0_215 = arith.constant 0 : index
    %c0_216 = arith.constant 0 : index
    %649 = vector.load %arg5[%c0_215, %c0_216] : memref<2x32xf32, #tpu.memory_space<vmem>>, vector<2x32xf32>
    tpu.vector_store %arg5[%c0_215, %c0_216], %648 {strides = array<i32>} : memref<2x32xf32, #tpu.memory_space<vmem>>, vector<2x32xf32>,
    return
  }
}

module attributes {stable_mosaic.version = 11 : i64} {
  func.func @_linear_wt_kernel(%arg0: i32, %arg1: i32, %arg2: memref<14x32xbf16, #tpu.memory_space<vmem>>, %arg3: memref<128x32xbf16, #tpu.memory_space<vmem>>, %arg4: memref<1x128xf32, #tpu.memory_space<vmem>>, %arg5: memref<14x128xf32, #tpu.memory_space<vmem>>) attributes {dimension_semantics = [#tpu.dimension_semantics<parallel>, #tpu.dimension_semantics<parallel>], iteration_bounds = array<i64: 1, 1>, scalar_prefetch = 0 : i64, scratch_operands = 0 : i64, tpu.core_type = #tpu.core_type<tc>, window_params = [{transform_indices = @transform_0, window_bounds = array<i64: 14, 32>}, {transform_indices = @transform_1, window_bounds = array<i64: 128, 32>}, {transform_indices = @transform_2, window_bounds = array<i64: 1, 128>}, {transform_indices = @transform_3, window_bounds = array<i64: 14, 128>}]} {
    %c0 = arith.constant 0 : index
    %c0_0 = arith.constant 0 : index
    %0 = vector.load %arg2[%c0, %c0_0] : memref<14x32xbf16, #tpu.memory_space<vmem>>, vector<14x32xbf16>
    %c0_1 = arith.constant 0 : index
    %c0_2 = arith.constant 0 : index
    %1 = vector.load %arg3[%c0_1, %c0_2] : memref<128x32xbf16, #tpu.memory_space<vmem>>, vector<128x32xbf16>
    %2 = tpu.transpose %1, [1, 0] : vector<128x32xbf16> -> vector<32x128xbf16>
    %cst = arith.constant dense<0.000000e+00> : vector<14x128xf32>
    %3 = tpu.matmul %0, %2, %cst {dimension_numbers = #tpu.dot_dimension_numbers<[1], [0], [0], [1], [0, 0, 1, 1], [], []>} : vector<14x32xbf16>, vector<32x128xbf16>, vector<14x128xf32> -> vector<14x128xf32>
    %c0_3 = arith.constant 0 : index
    %c0_4 = arith.constant 0 : index
    %4 = vector.load %arg4[%c0_3, %c0_4] : memref<1x128xf32, #tpu.memory_space<vmem>>, vector<1x128xf32>
    %5 = vector.broadcast %4 : vector<1x128xf32> to vector<14x128xf32>
    %6 = arith.addf %3, %5 : vector<14x128xf32>
    %c0_5 = arith.constant 0 : index
    %c0_6 = arith.constant 0 : index
    %7 = vector.load %arg5[%c0_5, %c0_6] : memref<14x128xf32, #tpu.memory_space<vmem>>, vector<14x128xf32>
    tpu.vector_store %arg5[%c0_5, %c0_6], %6 {strides = array<i32>} : memref<14x128xf32, #tpu.memory_space<vmem>>, vector<14x128xf32>,
    return
  }
  func.func @transform_0(%arg0: i32, %arg1: i32) -> (i32, i32) {
    %c0_i32 = arith.constant 0 : i32
    %c0_i32_0 = arith.constant 0 : i32
    return %arg0, %c0_i32 : i32, i32
  }
  func.func @transform_1(%arg0: i32, %arg1: i32) -> (i32, i32) {
    %c0_i32 = arith.constant 0 : i32
    %c0_i32_0 = arith.constant 0 : i32
    return %arg1, %c0_i32 : i32, i32
  }
  func.func @transform_2(%arg0: i32, %arg1: i32) -> (i32, i32) {
    %c0_i32 = arith.constant 0 : i32
    %c0_i32_0 = arith.constant 0 : i32
    return %c0_i32, %arg1 : i32, i32
  }
  func.func @transform_3(%arg0: i32, %arg1: i32) -> (i32, i32) {
    %c0_i32 = arith.constant 0 : i32
    return %arg0, %arg1 : i32, i32
  }
}

module attributes {stable_mosaic.version = 11 : i64} {
  func.func @_lstm_dec_kernel(%arg0: memref<2x7x128xf32, #tpu.memory_space<vmem>>, %arg1: memref<32x128xbf16, #tpu.memory_space<vmem>>, %arg2: memref<2x32xf32, #tpu.memory_space<vmem>>, %arg3: memref<2x32xf32, #tpu.memory_space<vmem>>, %arg4: memref<2x7x32xf32, #tpu.memory_space<vmem>>, %arg5: memref<2x32xf32, #tpu.memory_space<vmem>>, %arg6: memref<2x32xf32, #tpu.memory_space<vmem>>) attributes {dimension_semantics = [], scalar_prefetch = 0 : i64, scratch_operands = 0 : i64, tpu.core_type = #tpu.core_type<tc>} {
    %c0 = arith.constant 0 : index
    %c0_0 = arith.constant 0 : index
    %0 = vector.load %arg1[%c0, %c0_0] : memref<32x128xbf16, #tpu.memory_space<vmem>>, vector<32x128xbf16>
    %c0_1 = arith.constant 0 : index
    %c0_2 = arith.constant 0 : index
    %1 = vector.load %arg2[%c0_1, %c0_2] : memref<2x32xf32, #tpu.memory_space<vmem>>, vector<2x32xf32>
    %c0_3 = arith.constant 0 : index
    %c0_4 = arith.constant 0 : index
    %2 = vector.load %arg3[%c0_3, %c0_4] : memref<2x32xf32, #tpu.memory_space<vmem>>, vector<2x32xf32>
    %c0_5 = arith.constant 0 : index
    %c0_6 = arith.constant 0 : index
    %c0_7 = arith.constant 0 : index
    %3 = vector.load %arg0[%c0_5, %c0_6, %c0_7] : memref<2x7x128xf32, #tpu.memory_space<vmem>>, vector<2x1x128xf32>
    %4 = vector.shape_cast %3 : vector<2x1x128xf32> to vector<2x128xf32>
    %5 = arith.truncf %1 : vector<2x32xf32> to vector<2x32xbf16>
    %cst = arith.constant dense<0.000000e+00> : vector<2x128xf32>
    %6 = tpu.matmul %5, %0, %cst {dimension_numbers = #tpu.dot_dimension_numbers<[1], [0], [0], [1], [0, 0, 1, 1], [], []>} : vector<2x32xbf16>, vector<32x128xbf16>, vector<2x128xf32> -> vector<2x128xf32>
    %7 = arith.addf %4, %6 : vector<2x128xf32>
    %8 = vector.extract_strided_slice %7 {offsets = [0, 0], sizes = [2, 32], strides = [1, 1]} : vector<2x128xf32> to vector<2x32xf32>
    %cst_8 = arith.constant 5.000000e-01 : f32
    %9 = vector.broadcast %cst_8 : f32 to vector<2x32xf32>
    %10 = arith.mulf %9, %8 : vector<2x32xf32>
    %11 = math.tanh %10 : vector<2x32xf32>
    %cst_9 = arith.constant 5.000000e-01 : f32
    %12 = vector.broadcast %cst_9 : f32 to vector<2x32xf32>
    %13 = arith.mulf %12, %11 : vector<2x32xf32>
    %cst_10 = arith.constant 5.000000e-01 : f32
    %14 = vector.broadcast %cst_10 : f32 to vector<2x32xf32>
    %15 = arith.addf %13, %14 : vector<2x32xf32>
    %16 = vector.extract_strided_slice %7 {offsets = [0, 32], sizes = [2, 32], strides = [1, 1]} : vector<2x128xf32> to vector<2x32xf32>
    %cst_11 = arith.constant 5.000000e-01 : f32
    %17 = vector.broadcast %cst_11 : f32 to vector<2x32xf32>
    %18 = arith.mulf %17, %16 : vector<2x32xf32>
    %19 = math.tanh %18 : vector<2x32xf32>
    %cst_12 = arith.constant 5.000000e-01 : f32
    %20 = vector.broadcast %cst_12 : f32 to vector<2x32xf32>
    %21 = arith.mulf %20, %19 : vector<2x32xf32>
    %cst_13 = arith.constant 5.000000e-01 : f32
    %22 = vector.broadcast %cst_13 : f32 to vector<2x32xf32>
    %23 = arith.addf %21, %22 : vector<2x32xf32>
    %24 = vector.extract_strided_slice %7 {offsets = [0, 64], sizes = [2, 32], strides = [1, 1]} : vector<2x128xf32> to vector<2x32xf32>
    %25 = math.tanh %24 : vector<2x32xf32>
    %26 = vector.extract_strided_slice %7 {offsets = [0, 96], sizes = [2, 32], strides = [1, 1]} : vector<2x128xf32> to vector<2x32xf32>
    %cst_14 = arith.constant 5.000000e-01 : f32
    %27 = vector.broadcast %cst_14 : f32 to vector<2x32xf32>
    %28 = arith.mulf %27, %26 : vector<2x32xf32>
    %29 = math.tanh %28 : vector<2x32xf32>
    %cst_15 = arith.constant 5.000000e-01 : f32
    %30 = vector.broadcast %cst_15 : f32 to vector<2x32xf32>
    %31 = arith.mulf %30, %29 : vector<2x32xf32>
    %cst_16 = arith.constant 5.000000e-01 : f32
    %32 = vector.broadcast %cst_16 : f32 to vector<2x32xf32>
    %33 = arith.addf %31, %32 : vector<2x32xf32>
    %34 = arith.mulf %23, %2 : vector<2x32xf32>
    %35 = arith.mulf %15, %25 : vector<2x32xf32>
    %36 = arith.addf %34, %35 : vector<2x32xf32>
    %37 = math.tanh %36 : vector<2x32xf32>
    %38 = arith.mulf %33, %37 : vector<2x32xf32>
    %c0_17 = arith.constant 0 : index
    %c0_18 = arith.constant 0 : index
    %c0_19 = arith.constant 0 : index
    %39 = vector.load %arg4[%c0_17, %c0_18, %c0_19] : memref<2x7x32xf32, #tpu.memory_space<vmem>>, vector<2x1x32xf32>
    %40 = vector.shape_cast %39 : vector<2x1x32xf32> to vector<2x32xf32>
    %41 = vector.shape_cast %38 : vector<2x32xf32> to vector<2x1x32xf32>
    tpu.vector_store %arg4[%c0_17, %c0_18, %c0_19], %41 {strides = array<i32>} : memref<2x7x32xf32, #tpu.memory_space<vmem>>, vector<2x1x32xf32>,
    %c0_20 = arith.constant 0 : index
    %c1 = arith.constant 1 : index
    %c0_21 = arith.constant 0 : index
    %42 = vector.load %arg0[%c0_20, %c1, %c0_21] : memref<2x7x128xf32, #tpu.memory_space<vmem>>, vector<2x1x128xf32>
    %43 = vector.shape_cast %42 : vector<2x1x128xf32> to vector<2x128xf32>
    %44 = arith.truncf %38 : vector<2x32xf32> to vector<2x32xbf16>
    %cst_22 = arith.constant dense<0.000000e+00> : vector<2x128xf32>
    %45 = tpu.matmul %44, %0, %cst_22 {dimension_numbers = #tpu.dot_dimension_numbers<[1], [0], [0], [1], [0, 0, 1, 1], [], []>} : vector<2x32xbf16>, vector<32x128xbf16>, vector<2x128xf32> -> vector<2x128xf32>
    %46 = arith.addf %43, %45 : vector<2x128xf32>
    %47 = vector.extract_strided_slice %46 {offsets = [0, 0], sizes = [2, 32], strides = [1, 1]} : vector<2x128xf32> to vector<2x32xf32>
    %cst_23 = arith.constant 5.000000e-01 : f32
    %48 = vector.broadcast %cst_23 : f32 to vector<2x32xf32>
    %49 = arith.mulf %48, %47 : vector<2x32xf32>
    %50 = math.tanh %49 : vector<2x32xf32>
    %cst_24 = arith.constant 5.000000e-01 : f32
    %51 = vector.broadcast %cst_24 : f32 to vector<2x32xf32>
    %52 = arith.mulf %51, %50 : vector<2x32xf32>
    %cst_25 = arith.constant 5.000000e-01 : f32
    %53 = vector.broadcast %cst_25 : f32 to vector<2x32xf32>
    %54 = arith.addf %52, %53 : vector<2x32xf32>
    %55 = vector.extract_strided_slice %46 {offsets = [0, 32], sizes = [2, 32], strides = [1, 1]} : vector<2x128xf32> to vector<2x32xf32>
    %cst_26 = arith.constant 5.000000e-01 : f32
    %56 = vector.broadcast %cst_26 : f32 to vector<2x32xf32>
    %57 = arith.mulf %56, %55 : vector<2x32xf32>
    %58 = math.tanh %57 : vector<2x32xf32>
    %cst_27 = arith.constant 5.000000e-01 : f32
    %59 = vector.broadcast %cst_27 : f32 to vector<2x32xf32>
    %60 = arith.mulf %59, %58 : vector<2x32xf32>
    %cst_28 = arith.constant 5.000000e-01 : f32
    %61 = vector.broadcast %cst_28 : f32 to vector<2x32xf32>
    %62 = arith.addf %60, %61 : vector<2x32xf32>
    %63 = vector.extract_strided_slice %46 {offsets = [0, 64], sizes = [2, 32], strides = [1, 1]} : vector<2x128xf32> to vector<2x32xf32>
    %64 = math.tanh %63 : vector<2x32xf32>
    %65 = vector.extract_strided_slice %46 {offsets = [0, 96], sizes = [2, 32], strides = [1, 1]} : vector<2x128xf32> to vector<2x32xf32>
    %cst_29 = arith.constant 5.000000e-01 : f32
    %66 = vector.broadcast %cst_29 : f32 to vector<2x32xf32>
    %67 = arith.mulf %66, %65 : vector<2x32xf32>
    %68 = math.tanh %67 : vector<2x32xf32>
    %cst_30 = arith.constant 5.000000e-01 : f32
    %69 = vector.broadcast %cst_30 : f32 to vector<2x32xf32>
    %70 = arith.mulf %69, %68 : vector<2x32xf32>
    %cst_31 = arith.constant 5.000000e-01 : f32
    %71 = vector.broadcast %cst_31 : f32 to vector<2x32xf32>
    %72 = arith.addf %70, %71 : vector<2x32xf32>
    %73 = arith.mulf %62, %36 : vector<2x32xf32>
    %74 = arith.mulf %54, %64 : vector<2x32xf32>
    %75 = arith.addf %73, %74 : vector<2x32xf32>
    %76 = math.tanh %75 : vector<2x32xf32>
    %77 = arith.mulf %72, %76 : vector<2x32xf32>
    %c0_32 = arith.constant 0 : index
    %c1_33 = arith.constant 1 : index
    %c0_34 = arith.constant 0 : index
    %78 = vector.load %arg4[%c0_32, %c1_33, %c0_34] : memref<2x7x32xf32, #tpu.memory_space<vmem>>, vector<2x1x32xf32>
    %79 = vector.shape_cast %78 : vector<2x1x32xf32> to vector<2x32xf32>
    %80 = vector.shape_cast %77 : vector<2x32xf32> to vector<2x1x32xf32>
    tpu.vector_store %arg4[%c0_32, %c1_33, %c0_34], %80 {strides = array<i32>} : memref<2x7x32xf32, #tpu.memory_space<vmem>>, vector<2x1x32xf32>,
    %c0_35 = arith.constant 0 : index
    %c2 = arith.constant 2 : index
    %c0_36 = arith.constant 0 : index
    %81 = vector.load %arg0[%c0_35, %c2, %c0_36] : memref<2x7x128xf32, #tpu.memory_space<vmem>>, vector<2x1x128xf32>
    %82 = vector.shape_cast %81 : vector<2x1x128xf32> to vector<2x128xf32>
    %83 = arith.truncf %77 : vector<2x32xf32> to vector<2x32xbf16>
    %cst_37 = arith.constant dense<0.000000e+00> : vector<2x128xf32>
    %84 = tpu.matmul %83, %0, %cst_37 {dimension_numbers = #tpu.dot_dimension_numbers<[1], [0], [0], [1], [0, 0, 1, 1], [], []>} : vector<2x32xbf16>, vector<32x128xbf16>, vector<2x128xf32> -> vector<2x128xf32>
    %85 = arith.addf %82, %84 : vector<2x128xf32>
    %86 = vector.extract_strided_slice %85 {offsets = [0, 0], sizes = [2, 32], strides = [1, 1]} : vector<2x128xf32> to vector<2x32xf32>
    %cst_38 = arith.constant 5.000000e-01 : f32
    %87 = vector.broadcast %cst_38 : f32 to vector<2x32xf32>
    %88 = arith.mulf %87, %86 : vector<2x32xf32>
    %89 = math.tanh %88 : vector<2x32xf32>
    %cst_39 = arith.constant 5.000000e-01 : f32
    %90 = vector.broadcast %cst_39 : f32 to vector<2x32xf32>
    %91 = arith.mulf %90, %89 : vector<2x32xf32>
    %cst_40 = arith.constant 5.000000e-01 : f32
    %92 = vector.broadcast %cst_40 : f32 to vector<2x32xf32>
    %93 = arith.addf %91, %92 : vector<2x32xf32>
    %94 = vector.extract_strided_slice %85 {offsets = [0, 32], sizes = [2, 32], strides = [1, 1]} : vector<2x128xf32> to vector<2x32xf32>
    %cst_41 = arith.constant 5.000000e-01 : f32
    %95 = vector.broadcast %cst_41 : f32 to vector<2x32xf32>
    %96 = arith.mulf %95, %94 : vector<2x32xf32>
    %97 = math.tanh %96 : vector<2x32xf32>
    %cst_42 = arith.constant 5.000000e-01 : f32
    %98 = vector.broadcast %cst_42 : f32 to vector<2x32xf32>
    %99 = arith.mulf %98, %97 : vector<2x32xf32>
    %cst_43 = arith.constant 5.000000e-01 : f32
    %100 = vector.broadcast %cst_43 : f32 to vector<2x32xf32>
    %101 = arith.addf %99, %100 : vector<2x32xf32>
    %102 = vector.extract_strided_slice %85 {offsets = [0, 64], sizes = [2, 32], strides = [1, 1]} : vector<2x128xf32> to vector<2x32xf32>
    %103 = math.tanh %102 : vector<2x32xf32>
    %104 = vector.extract_strided_slice %85 {offsets = [0, 96], sizes = [2, 32], strides = [1, 1]} : vector<2x128xf32> to vector<2x32xf32>
    %cst_44 = arith.constant 5.000000e-01 : f32
    %105 = vector.broadcast %cst_44 : f32 to vector<2x32xf32>
    %106 = arith.mulf %105, %104 : vector<2x32xf32>
    %107 = math.tanh %106 : vector<2x32xf32>
    %cst_45 = arith.constant 5.000000e-01 : f32
    %108 = vector.broadcast %cst_45 : f32 to vector<2x32xf32>
    %109 = arith.mulf %108, %107 : vector<2x32xf32>
    %cst_46 = arith.constant 5.000000e-01 : f32
    %110 = vector.broadcast %cst_46 : f32 to vector<2x32xf32>
    %111 = arith.addf %109, %110 : vector<2x32xf32>
    %112 = arith.mulf %101, %75 : vector<2x32xf32>
    %113 = arith.mulf %93, %103 : vector<2x32xf32>
    %114 = arith.addf %112, %113 : vector<2x32xf32>
    %115 = math.tanh %114 : vector<2x32xf32>
    %116 = arith.mulf %111, %115 : vector<2x32xf32>
    %c0_47 = arith.constant 0 : index
    %c2_48 = arith.constant 2 : index
    %c0_49 = arith.constant 0 : index
    %117 = vector.load %arg4[%c0_47, %c2_48, %c0_49] : memref<2x7x32xf32, #tpu.memory_space<vmem>>, vector<2x1x32xf32>
    %118 = vector.shape_cast %117 : vector<2x1x32xf32> to vector<2x32xf32>
    %119 = vector.shape_cast %116 : vector<2x32xf32> to vector<2x1x32xf32>
    tpu.vector_store %arg4[%c0_47, %c2_48, %c0_49], %119 {strides = array<i32>} : memref<2x7x32xf32, #tpu.memory_space<vmem>>, vector<2x1x32xf32>,
    %c0_50 = arith.constant 0 : index
    %c3 = arith.constant 3 : index
    %c0_51 = arith.constant 0 : index
    %120 = vector.load %arg0[%c0_50, %c3, %c0_51] : memref<2x7x128xf32, #tpu.memory_space<vmem>>, vector<2x1x128xf32>
    %121 = vector.shape_cast %120 : vector<2x1x128xf32> to vector<2x128xf32>
    %122 = arith.truncf %116 : vector<2x32xf32> to vector<2x32xbf16>
    %cst_52 = arith.constant dense<0.000000e+00> : vector<2x128xf32>
    %123 = tpu.matmul %122, %0, %cst_52 {dimension_numbers = #tpu.dot_dimension_numbers<[1], [0], [0], [1], [0, 0, 1, 1], [], []>} : vector<2x32xbf16>, vector<32x128xbf16>, vector<2x128xf32> -> vector<2x128xf32>
    %124 = arith.addf %121, %123 : vector<2x128xf32>
    %125 = vector.extract_strided_slice %124 {offsets = [0, 0], sizes = [2, 32], strides = [1, 1]} : vector<2x128xf32> to vector<2x32xf32>
    %cst_53 = arith.constant 5.000000e-01 : f32
    %126 = vector.broadcast %cst_53 : f32 to vector<2x32xf32>
    %127 = arith.mulf %126, %125 : vector<2x32xf32>
    %128 = math.tanh %127 : vector<2x32xf32>
    %cst_54 = arith.constant 5.000000e-01 : f32
    %129 = vector.broadcast %cst_54 : f32 to vector<2x32xf32>
    %130 = arith.mulf %129, %128 : vector<2x32xf32>
    %cst_55 = arith.constant 5.000000e-01 : f32
    %131 = vector.broadcast %cst_55 : f32 to vector<2x32xf32>
    %132 = arith.addf %130, %131 : vector<2x32xf32>
    %133 = vector.extract_strided_slice %124 {offsets = [0, 32], sizes = [2, 32], strides = [1, 1]} : vector<2x128xf32> to vector<2x32xf32>
    %cst_56 = arith.constant 5.000000e-01 : f32
    %134 = vector.broadcast %cst_56 : f32 to vector<2x32xf32>
    %135 = arith.mulf %134, %133 : vector<2x32xf32>
    %136 = math.tanh %135 : vector<2x32xf32>
    %cst_57 = arith.constant 5.000000e-01 : f32
    %137 = vector.broadcast %cst_57 : f32 to vector<2x32xf32>
    %138 = arith.mulf %137, %136 : vector<2x32xf32>
    %cst_58 = arith.constant 5.000000e-01 : f32
    %139 = vector.broadcast %cst_58 : f32 to vector<2x32xf32>
    %140 = arith.addf %138, %139 : vector<2x32xf32>
    %141 = vector.extract_strided_slice %124 {offsets = [0, 64], sizes = [2, 32], strides = [1, 1]} : vector<2x128xf32> to vector<2x32xf32>
    %142 = math.tanh %141 : vector<2x32xf32>
    %143 = vector.extract_strided_slice %124 {offsets = [0, 96], sizes = [2, 32], strides = [1, 1]} : vector<2x128xf32> to vector<2x32xf32>
    %cst_59 = arith.constant 5.000000e-01 : f32
    %144 = vector.broadcast %cst_59 : f32 to vector<2x32xf32>
    %145 = arith.mulf %144, %143 : vector<2x32xf32>
    %146 = math.tanh %145 : vector<2x32xf32>
    %cst_60 = arith.constant 5.000000e-01 : f32
    %147 = vector.broadcast %cst_60 : f32 to vector<2x32xf32>
    %148 = arith.mulf %147, %146 : vector<2x32xf32>
    %cst_61 = arith.constant 5.000000e-01 : f32
    %149 = vector.broadcast %cst_61 : f32 to vector<2x32xf32>
    %150 = arith.addf %148, %149 : vector<2x32xf32>
    %151 = arith.mulf %140, %114 : vector<2x32xf32>
    %152 = arith.mulf %132, %142 : vector<2x32xf32>
    %153 = arith.addf %151, %152 : vector<2x32xf32>
    %154 = math.tanh %153 : vector<2x32xf32>
    %155 = arith.mulf %150, %154 : vector<2x32xf32>
    %c0_62 = arith.constant 0 : index
    %c3_63 = arith.constant 3 : index
    %c0_64 = arith.constant 0 : index
    %156 = vector.load %arg4[%c0_62, %c3_63, %c0_64] : memref<2x7x32xf32, #tpu.memory_space<vmem>>, vector<2x1x32xf32>
    %157 = vector.shape_cast %156 : vector<2x1x32xf32> to vector<2x32xf32>
    %158 = vector.shape_cast %155 : vector<2x32xf32> to vector<2x1x32xf32>
    tpu.vector_store %arg4[%c0_62, %c3_63, %c0_64], %158 {strides = array<i32>} : memref<2x7x32xf32, #tpu.memory_space<vmem>>, vector<2x1x32xf32>,
    %c0_65 = arith.constant 0 : index
    %c4 = arith.constant 4 : index
    %c0_66 = arith.constant 0 : index
    %159 = vector.load %arg0[%c0_65, %c4, %c0_66] : memref<2x7x128xf32, #tpu.memory_space<vmem>>, vector<2x1x128xf32>
    %160 = vector.shape_cast %159 : vector<2x1x128xf32> to vector<2x128xf32>
    %161 = arith.truncf %155 : vector<2x32xf32> to vector<2x32xbf16>
    %cst_67 = arith.constant dense<0.000000e+00> : vector<2x128xf32>
    %162 = tpu.matmul %161, %0, %cst_67 {dimension_numbers = #tpu.dot_dimension_numbers<[1], [0], [0], [1], [0, 0, 1, 1], [], []>} : vector<2x32xbf16>, vector<32x128xbf16>, vector<2x128xf32> -> vector<2x128xf32>
    %163 = arith.addf %160, %162 : vector<2x128xf32>
    %164 = vector.extract_strided_slice %163 {offsets = [0, 0], sizes = [2, 32], strides = [1, 1]} : vector<2x128xf32> to vector<2x32xf32>
    %cst_68 = arith.constant 5.000000e-01 : f32
    %165 = vector.broadcast %cst_68 : f32 to vector<2x32xf32>
    %166 = arith.mulf %165, %164 : vector<2x32xf32>
    %167 = math.tanh %166 : vector<2x32xf32>
    %cst_69 = arith.constant 5.000000e-01 : f32
    %168 = vector.broadcast %cst_69 : f32 to vector<2x32xf32>
    %169 = arith.mulf %168, %167 : vector<2x32xf32>
    %cst_70 = arith.constant 5.000000e-01 : f32
    %170 = vector.broadcast %cst_70 : f32 to vector<2x32xf32>
    %171 = arith.addf %169, %170 : vector<2x32xf32>
    %172 = vector.extract_strided_slice %163 {offsets = [0, 32], sizes = [2, 32], strides = [1, 1]} : vector<2x128xf32> to vector<2x32xf32>
    %cst_71 = arith.constant 5.000000e-01 : f32
    %173 = vector.broadcast %cst_71 : f32 to vector<2x32xf32>
    %174 = arith.mulf %173, %172 : vector<2x32xf32>
    %175 = math.tanh %174 : vector<2x32xf32>
    %cst_72 = arith.constant 5.000000e-01 : f32
    %176 = vector.broadcast %cst_72 : f32 to vector<2x32xf32>
    %177 = arith.mulf %176, %175 : vector<2x32xf32>
    %cst_73 = arith.constant 5.000000e-01 : f32
    %178 = vector.broadcast %cst_73 : f32 to vector<2x32xf32>
    %179 = arith.addf %177, %178 : vector<2x32xf32>
    %180 = vector.extract_strided_slice %163 {offsets = [0, 64], sizes = [2, 32], strides = [1, 1]} : vector<2x128xf32> to vector<2x32xf32>
    %181 = math.tanh %180 : vector<2x32xf32>
    %182 = vector.extract_strided_slice %163 {offsets = [0, 96], sizes = [2, 32], strides = [1, 1]} : vector<2x128xf32> to vector<2x32xf32>
    %cst_74 = arith.constant 5.000000e-01 : f32
    %183 = vector.broadcast %cst_74 : f32 to vector<2x32xf32>
    %184 = arith.mulf %183, %182 : vector<2x32xf32>
    %185 = math.tanh %184 : vector<2x32xf32>
    %cst_75 = arith.constant 5.000000e-01 : f32
    %186 = vector.broadcast %cst_75 : f32 to vector<2x32xf32>
    %187 = arith.mulf %186, %185 : vector<2x32xf32>
    %cst_76 = arith.constant 5.000000e-01 : f32
    %188 = vector.broadcast %cst_76 : f32 to vector<2x32xf32>
    %189 = arith.addf %187, %188 : vector<2x32xf32>
    %190 = arith.mulf %179, %153 : vector<2x32xf32>
    %191 = arith.mulf %171, %181 : vector<2x32xf32>
    %192 = arith.addf %190, %191 : vector<2x32xf32>
    %193 = math.tanh %192 : vector<2x32xf32>
    %194 = arith.mulf %189, %193 : vector<2x32xf32>
    %c0_77 = arith.constant 0 : index
    %c4_78 = arith.constant 4 : index
    %c0_79 = arith.constant 0 : index
    %195 = vector.load %arg4[%c0_77, %c4_78, %c0_79] : memref<2x7x32xf32, #tpu.memory_space<vmem>>, vector<2x1x32xf32>
    %196 = vector.shape_cast %195 : vector<2x1x32xf32> to vector<2x32xf32>
    %197 = vector.shape_cast %194 : vector<2x32xf32> to vector<2x1x32xf32>
    tpu.vector_store %arg4[%c0_77, %c4_78, %c0_79], %197 {strides = array<i32>} : memref<2x7x32xf32, #tpu.memory_space<vmem>>, vector<2x1x32xf32>,
    %c0_80 = arith.constant 0 : index
    %c5 = arith.constant 5 : index
    %c0_81 = arith.constant 0 : index
    %198 = vector.load %arg0[%c0_80, %c5, %c0_81] : memref<2x7x128xf32, #tpu.memory_space<vmem>>, vector<2x1x128xf32>
    %199 = vector.shape_cast %198 : vector<2x1x128xf32> to vector<2x128xf32>
    %200 = arith.truncf %194 : vector<2x32xf32> to vector<2x32xbf16>
    %cst_82 = arith.constant dense<0.000000e+00> : vector<2x128xf32>
    %201 = tpu.matmul %200, %0, %cst_82 {dimension_numbers = #tpu.dot_dimension_numbers<[1], [0], [0], [1], [0, 0, 1, 1], [], []>} : vector<2x32xbf16>, vector<32x128xbf16>, vector<2x128xf32> -> vector<2x128xf32>
    %202 = arith.addf %199, %201 : vector<2x128xf32>
    %203 = vector.extract_strided_slice %202 {offsets = [0, 0], sizes = [2, 32], strides = [1, 1]} : vector<2x128xf32> to vector<2x32xf32>
    %cst_83 = arith.constant 5.000000e-01 : f32
    %204 = vector.broadcast %cst_83 : f32 to vector<2x32xf32>
    %205 = arith.mulf %204, %203 : vector<2x32xf32>
    %206 = math.tanh %205 : vector<2x32xf32>
    %cst_84 = arith.constant 5.000000e-01 : f32
    %207 = vector.broadcast %cst_84 : f32 to vector<2x32xf32>
    %208 = arith.mulf %207, %206 : vector<2x32xf32>
    %cst_85 = arith.constant 5.000000e-01 : f32
    %209 = vector.broadcast %cst_85 : f32 to vector<2x32xf32>
    %210 = arith.addf %208, %209 : vector<2x32xf32>
    %211 = vector.extract_strided_slice %202 {offsets = [0, 32], sizes = [2, 32], strides = [1, 1]} : vector<2x128xf32> to vector<2x32xf32>
    %cst_86 = arith.constant 5.000000e-01 : f32
    %212 = vector.broadcast %cst_86 : f32 to vector<2x32xf32>
    %213 = arith.mulf %212, %211 : vector<2x32xf32>
    %214 = math.tanh %213 : vector<2x32xf32>
    %cst_87 = arith.constant 5.000000e-01 : f32
    %215 = vector.broadcast %cst_87 : f32 to vector<2x32xf32>
    %216 = arith.mulf %215, %214 : vector<2x32xf32>
    %cst_88 = arith.constant 5.000000e-01 : f32
    %217 = vector.broadcast %cst_88 : f32 to vector<2x32xf32>
    %218 = arith.addf %216, %217 : vector<2x32xf32>
    %219 = vector.extract_strided_slice %202 {offsets = [0, 64], sizes = [2, 32], strides = [1, 1]} : vector<2x128xf32> to vector<2x32xf32>
    %220 = math.tanh %219 : vector<2x32xf32>
    %221 = vector.extract_strided_slice %202 {offsets = [0, 96], sizes = [2, 32], strides = [1, 1]} : vector<2x128xf32> to vector<2x32xf32>
    %cst_89 = arith.constant 5.000000e-01 : f32
    %222 = vector.broadcast %cst_89 : f32 to vector<2x32xf32>
    %223 = arith.mulf %222, %221 : vector<2x32xf32>
    %224 = math.tanh %223 : vector<2x32xf32>
    %cst_90 = arith.constant 5.000000e-01 : f32
    %225 = vector.broadcast %cst_90 : f32 to vector<2x32xf32>
    %226 = arith.mulf %225, %224 : vector<2x32xf32>
    %cst_91 = arith.constant 5.000000e-01 : f32
    %227 = vector.broadcast %cst_91 : f32 to vector<2x32xf32>
    %228 = arith.addf %226, %227 : vector<2x32xf32>
    %229 = arith.mulf %218, %192 : vector<2x32xf32>
    %230 = arith.mulf %210, %220 : vector<2x32xf32>
    %231 = arith.addf %229, %230 : vector<2x32xf32>
    %232 = math.tanh %231 : vector<2x32xf32>
    %233 = arith.mulf %228, %232 : vector<2x32xf32>
    %c0_92 = arith.constant 0 : index
    %c5_93 = arith.constant 5 : index
    %c0_94 = arith.constant 0 : index
    %234 = vector.load %arg4[%c0_92, %c5_93, %c0_94] : memref<2x7x32xf32, #tpu.memory_space<vmem>>, vector<2x1x32xf32>
    %235 = vector.shape_cast %234 : vector<2x1x32xf32> to vector<2x32xf32>
    %236 = vector.shape_cast %233 : vector<2x32xf32> to vector<2x1x32xf32>
    tpu.vector_store %arg4[%c0_92, %c5_93, %c0_94], %236 {strides = array<i32>} : memref<2x7x32xf32, #tpu.memory_space<vmem>>, vector<2x1x32xf32>,
    %c0_95 = arith.constant 0 : index
    %c6 = arith.constant 6 : index
    %c0_96 = arith.constant 0 : index
    %237 = vector.load %arg0[%c0_95, %c6, %c0_96] : memref<2x7x128xf32, #tpu.memory_space<vmem>>, vector<2x1x128xf32>
    %238 = vector.shape_cast %237 : vector<2x1x128xf32> to vector<2x128xf32>
    %239 = arith.truncf %233 : vector<2x32xf32> to vector<2x32xbf16>
    %cst_97 = arith.constant dense<0.000000e+00> : vector<2x128xf32>
    %240 = tpu.matmul %239, %0, %cst_97 {dimension_numbers = #tpu.dot_dimension_numbers<[1], [0], [0], [1], [0, 0, 1, 1], [], []>} : vector<2x32xbf16>, vector<32x128xbf16>, vector<2x128xf32> -> vector<2x128xf32>
    %241 = arith.addf %238, %240 : vector<2x128xf32>
    %242 = vector.extract_strided_slice %241 {offsets = [0, 0], sizes = [2, 32], strides = [1, 1]} : vector<2x128xf32> to vector<2x32xf32>
    %cst_98 = arith.constant 5.000000e-01 : f32
    %243 = vector.broadcast %cst_98 : f32 to vector<2x32xf32>
    %244 = arith.mulf %243, %242 : vector<2x32xf32>
    %245 = math.tanh %244 : vector<2x32xf32>
    %cst_99 = arith.constant 5.000000e-01 : f32
    %246 = vector.broadcast %cst_99 : f32 to vector<2x32xf32>
    %247 = arith.mulf %246, %245 : vector<2x32xf32>
    %cst_100 = arith.constant 5.000000e-01 : f32
    %248 = vector.broadcast %cst_100 : f32 to vector<2x32xf32>
    %249 = arith.addf %247, %248 : vector<2x32xf32>
    %250 = vector.extract_strided_slice %241 {offsets = [0, 32], sizes = [2, 32], strides = [1, 1]} : vector<2x128xf32> to vector<2x32xf32>
    %cst_101 = arith.constant 5.000000e-01 : f32
    %251 = vector.broadcast %cst_101 : f32 to vector<2x32xf32>
    %252 = arith.mulf %251, %250 : vector<2x32xf32>
    %253 = math.tanh %252 : vector<2x32xf32>
    %cst_102 = arith.constant 5.000000e-01 : f32
    %254 = vector.broadcast %cst_102 : f32 to vector<2x32xf32>
    %255 = arith.mulf %254, %253 : vector<2x32xf32>
    %cst_103 = arith.constant 5.000000e-01 : f32
    %256 = vector.broadcast %cst_103 : f32 to vector<2x32xf32>
    %257 = arith.addf %255, %256 : vector<2x32xf32>
    %258 = vector.extract_strided_slice %241 {offsets = [0, 64], sizes = [2, 32], strides = [1, 1]} : vector<2x128xf32> to vector<2x32xf32>
    %259 = math.tanh %258 : vector<2x32xf32>
    %260 = vector.extract_strided_slice %241 {offsets = [0, 96], sizes = [2, 32], strides = [1, 1]} : vector<2x128xf32> to vector<2x32xf32>
    %cst_104 = arith.constant 5.000000e-01 : f32
    %261 = vector.broadcast %cst_104 : f32 to vector<2x32xf32>
    %262 = arith.mulf %261, %260 : vector<2x32xf32>
    %263 = math.tanh %262 : vector<2x32xf32>
    %cst_105 = arith.constant 5.000000e-01 : f32
    %264 = vector.broadcast %cst_105 : f32 to vector<2x32xf32>
    %265 = arith.mulf %264, %263 : vector<2x32xf32>
    %cst_106 = arith.constant 5.000000e-01 : f32
    %266 = vector.broadcast %cst_106 : f32 to vector<2x32xf32>
    %267 = arith.addf %265, %266 : vector<2x32xf32>
    %268 = arith.mulf %257, %231 : vector<2x32xf32>
    %269 = arith.mulf %249, %259 : vector<2x32xf32>
    %270 = arith.addf %268, %269 : vector<2x32xf32>
    %271 = math.tanh %270 : vector<2x32xf32>
    %272 = arith.mulf %267, %271 : vector<2x32xf32>
    %c0_107 = arith.constant 0 : index
    %c6_108 = arith.constant 6 : index
    %c0_109 = arith.constant 0 : index
    %273 = vector.load %arg4[%c0_107, %c6_108, %c0_109] : memref<2x7x32xf32, #tpu.memory_space<vmem>>, vector<2x1x32xf32>
    %274 = vector.shape_cast %273 : vector<2x1x32xf32> to vector<2x32xf32>
    %275 = vector.shape_cast %272 : vector<2x32xf32> to vector<2x1x32xf32>
    tpu.vector_store %arg4[%c0_107, %c6_108, %c0_109], %275 {strides = array<i32>} : memref<2x7x32xf32, #tpu.memory_space<vmem>>, vector<2x1x32xf32>,
    %c0_110 = arith.constant 0 : index
    %c0_111 = arith.constant 0 : index
    %276 = vector.load %arg5[%c0_110, %c0_111] : memref<2x32xf32, #tpu.memory_space<vmem>>, vector<2x32xf32>
    tpu.vector_store %arg5[%c0_110, %c0_111], %272 {strides = array<i32>} : memref<2x32xf32, #tpu.memory_space<vmem>>, vector<2x32xf32>,
    %c0_112 = arith.constant 0 : index
    %c0_113 = arith.constant 0 : index
    %277 = vector.load %arg6[%c0_112, %c0_113] : memref<2x32xf32, #tpu.memory_space<vmem>>, vector<2x32xf32>
    tpu.vector_store %arg6[%c0_112, %c0_113], %270 {strides = array<i32>} : memref<2x32xf32, #tpu.memory_space<vmem>>, vector<2x32xf32>,
    return
  }
}

module attributes {stable_mosaic.version = 11 : i64} {
  func.func @_linear_wt_kernel(%arg0: i32, %arg1: i32, %arg2: memref<14x32xbf16, #tpu.memory_space<vmem>>, %arg3: memref<48x32xbf16, #tpu.memory_space<vmem>>, %arg4: memref<1x48xf32, #tpu.memory_space<vmem>>, %arg5: memref<14x48xf32, #tpu.memory_space<vmem>>) attributes {dimension_semantics = [#tpu.dimension_semantics<parallel>, #tpu.dimension_semantics<parallel>], iteration_bounds = array<i64: 1, 1>, scalar_prefetch = 0 : i64, scratch_operands = 0 : i64, tpu.core_type = #tpu.core_type<tc>, window_params = [{transform_indices = @transform_0, window_bounds = array<i64: 14, 32>}, {transform_indices = @transform_1, window_bounds = array<i64: 48, 32>}, {transform_indices = @transform_2, window_bounds = array<i64: 1, 48>}, {transform_indices = @transform_3, window_bounds = array<i64: 14, 48>}]} {
    %c0 = arith.constant 0 : index
    %c0_0 = arith.constant 0 : index
    %0 = vector.load %arg2[%c0, %c0_0] : memref<14x32xbf16, #tpu.memory_space<vmem>>, vector<14x32xbf16>
    %c0_1 = arith.constant 0 : index
    %c0_2 = arith.constant 0 : index
    %1 = vector.load %arg3[%c0_1, %c0_2] : memref<48x32xbf16, #tpu.memory_space<vmem>>, vector<48x32xbf16>
    %2 = tpu.transpose %1, [1, 0] : vector<48x32xbf16> -> vector<32x48xbf16>
    %cst = arith.constant dense<0.000000e+00> : vector<14x48xf32>
    %3 = tpu.matmul %0, %2, %cst {dimension_numbers = #tpu.dot_dimension_numbers<[1], [0], [0], [1], [0, 0, 1, 1], [], []>} : vector<14x32xbf16>, vector<32x48xbf16>, vector<14x48xf32> -> vector<14x48xf32>
    %c0_3 = arith.constant 0 : index
    %c0_4 = arith.constant 0 : index
    %4 = vector.load %arg4[%c0_3, %c0_4] : memref<1x48xf32, #tpu.memory_space<vmem>>, vector<1x48xf32>
    %5 = vector.broadcast %4 : vector<1x48xf32> to vector<14x48xf32>
    %6 = arith.addf %3, %5 : vector<14x48xf32>
    %c0_5 = arith.constant 0 : index
    %c0_6 = arith.constant 0 : index
    %7 = vector.load %arg5[%c0_5, %c0_6] : memref<14x48xf32, #tpu.memory_space<vmem>>, vector<14x48xf32>
    tpu.vector_store %arg5[%c0_5, %c0_6], %6 {strides = array<i32>} : memref<14x48xf32, #tpu.memory_space<vmem>>, vector<14x48xf32>,
    return
  }
  func.func @transform_0(%arg0: i32, %arg1: i32) -> (i32, i32) {
    %c0_i32 = arith.constant 0 : i32
    %c0_i32_0 = arith.constant 0 : i32
    return %arg0, %c0_i32 : i32, i32
  }
  func.func @transform_1(%arg0: i32, %arg1: i32) -> (i32, i32) {
    %c0_i32 = arith.constant 0 : i32
    %c0_i32_0 = arith.constant 0 : i32
    return %arg1, %c0_i32 : i32, i32
  }
  func.func @transform_2(%arg0: i32, %arg1: i32) -> (i32, i32) {
    %c0_i32 = arith.constant 0 : i32
    %c0_i32_0 = arith.constant 0 : i32
    return %c0_i32, %arg1 : i32, i32
  }
  func.func @transform_3(%arg0: i32, %arg1: i32) -> (i32, i32) {
    %c0_i32 = arith.constant 0 : i32
    return %arg0, %arg1 : i32, i32
  }
}

</mosaic_0001>

<llo_original>
// kernel: seq2seq_forward.7
$region0: #{seq2seq_forward.7}
  #allocation0 [shape = 'u32[]', space=smem, size = 0x4, offset = 0x4, fixed_abs, tag = 'smem constant byte address 0x4 - core index']
  #allocation1 [shape = 'u32[144,128]{1,0:T(1,128)}', space=vmem, size = 0x12000, scoped, tag = 'internal scratch']
  %s0 = inlined_call_operand.vmem [shape: bf16[14,32], index: 0, kind: input, shape index: {}]
  %s1 = inlined_call_operand.vmem [shape: bf16[128,32], index: 1, kind: input, shape index: {}]
  %s2 = inlined_call_operand.vmem [shape: f32[1,128], index: 2, kind: input, shape index: {}]
  %s3 = inlined_call_operand.vmem [shape: f32[14,128], index: 3, kind: output, shape index: {}]
  %s4 = sld [smem:[#allocation0]]
  $region22: #{seq2seq_forward.7} parent=0
    _
  %s6 = ssub.s32 1, %s4
  %s7 = scalar_select 0, %s6, %s4
  // Predicated region
  $region2: #{seq2seq_forward.7} parent=0 // pred_check
    _
  $region3: #{seq2seq_forward.7} parent=0 // pred_check_branch
    %9 = sbr.rel (0) target = $region5
  $region4: #{seq2seq_forward.7} parent=0 // pred_region
    _
  $region5: #{seq2seq_forward.7} parent=0 // pred_fallthru
    _
  // Predicated region
  $region6: #{seq2seq_forward.7} parent=0 // pred_check
    _
  $region7: #{seq2seq_forward.7} parent=0 // pred_check_branch
    %11 = sbr.rel (0) target = $region9
  $region8: #{seq2seq_forward.7} parent=0 // pred_region
    _
  $region9: #{seq2seq_forward.7} parent=0 // pred_fallthru
    _
  // Predicated region
  $region10: #{seq2seq_forward.7} parent=0 // pred_check
    _
  $region11: #{seq2seq_forward.7} parent=0 // pred_check_branch
    %13 = sbr.rel (0) target = $region13
  $region12: #{seq2seq_forward.7} parent=0 // pred_region
    _
  $region13: #{seq2seq_forward.7} parent=0 // pred_fallthru
    _
  %v15 = vld [vmem:[%s0] sm:$0xf]
  %v16 = vld [vmem:[%s0 + $0x4] sm:$0x7]
  %v17 = vld [vmem:[%s1] sm:$0xf]
  %v18 = vld [vmem:[%s1 + $0x4] sm:$0xf]
  %v19 = vld [vmem:[%s1 + $0x8] sm:$0xf]
  %v20 = vld [vmem:[%s1 + $0xc] sm:$0xf]
  %v21 = vld [vmem:[%s1 + $0x10] sm:$0xf]
  %v22 = vld [vmem:[%s1 + $0x14] sm:$0xf]
  %v23 = vld [vmem:[%s1 + $0x18] sm:$0xf]
  %v24 = vld [vmem:[%s1 + $0x1c] sm:$0xf]
  %v25 = vld [vmem:[%s1 + $0x20] sm:$0xf]
  %v26 = vld [vmem:[%s1 + $0x24] sm:$0xf]
  %v27 = vld [vmem:[%s1 + $0x28] sm:$0xf]
  %v28 = vld [vmem:[%s1 + $0x2c] sm:$0xf]
  %v29 = vld [vmem:[%s1 + $0x30] sm:$0xf]
  %v30 = vld [vmem:[%s1 + $0x34] sm:$0xf]
  %v31 = vld [vmem:[%s1 + $0x38] sm:$0xf]
  %v32 = vld [vmem:[%s1 + $0x3c] sm:$0xf]
  %v33 = vld [vmem:[%s2] sm:$0x1]
  %v35 = vlaneseq
  %v36 = vshrl.u32 %v35, 7
  %v37 = vsub.s32 0, %v36
  %v38 = vrot.slane %v33, %v37
  %v42 = vunpack.c.l.b16 %v15
  %v43 = vunpack.c.l.b16 %v16
  %v44 = vpack.c.b16 %v43, %v42
  %v61 = vunpack.c.l.b16 %v17
  %v62 = vunpack.c.l.b16 %v18
  %v63 = vunpack.c.l.b16 %v19
  %v64 = vunpack.c.l.b16 %v20
  %v65 = vunpack.c.l.b16 %v21
  %v66 = vunpack.c.l.b16 %v22
  %v67 = vunpack.c.l.b16 %v23
  %v68 = vunpack.c.l.b16 %v24
  %v69 = vunpack.c.l.b16 %v25
  %v70 = vunpack.c.l.b16 %v26
  %v71 = vunpack.c.l.b16 %v27
  %v72 = vunpack.c.l.b16 %v28
  %v73 = vunpack.c.l.b16 %v29
  %v74 = vunpack.c.l.b16 %v30
  %v75 = vunpack.c.l.b16 %v31
  %v76 = vunpack.c.l.b16 %v32
  %v77 = vpack.c.b16 %v62, %v61
  %v78 = vpack.c.b16 %v64, %v63
  %v79 = vpack.c.b16 %v66, %v65
  %v80 = vpack.c.b16 %v68, %v67
  %v81 = vpack.c.b16 %v70, %v69
  %v82 = vpack.c.b16 %v72, %v71
  %v83 = vpack.c.b16 %v74, %v73
  %v84 = vpack.c.b16 %v76, %v75
  %vm85 = vcmask 261120
  %v87 = vsel %vm85, %v44, 0
  %v90 = vsel %vm85, %v77, 0
  %v93 = vsel %vm85, %v78, 0
  %v96 = vsel %vm85, %v79, 0
  %v99 = vsel %vm85, %v80, 0
  %v102 = vsel %vm85, %v81, 0
  %v105 = vsel %vm85, %v82, 0
  %v108 = vsel %vm85, %v83, 0
  %v111 = vsel %vm85, %v84, 0
  %113 = vmatprep.subr.bf16.mxu0 0
  %114 = vmatpush1.bf16.xpose.msra.mxu0 %v90
  %115 = vmatprep.subr.bf16.mxu0 0
  %116 = vmatpush1.bf16.xpose.msra.mxu0 %v93
  %117 = vmatprep.subr.bf16.mxu0 0
  %118 = vmatpush1.bf16.xpose.msra.mxu0 %v96
  %119 = vmatprep.subr.bf16.mxu0 0
  %120 = vmatpush1.bf16.xpose.msra.mxu0 %v99
  %121 = vmatprep.subr.bf16.mxu0 0
  %122 = vmatpush1.bf16.xpose.msra.mxu0 %v102
  %123 = vmatprep.subr.bf16.mxu0 0
  %124 = vmatpush1.bf16.xpose.msra.mxu0 %v105
  %125 = vmatprep.subr.bf16.mxu0 0
  %126 = vmatpush1.bf16.xpose.msra.mxu0 %v108
  %127 = vmatprep.subr.bf16.mxu0 0
  %128 = vmatpush1.bf16.xpose.msra.mxu0 %v111
  %129 = vmatprep.subr.bf16.mxu0 0
  %130 = vmatpush1.bf16.xpose.msra.mxu0 0
  %131 = vmatprep.subr.bf16.mxu0 0
  %132 = vmatpush1.bf16.xpose.msra.mxu0 0
  %133 = vmatprep.subr.bf16.mxu0 0
  %134 = vmatpush1.bf16.xpose.msra.mxu0 0
  %135 = vmatprep.subr.bf16.mxu0 0
  %136 = vmatpush1.bf16.xpose.msra.mxu0 0
  %137 = vmatprep.subr.bf16.mxu0 0
  %138 = vmatpush1.bf16.xpose.msra.mxu0 0
  %139 = vmatprep.subr.bf16.mxu0 0
  %140 = vmatpush1.bf16.xpose.msra.mxu0 0
  %141 = vmatprep.subr.bf16.mxu0 0
  %142 = vmatpush1.bf16.xpose.msra.mxu0 0
  %143 = vmatprep.subr.bf16.mxu0 0
  %144 = vmatpush1.bf16.xpose.msra.mxu0 0
  %145 = vmatprep.mubr.bf16.mxu0 0
  %146 = vmatmul.mubr.bf16.gmra.mrb[0].mxu0 %v87
  %v147 = vpop.f32.mrb[0].mxu0
  %v148 = vadd.f32 %v38, %v147
  %v149 = vpop.f32.mrb[0].mxu0
  %v150 = vpop.f32.mrb[0].mxu0
  %v151 = vadd.f32 %v38, %v150
  %v152 = vpop.f32.mrb[0].mxu0
  %153 = vdwg.mxu0
  %154 = vst [vmem:[%s3] sm:$0xff] %v148
  %155 = vst [vmem:[%s3 + $0x8] sm:$0x3f] %v151
  // Predicated region
  $region14: #{seq2seq_forward.7} parent=0 // pred_check
    _
  $region15: #{seq2seq_forward.7} parent=0 // pred_check_branch
    %157 = sbr.rel (0) target = $region17
  $region16: #{seq2seq_forward.7} parent=0 // pred_region
    _
  $region17: #{seq2seq_forward.7} parent=0 // pred_fallthru
    _
  // Predicated region
  $region18: #{seq2seq_forward.7} parent=0 // pred_check
    _
  $region19: #{seq2seq_forward.7} parent=0 // pred_check_branch
    %159 = sbr.rel (0) target = $region21
  $region20: #{seq2seq_forward.7} parent=0 // pred_region
    _
  $region21: #{seq2seq_forward.7} parent=0 // pred_fallthru
    _

// kernel: seq2seq_forward.5
$region0: #{seq2seq_forward.5}
  #allocation0 [shape = 'u32[]', space=smem, size = 0x4, offset = 0x4, fixed_abs, tag = 'smem constant byte address 0x4 - core index']
  #allocation1 [shape = 'u32[144,128]{1,0:T(1,128)}', space=vmem, size = 0x12000, scoped, tag = 'internal scratch']
  %s0 = inlined_call_operand.vmem [shape: bf16[16,32], index: 0, kind: input, shape index: {}]
  %s1 = inlined_call_operand.vmem [shape: bf16[128,32], index: 1, kind: input, shape index: {}]
  %s2 = inlined_call_operand.vmem [shape: f32[1,128], index: 2, kind: input, shape index: {}]
  %s3 = inlined_call_operand.vmem [shape: f32[16,128], index: 3, kind: output, shape index: {}]
  %s4 = sld [smem:[#allocation0]]
  $region22: #{seq2seq_forward.5} parent=0
    _
  %s6 = ssub.s32 1, %s4
  %s7 = scalar_select 0, %s6, %s4
  // Predicated region
  $region2: #{seq2seq_forward.5} parent=0 // pred_check
    _
  $region3: #{seq2seq_forward.5} parent=0 // pred_check_branch
    %9 = sbr.rel (0) target = $region5
  $region4: #{seq2seq_forward.5} parent=0 // pred_region
    _
  $region5: #{seq2seq_forward.5} parent=0 // pred_fallthru
    _
  // Predicated region
  $region6: #{seq2seq_forward.5} parent=0 // pred_check
    _
  $region7: #{seq2seq_forward.5} parent=0 // pred_check_branch
    %11 = sbr.rel (0) target = $region9
  $region8: #{seq2seq_forward.5} parent=0 // pred_region
    _
  $region9: #{seq2seq_forward.5} parent=0 // pred_fallthru
    _
  // Predicated region
  $region10: #{seq2seq_forward.5} parent=0 // pred_check
    _
  $region11: #{seq2seq_forward.5} parent=0 // pred_check_branch
    %13 = sbr.rel (0) target = $region13
  $region12: #{seq2seq_forward.5} parent=0 // pred_region
    _
  $region13: #{seq2seq_forward.5} parent=0 // pred_fallthru
    _
  %v15 = vld [vmem:[%s0] sm:$0xf]
  %v16 = vld [vmem:[%s0 + $0x4] sm:$0xf]
  %v17 = vld [vmem:[%s1] sm:$0xf]
  %v18 = vld [vmem:[%s1 + $0x4] sm:$0xf]
  %v19 = vld [vmem:[%s1 + $0x8] sm:$0xf]
  %v20 = vld [vmem:[%s1 + $0xc] sm:$0xf]
  %v21 = vld [vmem:[%s1 + $0x10] sm:$0xf]
  %v22 = vld [vmem:[%s1 + $0x14] sm:$0xf]
  %v23 = vld [vmem:[%s1 + $0x18] sm:$0xf]
  %v24 = vld [vmem:[%s1 + $0x1c] sm:$0xf]
  %v25 = vld [vmem:[%s1 + $0x20] sm:$0xf]
  %v26 = vld [vmem:[%s1 + $0x24] sm:$0xf]
  %v27 = vld [vmem:[%s1 + $0x28] sm:$0xf]
  %v28 = vld [vmem:[%s1 + $0x2c] sm:$0xf]
  %v29 = vld [vmem:[%s1 + $0x30] sm:$0xf]
  %v30 = vld [vmem:[%s1 + $0x34] sm:$0xf]
  %v31 = vld [vmem:[%s1 + $0x38] sm:$0xf]
  %v32 = vld [vmem:[%s1 + $0x3c] sm:$0xf]
  %v33 = vld [vmem:[%s2] sm:$0x1]
  %v35 = vlaneseq
  %v36 = vshrl.u32 %v35, 7
  %v37 = vsub.s32 0, %v36
  %v38 = vrot.slane %v33, %v37
  %v42 = vunpack.c.l.b16 %v15
  %v43 = vunpack.c.l.b16 %v16
  %v44 = vpack.c.b16 %v43, %v42
  %v61 = vunpack.c.l.b16 %v17
  %v62 = vunpack.c.l.b16 %v18
  %v63 = vunpack.c.l.b16 %v19
  %v64 = vunpack.c.l.b16 %v20
  %v65 = vunpack.c.l.b16 %v21
  %v66 = vunpack.c.l.b16 %v22
  %v67 = vunpack.c.l.b16 %v23
  %v68 = vunpack.c.l.b16 %v24
  %v69 = vunpack.c.l.b16 %v25
  %v70 = vunpack.c.l.b16 %v26
  %v71 = vunpack.c.l.b16 %v27
  %v72 = vunpack.c.l.b16 %v28
  %v73 = vunpack.c.l.b16 %v29
  %v74 = vunpack.c.l.b16 %v30
  %v75 = vunpack.c.l.b16 %v31
  %v76 = vunpack.c.l.b16 %v32
  %v77 = vpack.c.b16 %v62, %v61
  %v78 = vpack.c.b16 %v64, %v63
  %v79 = vpack.c.b16 %v66, %v65
  %v80 = vpack.c.b16 %v68, %v67
  %v81 = vpack.c.b16 %v70, %v69
  %v82 = vpack.c.b16 %v72, %v71
  %v83 = vpack.c.b16 %v74, %v73
  %v84 = vpack.c.b16 %v76, %v75
  %vm85 = vcmask 261120
  %v87 = vsel %vm85, %v44, 0
  %v90 = vsel %vm85, %v77, 0
  %v93 = vsel %vm85, %v78, 0
  %v96 = vsel %vm85, %v79, 0
  %v99 = vsel %vm85, %v80, 0
  %v102 = vsel %vm85, %v81, 0
  %v105 = vsel %vm85, %v82, 0
  %v108 = vsel %vm85, %v83, 0
  %v111 = vsel %vm85, %v84, 0
  %113 = vmatprep.subr.bf16.mxu0 0
  %114 = vmatpush1.bf16.xpose.msra.mxu0 %v90
  %115 = vmatprep.subr.bf16.mxu0 0
  %116 = vmatpush1.bf16.xpose.msra.mxu0 %v93
  %117 = vmatprep.subr.bf16.mxu0 0
  %118 = vmatpush1.bf16.xpose.msra.mxu0 %v96
  %119 = vmatprep.subr.bf16.mxu0 0
  %120 = vmatpush1.bf16.xpose.msra.mxu0 %v99
  %121 = vmatprep.subr.bf16.mxu0 0
  %122 = vmatpush1.bf16.xpose.msra.mxu0 %v102
  %123 = vmatprep.subr.bf16.mxu0 0
  %124 = vmatpush1.bf16.xpose.msra.mxu0 %v105
  %125 = vmatprep.subr.bf16.mxu0 0
  %126 = vmatpush1.bf16.xpose.msra.mxu0 %v108
  %127 = vmatprep.subr.bf16.mxu0 0
  %128 = vmatpush1.bf16.xpose.msra.mxu0 %v111
  %129 = vmatprep.subr.bf16.mxu0 0
  %130 = vmatpush1.bf16.xpose.msra.mxu0 0
  %131 = vmatprep.subr.bf16.mxu0 0
  %132 = vmatpush1.bf16.xpose.msra.mxu0 0
  %133 = vmatprep.subr.bf16.mxu0 0
  %134 = vmatpush1.bf16.xpose.msra.mxu0 0
  %135 = vmatprep.subr.bf16.mxu0 0
  %136 = vmatpush1.bf16.xpose.msra.mxu0 0
  %137 = vmatprep.subr.bf16.mxu0 0
  %138 = vmatpush1.bf16.xpose.msra.mxu0 0
  %139 = vmatprep.subr.bf16.mxu0 0
  %140 = vmatpush1.bf16.xpose.msra.mxu0 0
  %141 = vmatprep.subr.bf16.mxu0 0
  %142 = vmatpush1.bf16.xpose.msra.mxu0 0
  %143 = vmatprep.subr.bf16.mxu0 0
  %144 = vmatpush1.bf16.xpose.msra.mxu0 0
  %145 = vmatprep.mubr.bf16.mxu0 0
  %146 = vmatmul.mubr.bf16.gmra.mrb[0].mxu0 %v87
  %v147 = vpop.f32.mrb[0].mxu0
  %v148 = vadd.f32 %v38, %v147
  %v149 = vpop.f32.mrb[0].mxu0
  %v150 = vpop.f32.mrb[0].mxu0
  %v151 = vadd.f32 %v38, %v150
  %v152 = vpop.f32.mrb[0].mxu0
  %153 = vdwg.mxu0
  %154 = vst [vmem:[%s3] sm:$0xff] %v148
  %155 = vst [vmem:[%s3 + $0x8] sm:$0xff] %v151
  // Predicated region
  $region14: #{seq2seq_forward.5} parent=0 // pred_check
    _
  $region15: #{seq2seq_forward.5} parent=0 // pred_check_branch
    %157 = sbr.rel (0) target = $region17
  $region16: #{seq2seq_forward.5} parent=0 // pred_region
    _
  $region17: #{seq2seq_forward.5} parent=0 // pred_fallthru
    _
  // Predicated region
  $region18: #{seq2seq_forward.5} parent=0 // pred_check
    _
  $region19: #{seq2seq_forward.5} parent=0 // pred_check_branch
    %159 = sbr.rel (0) target = $region21
  $region20: #{seq2seq_forward.5} parent=0 // pred_region
    _
  $region21: #{seq2seq_forward.5} parent=0 // pred_fallthru
    _

// kernel: seq2seq_forward.8
$region0: #{seq2seq_forward.8}
  #allocation0 [shape = 'u32[]', space=smem, size = 0x4, offset = 0x4, fixed_abs, tag = 'smem constant byte address 0x4 - core index']
  #allocation1 [shape = 'u32[144,128]{1,0:T(1,128)}', space=vmem, size = 0x12000, scoped, tag = 'internal scratch']
  %s0 = inlined_call_operand.vmem [shape: f32[2,7,128], index: 0, kind: input, shape index: {}]
  %s1 = inlined_call_operand.vmem [shape: bf16[32,128], index: 1, kind: input, shape index: {}]
  %s2 = inlined_call_operand.vmem [shape: f32[2,32], index: 2, kind: input, shape index: {}]
  %s3 = inlined_call_operand.vmem [shape: f32[2,32], index: 3, kind: input, shape index: {}]
  %s4 = inlined_call_operand.vmem [shape: f32[2,7,32], index: 4, kind: output, shape index: {0}]
  %s5 = inlined_call_operand.hbm [shape: f32[2,32], index: 5, kind: output, shape index: {1}]
  %s6 = inlined_call_operand.hbm [shape: f32[2,32], index: 6, kind: output, shape index: {2}]
  %7 = xla_tuple %s4, %s5, %s6
  %s8 = sld [smem:[#allocation0]]
  $region42: #{seq2seq_forward.8} parent=0
    _
  %s10 = ssub.s32 1, %s8
  %s11 = scalar_select 0, %s10, %s8
  $region1: #{seq2seq_forward.8} parent=0
    #allocation2 [shape = 'u8[1024]{0}', space=vmem, size = 0x400, scoped, tag = 'output window, operand 1, single buffered']
    #allocation3 [shape = 's32[1]{0}', space=sflag, size = 0x4, scoped, tag = 'scoped memory for seq2seq_forward.8']
    #allocation4 [shape = 'u8[1024]{0}', space=vmem, size = 0x400, scoped, tag = 'output window, operand 2, single buffered']
    #allocation5 [shape = 's32[1]{0}', space=sflag, size = 0x4, scoped, tag = 'scoped memory for seq2seq_forward.8']
    %12 = vsyncpa [#allocation3], 0
    %13 = vsyncpa [#allocation5], 0
    // Predicated region
    $region2: #{seq2seq_forward.8} parent=1 // pred_check
      _
    $region3: #{seq2seq_forward.8} parent=1 // pred_check_branch
      %15 = sbr.rel (0) target = $region5
    $region4: #{seq2seq_forward.8} parent=1 // pred_region
      _
    $region5: #{seq2seq_forward.8} parent=1 // pred_fallthru
      _
    // Predicated region
    $region6: #{seq2seq_forward.8} parent=1 // pred_check
      _
    $region7: #{seq2seq_forward.8} parent=1 // pred_check_branch
      %17 = sbr.rel (0) target = $region9
    $region8: #{seq2seq_forward.8} parent=1 // pred_region
      _
    $region9: #{seq2seq_forward.8} parent=1 // pred_fallthru
      _
    // Predicated region
    $region10: #{seq2seq_forward.8} parent=1 // pred_check
      _
    $region11: #{seq2seq_forward.8} parent=1 // pred_check_branch
      %19 = sbr.rel (0) target = $region13
    $region12: #{seq2seq_forward.8} parent=1 // pred_region
      _
    $region13: #{seq2seq_forward.8} parent=1 // pred_fallthru
      _
    // Predicated region
    $region14: #{seq2seq_forward.8} parent=1 // pred_check
      _
    $region15: #{seq2seq_forward.8} parent=1 // pred_check_branch
      %21 = sbr.rel (0) target = $region17
    $region16: #{seq2seq_forward.8} parent=1 // pred_region
      _
    $region17: #{seq2seq_forward.8} parent=1 // pred_fallthru
      _
    %v23 = vld [vmem:[%s1] sm:$0xf]
    %v24 = vld [vmem:[%s1 + $0x4] sm:$0xf]
    %v25 = vld [vmem:[%s1 + $0x8] sm:$0xf]
    %v26 = vld [vmem:[%s1 + $0xc] sm:$0xf]
    %v27 = vld [vmem:[%s2] sm:$0x3]
    %v28 = vld [vmem:[%s3] sm:$0x3]
    %v29 = vld [vmem:[%s0] sm:$0x1]
    %v30 = vld [vmem:[%s0 + $0x8] sm:$0x1]
    %v31 = vpack.c.bf16 %v27, %v27
    %v36 = vunpack.c.l.b16 %v23
    %v37 = vunpack.c.l.b16 %v24
    %v38 = vunpack.c.l.b16 %v25
    %v39 = vunpack.c.l.b16 %v26
    %v40 = vpack.c.b16 %v37, %v36
    %v41 = vpack.c.b16 %v39, %v38
    %vm44 = vcmask 261120
    %v46 = vsel %vm44, %v31, 0
    %48 = vmatprep.subr.bf16.mxu0 0
    %49 = vmatpush1.bf16.msra.mxu0 %v40
    %50 = vmatprep.subr.bf16.mxu0 0
    %51 = vmatpush1.bf16.msra.mxu0 %v41
    %52 = vmatprep.subr.bf16.mxu0 0
    %53 = vmatpush1.bf16.msra.mxu0 0
    %54 = vmatprep.subr.bf16.mxu0 0
    %55 = vmatpush1.bf16.msra.mxu0 0
    %56 = vmatprep.subr.bf16.mxu0 0
    %57 = vmatpush1.bf16.msra.mxu0 0
    %58 = vmatprep.subr.bf16.mxu0 0
    %59 = vmatpush1.bf16.msra.mxu0 0
    %60 = vmatprep.subr.bf16.mxu0 0
    %61 = vmatpush1.bf16.msra.mxu0 0
    %62 = vmatprep.subr.bf16.mxu0 0
    %63 = vmatpush1.bf16.msra.mxu0 0
    %64 = vmatprep.subr.bf16.mxu0 0
    %65 = vmatpush1.bf16.msra.mxu0 0
    %66 = vmatprep.subr.bf16.mxu0 0
    %67 = vmatpush1.bf16.msra.mxu0 0
    %68 = vmatprep.subr.bf16.mxu0 0
    %69 = vmatpush1.bf16.msra.mxu0 0
    %70 = vmatprep.subr.bf16.mxu0 0
    %71 = vmatpush1.bf16.msra.mxu0 0
    %72 = vmatprep.subr.bf16.mxu0 0
    %73 = vmatpush1.bf16.msra.mxu0 0
    %74 = vmatprep.subr.bf16.mxu0 0
    %75 = vmatpush1.bf16.msra.mxu0 0
    %76 = vmatprep.subr.bf16.mxu0 0
    %77 = vmatpush1.bf16.msra.mxu0 0
    %78 = vmatprep.subr.bf16.mxu0 0
    %79 = vmatpush1.bf16.msra.mxu0 0
    %80 = vmatprep.mubr.bf16.mxu0 0
    %81 = vmatmul.mubr.bf16.gmra.mrb[0].mxu0 %v46
    %v82 = vpop.f32.mrb[0].mxu0
    %v83 = vadd.f32 0.0, %v82
    %v84 = vpop.f32.mrb[0].mxu0
    %v85 = vpop.f32.mrb[0].mxu0
    %v86 = vpop.f32.mrb[0].mxu0
    %87 = vdwg.mxu0
    %v89 = vrot.slane %v83, 1
    %v92 = vadd.f32 %v29, %v83
    %v93 = vadd.f32 %v30, %v89
    %v94 = vmul.f32 %v92, 0.5
    %v95 = vmul.f32 %v93, 0.5
    %v96 = vtanh.pop %v94
    %v97 = vtanh.pop %v95
    %v98 = vmul.f32 %v96, 0.5
    %v99 = vmul.f32 %v97, 0.5
    %v100 = vadd.f32 %v98, 0.5
    %v101 = vadd.f32 %v99, 0.5
    %v102 = vtanh.pop %v92
    %v103 = vtanh.pop %v93
    %v105 = vrot.slane %v28, 1
    %106 = vrot.lane.b32.xlu0 %v28, 32
    %v107 = vpop.permute.xlu0 %106
    %108 = vrot.lane.b32.xlu0 %v105, 32
    %v109 = vpop.permute.xlu0 %108
    %v112 = vmul.f32 %v100, %v107
    %v113 = vmul.f32 %v101, %v109
    %116 = vrot.lane.b32.xlu0 %v102, 64
    %v117 = vpop.permute.xlu0 %116
    %118 = vrot.lane.b32.xlu0 %v103, 64
    %v119 = vpop.permute.xlu0 %118
    %v122 = vmul.f32 %v100, %v117
    %v123 = vmul.f32 %v101, %v119
    %126 = vrot.lane.b32.xlu0 %v122, 32
    %v127 = vpop.permute.xlu0 %126
    %128 = vrot.lane.b32.xlu0 %v123, 32
    %v129 = vpop.permute.xlu0 %128
    %v132 = vadd.f32 %v112, %v127
    %v133 = vadd.f32 %v113, %v129
    %v134 = vtanh.pop %v132
    %v135 = vtanh.pop %v133
    %138 = vrot.lane.b32.xlu0 %v134, 64
    %v139 = vpop.permute.xlu0 %138
    %140 = vrot.lane.b32.xlu0 %v135, 64
    %v141 = vpop.permute.xlu0 %140
    %v144 = vmul.f32 %v100, %v139
    %v145 = vmul.f32 %v101, %v141
    %148 = vrot.lane.b32.xlu0 %v144, 32
    %v149 = vpop.permute.xlu0 %148
    %150 = vrot.lane.b32.xlu0 %v145, 32
    %v151 = vpop.permute.xlu0 %150
    %vm154 = vcmask 253952
    %155 = vst.msk [vmem:[%s4] sm:$0x1] %vm154, %v149
    %156 = vst.msk [vmem:[%s4 + $0x8] sm:$0x1] %vm154, %v151
    %v157 = vld [vmem:[%s0 + $0x1] sm:$0x1]
    %v158 = vld [vmem:[%s0 + $0x9] sm:$0x1]
    %v159 = vpack.c.bf16 %v144, %v144
    %v160 = vpack.c.bf16 %v145, %v145
    %v163 = vunpack.c.l.b16 %v159
    %v164 = vunpack.c.l.b16 %v160
    %v165 = vrot.slane %v164, 7
    %vm166 = vcmask 1041409
    %v167 = vsel %vm166, %v165, %v163
    %v168 = vpack.c.b16 %v167, %v167
    %169 = vrot.lane.b32.xlu0 %v168, 32
    %v170 = vpop.permute.xlu0 %169
    %v172 = vsel %vm44, %v170, 0
    %174 = vmatprep.subr.bf16.mxu0 0
    %175 = vmatpush1.bf16.msra.mxu0 %v40
    %176 = vmatprep.subr.bf16.mxu0 0
    %177 = vmatpush1.bf16.msra.mxu0 %v41
    %178 = vmatprep.subr.bf16.mxu0 0
    %179 = vmatpush1.bf16.msra.mxu0 0
    %180 = vmatprep.subr.bf16.mxu0 0
    %181 = vmatpush1.bf16.msra.mxu0 0
    %182 = vmatprep.subr.bf16.mxu0 0
    %183 = vmatpush1.bf16.msra.mxu0 0
    %184 = vmatprep.subr.bf16.mxu0 0
    %185 = vmatpush1.bf16.msra.mxu0 0
    %186 = vmatprep.subr.bf16.mxu0 0
    %187 = vmatpush1.bf16.msra.mxu0 0
    %188 = vmatprep.subr.bf16.mxu0 0
    %189 = vmatpush1.bf16.msra.mxu0 0
    %190 = vmatprep.subr.bf16.mxu0 0
    %191 = vmatpush1.bf16.msra.mxu0 0
    %192 = vmatprep.subr.bf16.mxu0 0
    %193 = vmatpush1.bf16.msra.mxu0 0
    %194 = vmatprep.subr.bf16.mxu0 0
    %195 = vmatpush1.bf16.msra.mxu0 0
    %196 = vmatprep.subr.bf16.mxu0 0
    %197 = vmatpush1.bf16.msra.mxu0 0
    %198 = vmatprep.subr.bf16.mxu0 0
    %199 = vmatpush1.bf16.msra.mxu0 0
    %200 = vmatprep.subr.bf16.mxu0 0
    %201 = vmatpush1.bf16.msra.mxu0 0
    %202 = vmatprep.subr.bf16.mxu0 0
    %203 = vmatpush1.bf16.msra.mxu0 0
    %204 = vmatprep.subr.bf16.mxu0 0
    %205 = vmatpush1.bf16.msra.mxu0 0
    %206 = vmatprep.mubr.bf16.mxu0 0
    %207 = vmatmul.mubr.bf16.gmra.mrb[0].mxu0 %v172
    %v208 = vpop.f32.mrb[0].mxu0
    %v209 = vadd.f32 0.0, %v208
    %v210 = vpop.f32.mrb[0].mxu0
    %v211 = vpop.f32.mrb[0].mxu0
    %v212 = vpop.f32.mrb[0].mxu0
    %213 = vdwg.mxu0
    %v215 = vrot.slane %v209, 1
    %v218 = vadd.f32 %v157, %v209
    %v219 = vadd.f32 %v158, %v215
    %v220 = vmul.f32 %v218, 0.5
    %v221 = vmul.f32 %v219, 0.5
    %v222 = vtanh.pop %v220
    %v223 = vtanh.pop %v221
    %v224 = vmul.f32 %v222, 0.5
    %v225 = vmul.f32 %v223, 0.5
    %v226 = vadd.f32 %v224, 0.5
    %v227 = vadd.f32 %v225, 0.5
    %v228 = vtanh.pop %v218
    %v229 = vtanh.pop %v219
    %v230 = vmul.f32 %v226, %v132
    %v231 = vmul.f32 %v227, %v133
    %234 = vrot.lane.b32.xlu0 %v228, 64
    %v235 = vpop.permute.xlu0 %234
    %236 = vrot.lane.b32.xlu0 %v229, 64
    %v237 = vpop.permute.xlu0 %236
    %v240 = vmul.f32 %v226, %v235
    %v241 = vmul.f32 %v227, %v237
    %244 = vrot.lane.b32.xlu0 %v240, 32
    %v245 = vpop.permute.xlu0 %244
    %246 = vrot.lane.b32.xlu0 %v241, 32
    %v247 = vpop.permute.xlu0 %246
    %v250 = vadd.f32 %v230, %v245
    %v251 = vadd.f32 %v231, %v247
    %v252 = vtanh.pop %v250
    %v253 = vtanh.pop %v251
    %256 = vrot.lane.b32.xlu0 %v252, 64
    %v257 = vpop.permute.xlu0 %256
    %258 = vrot.lane.b32.xlu0 %v253, 64
    %v259 = vpop.permute.xlu0 %258
    %v262 = vmul.f32 %v226, %v257
    %v263 = vmul.f32 %v227, %v259
    %266 = vrot.lane.b32.xlu0 %v262, 32
    %v267 = vpop.permute.xlu0 %266
    %268 = vrot.lane.b32.xlu0 %v263, 32
    %v269 = vpop.permute.xlu0 %268
    %272 = vst.msk [vmem:[%s4 + $0x1] sm:$0x1] %vm154, %v267
    %273 = vst.msk [vmem:[%s4 + $0x9] sm:$0x1] %vm154, %v269
    %v274 = vld [vmem:[%s0 + $0x2] sm:$0x1]
    %v275 = vld [vmem:[%s0 + $0xa] sm:$0x1]
    %v276 = vpack.c.bf16 %v262, %v262
    %v277 = vpack.c.bf16 %v263, %v263
    %v280 = vunpack.c.l.b16 %v276
    %v281 = vunpack.c.l.b16 %v277
    %v282 = vrot.slane %v281, 7
    %v283 = vsel %vm166, %v282, %v280
    %v284 = vpack.c.b16 %v283, %v283
    %285 = vrot.lane.b32.xlu0 %v284, 32
    %v286 = vpop.permute.xlu0 %285
    %v288 = vsel %vm44, %v286, 0
    %290 = vmatprep.subr.bf16.mxu0 0
    %291 = vmatpush1.bf16.msra.mxu0 %v40
    %292 = vmatprep.subr.bf16.mxu0 0
    %293 = vmatpush1.bf16.msra.mxu0 %v41
    %294 = vmatprep.subr.bf16.mxu0 0
    %295 = vmatpush1.bf16.msra.mxu0 0
    %296 = vmatprep.subr.bf16.mxu0 0
    %297 = vmatpush1.bf16.msra.mxu0 0
    %298 = vmatprep.subr.bf16.mxu0 0
    %299 = vmatpush1.bf16.msra.mxu0 0
    %300 = vmatprep.subr.bf16.mxu0 0
    %301 = vmatpush1.bf16.msra.mxu0 0
    %302 = vmatprep.subr.bf16.mxu0 0
    %303 = vmatpush1.bf16.msra.mxu0 0
    %304 = vmatprep.subr.bf16.mxu0 0
    %305 = vmatpush1.bf16.msra.mxu0 0
    %306 = vmatprep.subr.bf16.mxu0 0
    %307 = vmatpush1.bf16.msra.mxu0 0
    %308 = vmatprep.subr.bf16.mxu0 0
    %309 = vmatpush1.bf16.msra.mxu0 0
    %310 = vmatprep.subr.bf16.mxu0 0
    %311 = vmatpush1.bf16.msra.mxu0 0
    %312 = vmatprep.subr.bf16.mxu0 0
    %313 = vmatpush1.bf16.msra.mxu0 0
    %314 = vmatprep.subr.bf16.mxu0 0
    %315 = vmatpush1.bf16.msra.mxu0 0
    %316 = vmatprep.subr.bf16.mxu0 0
    %317 = vmatpush1.bf16.msra.mxu0 0
    %318 = vmatprep.subr.bf16.mxu0 0
    %319 = vmatpush1.bf16.msra.mxu0 0
    %320 = vmatprep.subr.bf16.mxu0 0
    %321 = vmatpush1.bf16.msra.mxu0 0
    %322 = vmatprep.mubr.bf16.mxu0 0
    %323 = vmatmul.mubr.bf16.gmra.mrb[0].mxu0 %v288
    %v324 = vpop.f32.mrb[0].mxu0
    %v325 = vadd.f32 0.0, %v324
    %v326 = vpop.f32.mrb[0].mxu0
    %v327 = vpop.f32.mrb[0].mxu0
    %v328 = vpop.f32.mrb[0].mxu0
    %329 = vdwg.mxu0
    %v331 = vrot.slane %v325, 1
    %v334 = vadd.f32 %v274, %v325
    %v335 = vadd.f32 %v275, %v331
    %v336 = vmul.f32 %v334, 0.5
    %v337 = vmul.f32 %v335, 0.5
    %v338 = vtanh.pop %v336
    %v339 = vtanh.pop %v337
    %v340 = vmul.f32 %v338, 0.5
    %v341 = vmul.f32 %v339, 0.5
    %v342 = vadd.f32 %v340, 0.5
    %v343 = vadd.f32 %v341, 0.5
    %v344 = vtanh.pop %v334
    %v345 = vtanh.pop %v335
    %v346 = vmul.f32 %v342, %v250
    %v347 = vmul.f32 %v343, %v251
    %350 = vrot.lane.b32.xlu0 %v344, 64
    %v351 = vpop.permute.xlu0 %350
    %352 = vrot.lane.b32.xlu0 %v345, 64
    %v353 = vpop.permute.xlu0 %352
    %v356 = vmul.f32 %v342, %v351
    %v357 = vmul.f32 %v343, %v353
    %360 = vrot.lane.b32.xlu0 %v356, 32
    %v361 = vpop.permute.xlu0 %360
    %362 = vrot.lane.b32.xlu0 %v357, 32
    %v363 = vpop.permute.xlu0 %362
    %v366 = vadd.f32 %v346, %v361
    %v367 = vadd.f32 %v347, %v363
    %v368 = vtanh.pop %v366
    %v369 = vtanh.pop %v367
    %372 = vrot.lane.b32.xlu0 %v368, 64
    %v373 = vpop.permute.xlu0 %372
    %374 = vrot.lane.b32.xlu0 %v369, 64
    %v375 = vpop.permute.xlu0 %374
    %v378 = vmul.f32 %v342, %v373
    %v379 = vmul.f32 %v343, %v375
    %382 = vrot.lane.b32.xlu0 %v378, 32
    %v383 = vpop.permute.xlu0 %382
    %384 = vrot.lane.b32.xlu0 %v379, 32
    %v385 = vpop.permute.xlu0 %384
    %388 = vst.msk [vmem:[%s4 + $0x2] sm:$0x1] %vm154, %v383
    %389 = vst.msk [vmem:[%s4 + $0xa] sm:$0x1] %vm154, %v385
    %v390 = vld [vmem:[%s0 + $0x3] sm:$0x1]
    %v391 = vld [vmem:[%s0 + $0xb] sm:$0x1]
    %v392 = vpack.c.bf16 %v378, %v378
    %v393 = vpack.c.bf16 %v379, %v379
    %v396 = vunpack.c.l.b16 %v392
    %v397 = vunpack.c.l.b16 %v393
    %v398 = vrot.slane %v397, 7
    %v399 = vsel %vm166, %v398, %v396
    %v400 = vpack.c.b16 %v399, %v399
    %401 = vrot.lane.b32.xlu0 %v400, 32
    %v402 = vpop.permute.xlu0 %401
    %v404 = vsel %vm44, %v402, 0
    %406 = vmatprep.subr.bf16.mxu0 0
    %407 = vmatpush1.bf16.msra.mxu0 %v40
    %408 = vmatprep.subr.bf16.mxu0 0
    %409 = vmatpush1.bf16.msra.mxu0 %v41
    %410 = vmatprep.subr.bf16.mxu0 0
    %411 = vmatpush1.bf16.msra.mxu0 0
    %412 = vmatprep.subr.bf16.mxu0 0
    %413 = vmatpush1.bf16.msra.mxu0 0
    %414 = vmatprep.subr.bf16.mxu0 0
    %415 = vmatpush1.bf16.msra.mxu0 0
    %416 = vmatprep.subr.bf16.mxu0 0
    %417 = vmatpush1.bf16.msra.mxu0 0
    %418 = vmatprep.subr.bf16.mxu0 0
    %419 = vmatpush1.bf16.msra.mxu0 0
    %420 = vmatprep.subr.bf16.mxu0 0
    %421 = vmatpush1.bf16.msra.mxu0 0
    %422 = vmatprep.subr.bf16.mxu0 0
    %423 = vmatpush1.bf16.msra.mxu0 0
    %424 = vmatprep.subr.bf16.mxu0 0
    %425 = vmatpush1.bf16.msra.mxu0 0
    %426 = vmatprep.subr.bf16.mxu0 0
    %427 = vmatpush1.bf16.msra.mxu0 0
    %428 = vmatprep.subr.bf16.mxu0 0
    %429 = vmatpush1.bf16.msra.mxu0 0
    %430 = vmatprep.subr.bf16.mxu0 0
    %431 = vmatpush1.bf16.msra.mxu0 0
    %432 = vmatprep.subr.bf16.mxu0 0
    %433 = vmatpush1.bf16.msra.mxu0 0
    %434 = vmatprep.subr.bf16.mxu0 0
    %435 = vmatpush1.bf16.msra.mxu0 0
    %436 = vmatprep.subr.bf16.mxu0 0
    %437 = vmatpush1.bf16.msra.mxu0 0
    %438 = vmatprep.mubr.bf16.mxu0 0
    %439 = vmatmul.mubr.bf16.gmra.mrb[0].mxu0 %v404
    %v440 = vpop.f32.mrb[0].mxu0
    %v441 = vadd.f32 0.0, %v440
    %v442 = vpop.f32.mrb[0].mxu0
    %v443 = vpop.f32.mrb[0].mxu0
    %v444 = vpop.f32.mrb[0].mxu0
    %445 = vdwg.mxu0
    %v447 = vrot.slane %v441, 1
    %v450 = vadd.f32 %v390, %v441
    %v451 = vadd.f32 %v391, %v447
    %v452 = vmul.f32 %v450, 0.5
    %v453 = vmul.f32 %v451, 0.5
    %v454 = vtanh.pop %v452
    %v455 = vtanh.pop %v453
    %v456 = vmul.f32 %v454, 0.5
    %v457 = vmul.f32 %v455, 0.5
    %v458 = vadd.f32 %v456, 0.5
    %v459 = vadd.f32 %v457, 0.5
    %v460 = vtanh.pop %v450
    %v461 = vtanh.pop %v451
    %v462 = vmul.f32 %v458, %v366
    %v463 = vmul.f32 %v459, %v367
    %466 = vrot.lane.b32.xlu0 %v460, 64
    %v467 = vpop.permute.xlu0 %466
    %468 = vrot.lane.b32.xlu0 %v461, 64
    %v469 = vpop.permute.xlu0 %468
    %v472 = vmul.f32 %v458, %v467
    %v473 = vmul.f32 %v459, %v469
    %476 = vrot.lane.b32.xlu0 %v472, 32
    %v477 = vpop.permute.xlu0 %476
    %478 = vrot.lane.b32.xlu0 %v473, 32
    %v479 = vpop.permute.xlu0 %478
    %v482 = vadd.f32 %v462, %v477
    %v483 = vadd.f32 %v463, %v479
    %v484 = vtanh.pop %v482
    %v485 = vtanh.pop %v483
    %488 = vrot.lane.b32.xlu0 %v484, 64
    %v489 = vpop.permute.xlu0 %488
    %490 = vrot.lane.b32.xlu0 %v485, 64
    %v491 = vpop.permute.xlu0 %490
    %v494 = vmul.f32 %v458, %v489
    %v495 = vmul.f32 %v459, %v491
    %498 = vrot.lane.b32.xlu0 %v494, 32
    %v499 = vpop.permute.xlu0 %498
    %500 = vrot.lane.b32.xlu0 %v495, 32
    %v501 = vpop.permute.xlu0 %500
    %504 = vst.msk [vmem:[%s4 + $0x3] sm:$0x1] %vm154, %v499
    %505 = vst.msk [vmem:[%s4 + $0xb] sm:$0x1] %vm154, %v501
    %v506 = vld [vmem:[%s0 + $0x4] sm:$0x1]
    %v507 = vld [vmem:[%s0 + $0xc] sm:$0x1]
    %v508 = vpack.c.bf16 %v494, %v494
    %v509 = vpack.c.bf16 %v495, %v495
    %v512 = vunpack.c.l.b16 %v508
    %v513 = vunpack.c.l.b16 %v509
    %v514 = vrot.slane %v513, 7
    %v515 = vsel %vm166, %v514, %v512
    %v516 = vpack.c.b16 %v515, %v515
    %517 = vrot.lane.b32.xlu0 %v516, 32
    %v518 = vpop.permute.xlu0 %517
    %v520 = vsel %vm44, %v518, 0
    %522 = vmatprep.subr.bf16.mxu0 0
    %523 = vmatpush1.bf16.msra.mxu0 %v40
    %524 = vmatprep.subr.bf16.mxu0 0
    %525 = vmatpush1.bf16.msra.mxu0 %v41
    %526 = vmatprep.subr.bf16.mxu0 0
    %527 = vmatpush1.bf16.msra.mxu0 0
    %528 = vmatprep.subr.bf16.mxu0 0
    %529 = vmatpush1.bf16.msra.mxu0 0
    %530 = vmatprep.subr.bf16.mxu0 0
    %531 = vmatpush1.bf16.msra.mxu0 0
    %532 = vmatprep.subr.bf16.mxu0 0
    %533 = vmatpush1.bf16.msra.mxu0 0
    %534 = vmatprep.subr.bf16.mxu0 0
    %535 = vmatpush1.bf16.msra.mxu0 0
    %536 = vmatprep.subr.bf16.mxu0 0
    %537 = vmatpush1.bf16.msra.mxu0 0
    %538 = vmatprep.subr.bf16.mxu0 0
    %539 = vmatpush1.bf16.msra.mxu0 0
    %540 = vmatprep.subr.bf16.mxu0 0
    %541 = vmatpush1.bf16.msra.mxu0 0
    %542 = vmatprep.subr.bf16.mxu0 0
    %543 = vmatpush1.bf16.msra.mxu0 0
    %544 = vmatprep.subr.bf16.mxu0 0
    %545 = vmatpush1.bf16.msra.mxu0 0
    %546 = vmatprep.subr.bf16.mxu0 0
    %547 = vmatpush1.bf16.msra.mxu0 0
    %548 = vmatprep.subr.bf16.mxu0 0
    %549 = vmatpush1.bf16.msra.mxu0 0
    %550 = vmatprep.subr.bf16.mxu0 0
    %551 = vmatpush1.bf16.msra.mxu0 0
    %552 = vmatprep.subr.bf16.mxu0 0
    %553 = vmatpush1.bf16.msra.mxu0 0
    %554 = vmatprep.mubr.bf16.mxu0 0
    %555 = vmatmul.mubr.bf16.gmra.mrb[0].mxu0 %v520
    %v556 = vpop.f32.mrb[0].mxu0
    %v557 = vadd.f32 0.0, %v556
    %v558 = vpop.f32.mrb[0].mxu0
    %v559 = vpop.f32.mrb[0].mxu0
    %v560 = vpop.f32.mrb[0].mxu0
    %561 = vdwg.mxu0
    %v563 = vrot.slane %v557, 1
    %v566 = vadd.f32 %v506, %v557
    %v567 = vadd.f32 %v507, %v563
    %v568 = vmul.f32 %v566, 0.5
    %v569 = vmul.f32 %v567, 0.5
    %v570 = vtanh.pop %v568
    %v571 = vtanh.pop %v569
    %v572 = vmul.f32 %v570, 0.5
    %v573 = vmul.f32 %v571, 0.5
    %v574 = vadd.f32 %v572, 0.5
    %v575 = vadd.f32 %v573, 0.5
    %v576 = vtanh.pop %v566
    %v577 = vtanh.pop %v567
    %v578 = vmul.f32 %v574, %v482
    %v579 = vmul.f32 %v575, %v483
    %582 = vrot.lane.b32.xlu0 %v576, 64
    %v583 = vpop.permute.xlu0 %582
    %584 = vrot.lane.b32.xlu0 %v577, 64
    %v585 = vpop.permute.xlu0 %584
    %v588 = vmul.f32 %v574, %v583
    %v589 = vmul.f32 %v575, %v585
    %592 = vrot.lane.b32.xlu0 %v588, 32
    %v593 = vpop.permute.xlu0 %592
    %594 = vrot.lane.b32.xlu0 %v589, 32
    %v595 = vpop.permute.xlu0 %594
    %v598 = vadd.f32 %v578, %v593
    %v599 = vadd.f32 %v579, %v595
    %v600 = vtanh.pop %v598
    %v601 = vtanh.pop %v599
    %604 = vrot.lane.b32.xlu0 %v600, 64
    %v605 = vpop.permute.xlu0 %604
    %606 = vrot.lane.b32.xlu0 %v601, 64
    %v607 = vpop.permute.xlu0 %606
    %v610 = vmul.f32 %v574, %v605
    %v611 = vmul.f32 %v575, %v607
    %614 = vrot.lane.b32.xlu0 %v610, 32
    %v615 = vpop.permute.xlu0 %614
    %616 = vrot.lane.b32.xlu0 %v611, 32
    %v617 = vpop.permute.xlu0 %616
    %620 = vst.msk [vmem:[%s4 + $0x4] sm:$0x1] %vm154, %v615
    %621 = vst.msk [vmem:[%s4 + $0xc] sm:$0x1] %vm154, %v617
    %v622 = vld [vmem:[%s0 + $0x5] sm:$0x1]
    %v623 = vld [vmem:[%s0 + $0xd] sm:$0x1]
    %v624 = vpack.c.bf16 %v610, %v610
    %v625 = vpack.c.bf16 %v611, %v611
    %v628 = vunpack.c.l.b16 %v624
    %v629 = vunpack.c.l.b16 %v625
    %v630 = vrot.slane %v629, 7
    %v631 = vsel %vm166, %v630, %v628
    %v632 = vpack.c.b16 %v631, %v631
    %633 = vrot.lane.b32.xlu0 %v632, 32
    %v634 = vpop.permute.xlu0 %633
    %v636 = vsel %vm44, %v634, 0
    %638 = vmatprep.subr.bf16.mxu0 0
    %639 = vmatpush1.bf16.msra.mxu0 %v40
    %640 = vmatprep.subr.bf16.mxu0 0
    %641 = vmatpush1.bf16.msra.mxu0 %v41
    %642 = vmatprep.subr.bf16.mxu0 0
    %643 = vmatpush1.bf16.msra.mxu0 0
    %644 = vmatprep.subr.bf16.mxu0 0
    %645 = vmatpush1.bf16.msra.mxu0 0
    %646 = vmatprep.subr.bf16.mxu0 0
    %647 = vmatpush1.bf16.msra.mxu0 0
    %648 = vmatprep.subr.bf16.mxu0 0
    %649 = vmatpush1.bf16.msra.mxu0 0
    %650 = vmatprep.subr.bf16.mxu0 0
    %651 = vmatpush1.bf16.msra.mxu0 0
    %652 = vmatprep.subr.bf16.mxu0 0
    %653 = vmatpush1.bf16.msra.mxu0 0
    %654 = vmatprep.subr.bf16.mxu0 0
    %655 = vmatpush1.bf16.msra.mxu0 0
    %656 = vmatprep.subr.bf16.mxu0 0
    %657 = vmatpush1.bf16.msra.mxu0 0
    %658 = vmatprep.subr.bf16.mxu0 0
    %659 = vmatpush1.bf16.msra.mxu0 0
    %660 = vmatprep.subr.bf16.mxu0 0
    %661 = vmatpush1.bf16.msra.mxu0 0
    %662 = vmatprep.subr.bf16.mxu0 0
    %663 = vmatpush1.bf16.msra.mxu0 0
    %664 = vmatprep.subr.bf16.mxu0 0
    %665 = vmatpush1.bf16.msra.mxu0 0
    %666 = vmatprep.subr.bf16.mxu0 0
    %667 = vmatpush1.bf16.msra.mxu0 0
    %668 = vmatprep.subr.bf16.mxu0 0
    %669 = vmatpush1.bf16.msra.mxu0 0
    %670 = vmatprep.mubr.bf16.mxu0 0
    %671 = vmatmul.mubr.bf16.gmra.mrb[0].mxu0 %v636
    %v672 = vpop.f32.mrb[0].mxu0
    %v673 = vadd.f32 0.0, %v672
    %v674 = vpop.f32.mrb[0].mxu0
    %v675 = vpop.f32.mrb[0].mxu0
    %v676 = vpop.f32.mrb[0].mxu0
    %677 = vdwg.mxu0
    %v679 = vrot.slane %v673, 1
    %v682 = vadd.f32 %v622, %v673
    %v683 = vadd.f32 %v623, %v679
    %v684 = vmul.f32 %v682, 0.5
    %v685 = vmul.f32 %v683, 0.5
    %v686 = vtanh.pop %v684
    %v687 = vtanh.pop %v685
    %v688 = vmul.f32 %v686, 0.5
    %v689 = vmul.f32 %v687, 0.5
    %v690 = vadd.f32 %v688, 0.5
    %v691 = vadd.f32 %v689, 0.5
    %v692 = vtanh.pop %v682
    %v693 = vtanh.pop %v683
    %v694 = vmul.f32 %v690, %v598
    %v695 = vmul.f32 %v691, %v599
    %698 = vrot.lane.b32.xlu0 %v692, 64
    %v699 = vpop.permute.xlu0 %698
    %700 = vrot.lane.b32.xlu0 %v693, 64
    %v701 = vpop.permute.xlu0 %700
    %v704 = vmul.f32 %v690, %v699
    %v705 = vmul.f32 %v691, %v701
    %708 = vrot.lane.b32.xlu0 %v704, 32
    %v709 = vpop.permute.xlu0 %708
    %710 = vrot.lane.b32.xlu0 %v705, 32
    %v711 = vpop.permute.xlu0 %710
    %v714 = vadd.f32 %v694, %v709
    %v715 = vadd.f32 %v695, %v711
    %v716 = vtanh.pop %v714
    %v717 = vtanh.pop %v715
    %720 = vrot.lane.b32.xlu0 %v716, 64
    %v721 = vpop.permute.xlu0 %720
    %722 = vrot.lane.b32.xlu0 %v717, 64
    %v723 = vpop.permute.xlu0 %722
    %v726 = vmul.f32 %v690, %v721
    %v727 = vmul.f32 %v691, %v723
    %730 = vrot.lane.b32.xlu0 %v726, 32
    %v731 = vpop.permute.xlu0 %730
    %732 = vrot.lane.b32.xlu0 %v727, 32
    %v733 = vpop.permute.xlu0 %732
    %736 = vst.msk [vmem:[%s4 + $0x5] sm:$0x1] %vm154, %v731
    %737 = vst.msk [vmem:[%s4 + $0xd] sm:$0x1] %vm154, %v733
    %v738 = vld [vmem:[%s0 + $0x6] sm:$0x1]
    %v739 = vld [vmem:[%s0 + $0xe] sm:$0x1]
    %v740 = vpack.c.bf16 %v726, %v726
    %v741 = vpack.c.bf16 %v727, %v727
    %v744 = vunpack.c.l.b16 %v740
    %v745 = vunpack.c.l.b16 %v741
    %v746 = vrot.slane %v745, 7
    %v747 = vsel %vm166, %v746, %v744
    %v748 = vpack.c.b16 %v747, %v747
    %749 = vrot.lane.b32.xlu0 %v748, 32
    %v750 = vpop.permute.xlu0 %749
    %v752 = vsel %vm44, %v750, 0
    %754 = vmatprep.subr.bf16.mxu0 0
    %755 = vmatpush1.bf16.msra.mxu0 %v40
    %756 = vmatprep.subr.bf16.mxu0 0
    %757 = vmatpush1.bf16.msra.mxu0 %v41
    %758 = vmatprep.subr.bf16.mxu0 0
    %759 = vmatpush1.bf16.msra.mxu0 0
    %760 = vmatprep.subr.bf16.mxu0 0
    %761 = vmatpush1.bf16.msra.mxu0 0
    %762 = vmatprep.subr.bf16.mxu0 0
    %763 = vmatpush1.bf16.msra.mxu0 0
    %764 = vmatprep.subr.bf16.mxu0 0
    %765 = vmatpush1.bf16.msra.mxu0 0
    %766 = vmatprep.subr.bf16.mxu0 0
    %767 = vmatpush1.bf16.msra.mxu0 0
    %768 = vmatprep.subr.bf16.mxu0 0
    %769 = vmatpush1.bf16.msra.mxu0 0
    %770 = vmatprep.subr.bf16.mxu0 0
    %771 = vmatpush1.bf16.msra.mxu0 0
    %772 = vmatprep.subr.bf16.mxu0 0
    %773 = vmatpush1.bf16.msra.mxu0 0
    %774 = vmatprep.subr.bf16.mxu0 0
    %775 = vmatpush1.bf16.msra.mxu0 0
    %776 = vmatprep.subr.bf16.mxu0 0
    %777 = vmatpush1.bf16.msra.mxu0 0
    %778 = vmatprep.subr.bf16.mxu0 0
    %779 = vmatpush1.bf16.msra.mxu0 0
    %780 = vmatprep.subr.bf16.mxu0 0
    %781 = vmatpush1.bf16.msra.mxu0 0
    %782 = vmatprep.subr.bf16.mxu0 0
    %783 = vmatpush1.bf16.msra.mxu0 0
    %784 = vmatprep.subr.bf16.mxu0 0
    %785 = vmatpush1.bf16.msra.mxu0 0
    %786 = vmatprep.mubr.bf16.mxu0 0
    %787 = vmatmul.mubr.bf16.gmra.mrb[0].mxu0 %v752
    %v788 = vpop.f32.mrb[0].mxu0
    %v789 = vadd.f32 0.0, %v788
    %v790 = vpop.f32.mrb[0].mxu0
    %v791 = vpop.f32.mrb[0].mxu0
    %v792 = vpop.f32.mrb[0].mxu0
    %793 = vdwg.mxu0
    %v795 = vrot.slane %v789, 1
    %v798 = vadd.f32 %v738, %v789
    %v799 = vadd.f32 %v739, %v795
    %v800 = vmul.f32 %v798, 0.5
    %v801 = vmul.f32 %v799, 0.5
    %v802 = vtanh.pop %v800
    %v803 = vtanh.pop %v801
    %v804 = vmul.f32 %v802, 0.5
    %v805 = vmul.f32 %v803, 0.5
    %v806 = vadd.f32 %v804, 0.5
    %v807 = vadd.f32 %v805, 0.5
    %v808 = vtanh.pop %v798
    %v809 = vtanh.pop %v799
    %v810 = vmul.f32 %v806, %v714
    %v811 = vmul.f32 %v807, %v715
    %814 = vrot.lane.b32.xlu0 %v808, 64
    %v815 = vpop.permute.xlu0 %814
    %816 = vrot.lane.b32.xlu0 %v809, 64
    %v817 = vpop.permute.xlu0 %816
    %v820 = vmul.f32 %v806, %v815
    %v821 = vmul.f32 %v807, %v817
    %824 = vrot.lane.b32.xlu0 %v820, 32
    %v825 = vpop.permute.xlu0 %824
    %826 = vrot.lane.b32.xlu0 %v821, 32
    %v827 = vpop.permute.xlu0 %826
    %v830 = vadd.f32 %v810, %v825
    %v831 = vadd.f32 %v811, %v827
    %v832 = vtanh.pop %v830
    %v833 = vtanh.pop %v831
    %836 = vrot.lane.b32.xlu0 %v832, 64
    %v837 = vpop.permute.xlu0 %836
    %838 = vrot.lane.b32.xlu0 %v833, 64
    %v839 = vpop.permute.xlu0 %838
    %v842 = vmul.f32 %v806, %v837
    %v843 = vmul.f32 %v807, %v839
    %846 = vrot.lane.b32.xlu0 %v842, 32
    %v847 = vpop.permute.xlu0 %846
    %848 = vrot.lane.b32.xlu0 %v843, 32
    %v849 = vpop.permute.xlu0 %848
    %852 = vst.msk [vmem:[%s4 + $0x6] sm:$0x1] %vm154, %v847
    %853 = vst.msk [vmem:[%s4 + $0xe] sm:$0x1] %vm154, %v849
    %v854 = vrot.slane %v843, 7
    %v855 = vsel %vm166, %v854, %v842
    %856 = vrot.lane.b32.xlu0 %v855, 32
    %v857 = vpop.permute.xlu0 %856
    %vm859 = vcmask 254976
    %860 = vst.msk [vmem:[#allocation2] sm:$0x3] %vm859, %v857
    %v863 = vrot.slane %v831, 7
    %v864 = vsel %vm166, %v863, %v830
    %865 = vrot.lane.b32.xlu0 %v864, 96
    %v866 = vpop.permute.xlu0 %865
    %868 = vst.msk [vmem:[#allocation4] sm:$0x3] %vm859, %v866
    // Predicated region
    $region18: #{seq2seq_forward.8} parent=1 // pred_check
      _
    $region19: #{seq2seq_forward.8} parent=1 // pred_check_branch
      %870 = sbr.rel (0) target = $region21
    $region20: #{seq2seq_forward.8} parent=1 // pred_region
      _
    $region21: #{seq2seq_forward.8} parent=1 // pred_fallthru
      _
    // Predicated region
    $region22: #{seq2seq_forward.8} parent=1 // pred_check
      _
    $region23: #{seq2seq_forward.8} parent=1 // pred_check_branch
      %872 = sbr.rel (0) target = $region25
    $region24: #{seq2seq_forward.8} parent=1 // pred_region
      %s874 = ssub.s32 32, 32
      %875 = vsyncadd [#allocation3], %s874
      %s877 = sshll.u32 [#allocation2], 4
      %s878 = int_to_ptr.vmem [resolvable:$true] %s877
      %880 = dma.vmem_to_hbm [thread:$0]  %s878, 32, %s5, [#allocation3]
    $region25: #{seq2seq_forward.8} parent=1 // pred_fallthru
      _
    // Predicated region
    $region26: #{seq2seq_forward.8} parent=1 // pred_check
      _
    $region27: #{seq2seq_forward.8} parent=1 // pred_check_branch
      %882 = sbr.rel (0) target = $region29
    $region28: #{seq2seq_forward.8} parent=1 // pred_region
      %s884 = ssub.s32 32, 32
      %885 = vsyncadd [#allocation5], %s884
      %s887 = sshll.u32 [#allocation4], 4
      %s888 = int_to_ptr.vmem [resolvable:$true] %s887
      %890 = dma.vmem_to_hbm [thread:$0]  %s888, 32, %s6, [#allocation5]
    $region29: #{seq2seq_forward.8} parent=1 // pred_fallthru
      _
    // Predicated region
    $region30: #{seq2seq_forward.8} parent=1 // pred_check
      _
    $region31: #{seq2seq_forward.8} parent=1 // pred_check_branch
      %892 = sbr.rel (0) target = $region33
    $region32: #{seq2seq_forward.8} parent=1 // pred_region
      _
    $region33: #{seq2seq_forward.8} parent=1 // pred_fallthru
      _
    // Predicated region
    $region34: #{seq2seq_forward.8} parent=1 // pred_check
      _
    $region35: #{seq2seq_forward.8} parent=1 // pred_check_branch
      %894 = sbr.rel (0) target = $region37
    $region36: #{seq2seq_forward.8} parent=1 // pred_region
      %895 = dma.done [#allocation3], 32
    $region37: #{seq2seq_forward.8} parent=1 // pred_fallthru
      _
    // Predicated region
    $region38: #{seq2seq_forward.8} parent=1 // pred_check
      _
    $region39: #{seq2seq_forward.8} parent=1 // pred_check_branch
      %897 = sbr.rel (0) target = $region41
    $region40: #{seq2seq_forward.8} parent=1 // pred_region
      %898 = dma.done [#allocation5], 32
    $region41: #{seq2seq_forward.8} parent=1 // pred_fallthru
      _
    %899 = vsyncpa [#allocation3], 1
    %900 = vsyncpa [#allocation5], 1

// kernel: seq2seq_forward.9
$region0: #{seq2seq_forward.9}
  #allocation0 [shape = 'u32[]', space=smem, size = 0x4, offset = 0x4, fixed_abs, tag = 'smem constant byte address 0x4 - core index']
  #allocation1 [shape = 'u32[144,128]{1,0:T(1,128)}', space=vmem, size = 0x12000, scoped, tag = 'internal scratch']
  %s0 = inlined_call_operand.vmem [shape: bf16[14,32], index: 0, kind: input, shape index: {}]
  %s1 = inlined_call_operand.vmem [shape: bf16[48,32], index: 1, kind: input, shape index: {}]
  %s2 = inlined_call_operand.vmem [shape: f32[1,48], index: 2, kind: input, shape index: {}]
  %s3 = inlined_call_operand.vmem [shape: f32[14,48], index: 3, kind: output, shape index: {}]
  %s4 = sld [smem:[#allocation0]]
  $region22: #{seq2seq_forward.9} parent=0
    _
  %s6 = ssub.s32 1, %s4
  %s7 = scalar_select 0, %s6, %s4
  // Predicated region
  $region2: #{seq2seq_forward.9} parent=0 // pred_check
    _
  $region3: #{seq2seq_forward.9} parent=0 // pred_check_branch
    %9 = sbr.rel (0) target = $region5
  $region4: #{seq2seq_forward.9} parent=0 // pred_region
    _
  $region5: #{seq2seq_forward.9} parent=0 // pred_fallthru
    _
  // Predicated region
  $region6: #{seq2seq_forward.9} parent=0 // pred_check
    _
  $region7: #{seq2seq_forward.9} parent=0 // pred_check_branch
    %11 = sbr.rel (0) target = $region9
  $region8: #{seq2seq_forward.9} parent=0 // pred_region
    _
  $region9: #{seq2seq_forward.9} parent=0 // pred_fallthru
    _
  // Predicated region
  $region10: #{seq2seq_forward.9} parent=0 // pred_check
    _
  $region11: #{seq2seq_forward.9} parent=0 // pred_check_branch
    %13 = sbr.rel (0) target = $region13
  $region12: #{seq2seq_forward.9} parent=0 // pred_region
    _
  $region13: #{seq2seq_forward.9} parent=0 // pred_fallthru
    _
  %v15 = vld [vmem:[%s0] sm:$0xf]
  %v16 = vld [vmem:[%s0 + $0x4] sm:$0x7]
  %v17 = vld [vmem:[%s1] sm:$0xf]
  %v18 = vld [vmem:[%s1 + $0x4] sm:$0xf]
  %v19 = vld [vmem:[%s1 + $0x8] sm:$0xf]
  %v20 = vld [vmem:[%s1 + $0xc] sm:$0xf]
  %v21 = vld [vmem:[%s1 + $0x10] sm:$0xf]
  %v22 = vld [vmem:[%s1 + $0x14] sm:$0xf]
  %v23 = vld [vmem:[%s2] sm:$0x1]
  %v25 = vlaneseq
  %v26 = vshrl.u32 %v25, 7
  %v27 = vsub.s32 0, %v26
  %v28 = vrot.slane %v23, %v27
  %v32 = vunpack.c.l.b16 %v15
  %v33 = vunpack.c.l.b16 %v16
  %v34 = vpack.c.b16 %v33, %v32
  %v41 = vunpack.c.l.b16 %v17
  %v42 = vunpack.c.l.b16 %v18
  %v43 = vunpack.c.l.b16 %v19
  %v44 = vunpack.c.l.b16 %v20
  %v45 = vunpack.c.l.b16 %v21
  %v46 = vunpack.c.l.b16 %v22
  %v47 = vpack.c.b16 %v42, %v41
  %v48 = vpack.c.b16 %v44, %v43
  %v49 = vpack.c.b16 %v46, %v45
  %vm50 = vcmask 261120
  %v52 = vsel %vm50, %v34, 0
  %v55 = vsel %vm50, %v47, 0
  %v58 = vsel %vm50, %v48, 0
  %v61 = vsel %vm50, %v49, 0
  %63 = vmatprep.subr.bf16.mxu0 0
  %64 = vmatpush1.bf16.xpose.msra.mxu0 %v55
  %65 = vmatprep.subr.bf16.mxu0 0
  %66 = vmatpush1.bf16.xpose.msra.mxu0 %v58
  %67 = vmatprep.subr.bf16.mxu0 0
  %68 = vmatpush1.bf16.xpose.msra.mxu0 %v61
  %69 = vmatprep.subr.bf16.mxu0 0
  %70 = vmatpush1.bf16.xpose.msra.mxu0 0
  %71 = vmatprep.subr.bf16.mxu0 0
  %72 = vmatpush1.bf16.xpose.msra.mxu0 0
  %73 = vmatprep.subr.bf16.mxu0 0
  %74 = vmatpush1.bf16.xpose.msra.mxu0 0
  %75 = vmatprep.subr.bf16.mxu0 0
  %76 = vmatpush1.bf16.xpose.msra.mxu0 0
  %77 = vmatprep.subr.bf16.mxu0 0
  %78 = vmatpush1.bf16.xpose.msra.mxu0 0
  %79 = vmatprep.subr.bf16.mxu0 0
  %80 = vmatpush1.bf16.xpose.msra.mxu0 0
  %81 = vmatprep.subr.bf16.mxu0 0
  %82 = vmatpush1.bf16.xpose.msra.mxu0 0
  %83 = vmatprep.subr.bf16.mxu0 0
  %84 = vmatpush1.bf16.xpose.msra.mxu0 0
  %85 = vmatprep.subr.bf16.mxu0 0
  %86 = vmatpush1.bf16.xpose.msra.mxu0 0
  %87 = vmatprep.subr.bf16.mxu0 0
  %88 = vmatpush1.bf16.xpose.msra.mxu0 0
  %89 = vmatprep.subr.bf16.mxu0 0
  %90 = vmatpush1.bf16.xpose.msra.mxu0 0
  %91 = vmatprep.subr.bf16.mxu0 0
  %92 = vmatpush1.bf16.xpose.msra.mxu0 0
  %93 = vmatprep.subr.bf16.mxu0 0
  %94 = vmatpush1.bf16.xpose.msra.mxu0 0
  %95 = vmatprep.mubr.bf16.mxu0 0
  %96 = vmatmul.mubr.bf16.gmra.mrb[0].mxu0 %v52
  %v97 = vpop.f32.mrb[0].mxu0
  %v98 = vadd.f32 %v28, %v97
  %v99 = vpop.f32.mrb[0].mxu0
  %v100 = vpop.f32.mrb[0].mxu0
  %v101 = vadd.f32 %v28, %v100
  %v102 = vpop.f32.mrb[0].mxu0
  %103 = vdwg.mxu0
  %vm104 = vcmask 392192
  %105 = vst.msk [vmem:[%s3] sm:$0xff] %vm104, %v98
  %vm106 = vcmask 390144
  %107 = vst.msk [vmem:[%s3 + $0x8] sm:$0x3f] %vm106, %v101
  // Predicated region
  $region14: #{seq2seq_forward.9} parent=0 // pred_check
    _
  $region15: #{seq2seq_forward.9} parent=0 // pred_check_branch
    %109 = sbr.rel (0) target = $region17
  $region16: #{seq2seq_forward.9} parent=0 // pred_region
    _
  $region17: #{seq2seq_forward.9} parent=0 // pred_fallthru
    _
  // Predicated region
  $region18: #{seq2seq_forward.9} parent=0 // pred_check
    _
  $region19: #{seq2seq_forward.9} parent=0 // pred_check_branch
    %111 = sbr.rel (0) target = $region21
  $region20: #{seq2seq_forward.9} parent=0 // pred_region
    _
  $region21: #{seq2seq_forward.9} parent=0 // pred_fallthru
    _

// kernel: seq2seq_forward.6
$region0: #{seq2seq_forward.6}
  #allocation0 [shape = 'u32[]', space=smem, size = 0x4, offset = 0x4, fixed_abs, tag = 'smem constant byte address 0x4 - core index']
  #allocation1 [shape = 'u32[144,128]{1,0:T(1,128)}', space=vmem, size = 0x12000, scoped, tag = 'internal scratch']
  %s0 = inlined_call_operand.vmem [shape: f32[2,8,128], index: 0, kind: input, shape index: {}]
  %s1 = inlined_call_operand.vmem [shape: bf16[16,64], index: 1, kind: input, shape index: {}]
  %s2 = inlined_call_operand.vmem [shape: bf16[16,64], index: 2, kind: input, shape index: {}]
  %s3 = inlined_call_operand.vmem [shape: s32[2,1], index: 3, kind: input, shape index: {}]
  %s4 = inlined_call_operand.vmem [shape: f32[2,32], index: 4, kind: output, shape index: {0}]
  %s5 = inlined_call_operand.vmem [shape: f32[2,32], index: 5, kind: output, shape index: {1}]
  %6 = xla_tuple %s4, %s5
  %s7 = sld [smem:[#allocation0]]
  $region34: #{seq2seq_forward.6} parent=0
    _
  %s9 = ssub.s32 1, %s7
  %s10 = scalar_select 0, %s9, %s7
  // Predicated region
  $region2: #{seq2seq_forward.6} parent=0 // pred_check
    _
  $region3: #{seq2seq_forward.6} parent=0 // pred_check_branch
    %12 = sbr.rel (0) target = $region5
  $region4: #{seq2seq_forward.6} parent=0 // pred_region
    _
  $region5: #{seq2seq_forward.6} parent=0 // pred_fallthru
    _
  // Predicated region
  $region6: #{seq2seq_forward.6} parent=0 // pred_check
    _
  $region7: #{seq2seq_forward.6} parent=0 // pred_check_branch
    %14 = sbr.rel (0) target = $region9
  $region8: #{seq2seq_forward.6} parent=0 // pred_region
    _
  $region9: #{seq2seq_forward.6} parent=0 // pred_fallthru
    _
  // Predicated region
  $region10: #{seq2seq_forward.6} parent=0 // pred_check
    _
  $region11: #{seq2seq_forward.6} parent=0 // pred_check_branch
    %16 = sbr.rel (0) target = $region13
  $region12: #{seq2seq_forward.6} parent=0 // pred_region
    _
  $region13: #{seq2seq_forward.6} parent=0 // pred_fallthru
    _
  // Predicated region
  $region14: #{seq2seq_forward.6} parent=0 // pred_check
    _
  $region15: #{seq2seq_forward.6} parent=0 // pred_check_branch
    %18 = sbr.rel (0) target = $region17
  $region16: #{seq2seq_forward.6} parent=0 // pred_region
    _
  $region17: #{seq2seq_forward.6} parent=0 // pred_fallthru
    _
  %v20 = vld [vmem:[%s1] sm:$0xf]
  %v21 = vld [vmem:[%s1 + $0x4] sm:$0xf]
  %v22 = vld [vmem:[%s2] sm:$0xf]
  %v23 = vld [vmem:[%s2 + $0x4] sm:$0xf]
  %v24 = vld [vmem:[%s3] sm:$0x3]
  %25 = vset.pattern.permute.xlu0 0
  %26 = vperm.xlu0 %25, %v24
  %v27 = vpop.permute.xlu0 %26
  %v28 = vld [vmem:[%s0] sm:$0x1]
  %v29 = vld [vmem:[%s0 + $0x8] sm:$0x1]
  %v32 = vunpack.c.l.b16 %v20
  %v33 = vunpack.c.l.b16 %v21
  %v34 = vpack.c.b16 %v33, %v32
  %vm36 = vcmask 130048
  %v38 = vsel %vm36, 0, 0
  %40 = vmatprep.subr.bf16.mxu0 0
  %41 = vmatpush1.bf16.msra.mxu0 %v34
  %42 = vmatprep.subr.bf16.mxu0 0
  %43 = vmatpush1.bf16.msra.mxu0 0
  %44 = vmatprep.subr.bf16.mxu0 0
  %45 = vmatpush1.bf16.msra.mxu0 0
  %46 = vmatprep.subr.bf16.mxu0 0
  %47 = vmatpush1.bf16.msra.mxu0 0
  %48 = vmatprep.subr.bf16.mxu0 0
  %49 = vmatpush1.bf16.msra.mxu0 0
  %50 = vmatprep.subr.bf16.mxu0 0
  %51 = vmatpush1.bf16.msra.mxu0 0
  %52 = vmatprep.subr.bf16.mxu0 0
  %53 = vmatpush1.bf16.msra.mxu0 0
  %54 = vmatprep.subr.bf16.mxu0 0
  %55 = vmatpush1.bf16.msra.mxu0 0
  %56 = vmatprep.subr.bf16.mxu0 0
  %57 = vmatpush1.bf16.msra.mxu0 0
  %58 = vmatprep.subr.bf16.mxu0 0
  %59 = vmatpush1.bf16.msra.mxu0 0
  %60 = vmatprep.subr.bf16.mxu0 0
  %61 = vmatpush1.bf16.msra.mxu0 0
  %62 = vmatprep.subr.bf16.mxu0 0
  %63 = vmatpush1.bf16.msra.mxu0 0
  %64 = vmatprep.subr.bf16.mxu0 0
  %65 = vmatpush1.bf16.msra.mxu0 0
  %66 = vmatprep.subr.bf16.mxu0 0
  %67 = vmatpush1.bf16.msra.mxu0 0
  %68 = vmatprep.subr.bf16.mxu0 0
  %69 = vmatpush1.bf16.msra.mxu0 0
  %70 = vmatprep.subr.bf16.mxu0 0
  %71 = vmatpush1.bf16.msra.mxu0 0
  %72 = vmatprep.mubr.bf16.mxu0 0
  %73 = vmatmul.mubr.bf16.gmra.mrb[0].mxu0 %v38
  %v74 = vpop.f32.mrb[0].mxu0
  %v75 = vadd.f32 0.0, %v74
  %v76 = vpop.f32.mrb[0].mxu0
  %v77 = vpop.f32.mrb[0].mxu0
  %v78 = vpop.f32.mrb[0].mxu0
  %79 = vdwg.mxu0
  %v81 = vrot.slane %v75, 1
  %v84 = vadd.f32 %v28, %v75
  %v85 = vadd.f32 %v29, %v81
  %v86 = vmul.f32 %v84, 0.5
  %v87 = vmul.f32 %v85, 0.5
  %v88 = vtanh.pop %v86
  %v89 = vtanh.pop %v87
  %v90 = vmul.f32 %v88, 0.5
  %v91 = vmul.f32 %v89, 0.5
  %v92 = vadd.f32 %v90, 0.5
  %v93 = vadd.f32 %v91, 0.5
  %v94 = vtanh.pop %v84
  %v95 = vtanh.pop %v85
  %v96 = vmul.f32 %v92, 0.0
  %v97 = vmul.f32 %v93, 0.0
  %100 = vrot.lane.b32.xlu0 %v94, 96
  %v101 = vpop.permute.xlu0 %100
  %102 = vrot.lane.b32.xlu0 %v95, 96
  %v103 = vpop.permute.xlu0 %102
  %v106 = vmul.f32 %v92, %v101
  %v107 = vmul.f32 %v93, %v103
  %110 = vrot.lane.b32.xlu0 %v106, 16
  %v111 = vpop.permute.xlu0 %110
  %112 = vrot.lane.b32.xlu0 %v107, 16
  %v113 = vpop.permute.xlu0 %112
  %v116 = vadd.f32 %v96, %v111
  %v117 = vadd.f32 %v97, %v113
  %v118 = vtanh.pop %v116
  %v119 = vtanh.pop %v117
  %122 = vrot.lane.b32.xlu0 %v118, 32
  %v123 = vpop.permute.xlu0 %122
  %124 = vrot.lane.b32.xlu0 %v119, 32
  %v125 = vpop.permute.xlu0 %124
  %v128 = vmul.f32 %v92, %v123
  %v129 = vmul.f32 %v93, %v125
  %vm130 = vcmp.gt.s32.totalorder %v27, 0
  %v133 = vrot.slane %v129, 7
  %vm134 = vcmask 1041409
  %v135 = vsel %vm134, %v133, %v128
  %136 = vrot.lane.b32.xlu0 %v135, 80
  %v137 = vpop.permute.xlu0 %136
  %v139 = vsel %vm130, %v137, 0.0
  %v142 = vrot.slane %v117, 7
  %v143 = vsel %vm134, %v142, %v116
  %144 = vrot.lane.b32.xlu0 %v143, 112
  %v145 = vpop.permute.xlu0 %144
  %v147 = vsel %vm130, %v145, 0.0
  %v148 = vld [vmem:[%s0 + $0x7] sm:$0x1]
  %v149 = vld [vmem:[%s0 + $0xf] sm:$0x1]
  %v152 = vunpack.c.l.b16 %v22
  %v153 = vunpack.c.l.b16 %v23
  %v154 = vpack.c.b16 %v153, %v152
  %156 = vmatprep.subr.bf16.mxu0 0
  %157 = vmatpush1.bf16.msra.mxu0 %v154
  %158 = vmatprep.subr.bf16.mxu0 0
  %159 = vmatpush1.bf16.msra.mxu0 0
  %160 = vmatprep.subr.bf16.mxu0 0
  %161 = vmatpush1.bf16.msra.mxu0 0
  %162 = vmatprep.subr.bf16.mxu0 0
  %163 = vmatpush1.bf16.msra.mxu0 0
  %164 = vmatprep.subr.bf16.mxu0 0
  %165 = vmatpush1.bf16.msra.mxu0 0
  %166 = vmatprep.subr.bf16.mxu0 0
  %167 = vmatpush1.bf16.msra.mxu0 0
  %168 = vmatprep.subr.bf16.mxu0 0
  %169 = vmatpush1.bf16.msra.mxu0 0
  %170 = vmatprep.subr.bf16.mxu0 0
  %171 = vmatpush1.bf16.msra.mxu0 0
  %172 = vmatprep.subr.bf16.mxu0 0
  %173 = vmatpush1.bf16.msra.mxu0 0
  %174 = vmatprep.subr.bf16.mxu0 0
  %175 = vmatpush1.bf16.msra.mxu0 0
  %176 = vmatprep.subr.bf16.mxu0 0
  %177 = vmatpush1.bf16.msra.mxu0 0
  %178 = vmatprep.subr.bf16.mxu0 0
  %179 = vmatpush1.bf16.msra.mxu0 0
  %180 = vmatprep.subr.bf16.mxu0 0
  %181 = vmatpush1.bf16.msra.mxu0 0
  %182 = vmatprep.subr.bf16.mxu0 0
  %183 = vmatpush1.bf16.msra.mxu0 0
  %184 = vmatprep.subr.bf16.mxu0 0
  %185 = vmatpush1.bf16.msra.mxu0 0
  %186 = vmatprep.subr.bf16.mxu0 0
  %187 = vmatpush1.bf16.msra.mxu0 0
  %188 = vmatprep.mubr.bf16.mxu0 0
  %189 = vmatmul.mubr.bf16.gmra.mrb[0].mxu0 %v38
  %v190 = vpop.f32.mrb[0].mxu0
  %v191 = vadd.f32 0.0, %v190
  %v192 = vpop.f32.mrb[0].mxu0
  %v193 = vpop.f32.mrb[0].mxu0
  %v194 = vpop.f32.mrb[0].mxu0
  %195 = vdwg.mxu0
  %v197 = vrot.slane %v191, 1
  %198 = vrot.lane.b32.xlu0 %v191, 64
  %v199 = vpop.permute.xlu0 %198
  %200 = vrot.lane.b32.xlu0 %v197, 64
  %v201 = vpop.permute.xlu0 %200
  %v204 = vadd.f32 %v148, %v199
  %v205 = vadd.f32 %v149, %v201
  %v206 = vmul.f32 %v204, 0.5
  %v207 = vmul.f32 %v205, 0.5
  %v208 = vtanh.pop %v206
  %v209 = vtanh.pop %v207
  %v210 = vmul.f32 %v208, 0.5
  %v211 = vmul.f32 %v209, 0.5
  %v212 = vadd.f32 %v210, 0.5
  %v213 = vadd.f32 %v211, 0.5
  %v214 = vtanh.pop %v204
  %v215 = vtanh.pop %v205
  %v216 = vmul.f32 %v212, 0.0
  %v217 = vmul.f32 %v213, 0.0
  %220 = vrot.lane.b32.xlu0 %v214, 96
  %v221 = vpop.permute.xlu0 %220
  %222 = vrot.lane.b32.xlu0 %v215, 96
  %v223 = vpop.permute.xlu0 %222
  %v226 = vmul.f32 %v212, %v221
  %v227 = vmul.f32 %v213, %v223
  %230 = vrot.lane.b32.xlu0 %v226, 16
  %v231 = vpop.permute.xlu0 %230
  %232 = vrot.lane.b32.xlu0 %v227, 16
  %v233 = vpop.permute.xlu0 %232
  %v236 = vadd.f32 %v216, %v231
  %v237 = vadd.f32 %v217, %v233
  %v238 = vtanh.pop %v236
  %v239 = vtanh.pop %v237
  %242 = vrot.lane.b32.xlu0 %v238, 32
  %v243 = vpop.permute.xlu0 %242
  %244 = vrot.lane.b32.xlu0 %v239, 32
  %v245 = vpop.permute.xlu0 %244
  %v248 = vmul.f32 %v212, %v243
  %v249 = vmul.f32 %v213, %v245
  %vm250 = vcmp.gt.s32.totalorder %v27, 7
  %v253 = vrot.slane %v249, 7
  %v254 = vsel %vm134, %v253, %v248
  %255 = vrot.lane.b32.xlu0 %v254, 16
  %v256 = vpop.permute.xlu0 %255
  %v258 = vsel %vm250, %v256, 0.0
  %v261 = vrot.slane %v237, 7
  %v262 = vsel %vm134, %v261, %v236
  %263 = vrot.lane.b32.xlu0 %v262, 48
  %v264 = vpop.permute.xlu0 %263
  %v266 = vsel %vm250, %v264, 0.0
  %v267 = vld [vmem:[%s0 + $0x1] sm:$0x1]
  %v268 = vld [vmem:[%s0 + $0x9] sm:$0x1]
  %v269 = vpack.c.bf16 %v139, %v139
  %v271 = vsel %vm36, %v269, 0
  %273 = vmatprep.subr.bf16.mxu0 0
  %274 = vmatpush1.bf16.msra.mxu0 %v34
  %275 = vmatprep.subr.bf16.mxu0 0
  %276 = vmatpush1.bf16.msra.mxu0 0
  %277 = vmatprep.subr.bf16.mxu0 0
  %278 = vmatpush1.bf16.msra.mxu0 0
  %279 = vmatprep.subr.bf16.mxu0 0
  %280 = vmatpush1.bf16.msra.mxu0 0
  %281 = vmatprep.subr.bf16.mxu0 0
  %282 = vmatpush1.bf16.msra.mxu0 0
  %283 = vmatprep.subr.bf16.mxu0 0
  %284 = vmatpush1.bf16.msra.mxu0 0
  %285 = vmatprep.subr.bf16.mxu0 0
  %286 = vmatpush1.bf16.msra.mxu0 0
  %287 = vmatprep.subr.bf16.mxu0 0
  %288 = vmatpush1.bf16.msra.mxu0 0
  %289 = vmatprep.subr.bf16.mxu0 0
  %290 = vmatpush1.bf16.msra.mxu0 0
  %291 = vmatprep.subr.bf16.mxu0 0
  %292 = vmatpush1.bf16.msra.mxu0 0
  %293 = vmatprep.subr.bf16.mxu0 0
  %294 = vmatpush1.bf16.msra.mxu0 0
  %295 = vmatprep.subr.bf16.mxu0 0
  %296 = vmatpush1.bf16.msra.mxu0 0
  %297 = vmatprep.subr.bf16.mxu0 0
  %298 = vmatpush1.bf16.msra.mxu0 0
  %299 = vmatprep.subr.bf16.mxu0 0
  %300 = vmatpush1.bf16.msra.mxu0 0
  %301 = vmatprep.subr.bf16.mxu0 0
  %302 = vmatpush1.bf16.msra.mxu0 0
  %303 = vmatprep.subr.bf16.mxu0 0
  %304 = vmatpush1.bf16.msra.mxu0 0
  %305 = vmatprep.mubr.bf16.mxu0 0
  %306 = vmatmul.mubr.bf16.gmra.mrb[0].mxu0 %v271
  %v307 = vpop.f32.mrb[0].mxu0
  %v308 = vadd.f32 0.0, %v307
  %v309 = vpop.f32.mrb[0].mxu0
  %v310 = vpop.f32.mrb[0].mxu0
  %v311 = vpop.f32.mrb[0].mxu0
  %312 = vdwg.mxu0
  %v314 = vrot.slane %v308, 1
  %v317 = vadd.f32 %v267, %v308
  %v318 = vadd.f32 %v268, %v314
  %v319 = vmul.f32 %v317, 0.5
  %v320 = vmul.f32 %v318, 0.5
  %v321 = vtanh.pop %v319
  %v322 = vtanh.pop %v320
  %v323 = vmul.f32 %v321, 0.5
  %v324 = vmul.f32 %v322, 0.5
  %v325 = vadd.f32 %v323, 0.5
  %v326 = vadd.f32 %v324, 0.5
  %v327 = vtanh.pop %v317
  %v328 = vtanh.pop %v318
  %v330 = vrot.slane %v147, 1
  %331 = vrot.lane.b32.xlu0 %v147, 16
  %v332 = vpop.permute.xlu0 %331
  %333 = vrot.lane.b32.xlu0 %v330, 16
  %v334 = vpop.permute.xlu0 %333
  %v337 = vmul.f32 %v325, %v332
  %v338 = vmul.f32 %v326, %v334
  %341 = vrot.lane.b32.xlu0 %v327, 96
  %v342 = vpop.permute.xlu0 %341
  %343 = vrot.lane.b32.xlu0 %v328, 96
  %v344 = vpop.permute.xlu0 %343
  %v347 = vmul.f32 %v325, %v342
  %v348 = vmul.f32 %v326, %v344
  %351 = vrot.lane.b32.xlu0 %v347, 16
  %v352 = vpop.permute.xlu0 %351
  %353 = vrot.lane.b32.xlu0 %v348, 16
  %v354 = vpop.permute.xlu0 %353
  %v357 = vadd.f32 %v337, %v352
  %v358 = vadd.f32 %v338, %v354
  %v359 = vtanh.pop %v357
  %v360 = vtanh.pop %v358
  %363 = vrot.lane.b32.xlu0 %v359, 32
  %v364 = vpop.permute.xlu0 %363
  %365 = vrot.lane.b32.xlu0 %v360, 32
  %v366 = vpop.permute.xlu0 %365
  %v369 = vmul.f32 %v325, %v364
  %v370 = vmul.f32 %v326, %v366
  %vm371 = vcmp.gt.s32.totalorder %v27, 1
  %v374 = vrot.slane %v370, 7
  %v375 = vsel %vm134, %v374, %v369
  %376 = vrot.lane.b32.xlu0 %v375, 80
  %v377 = vpop.permute.xlu0 %376
  %v379 = vsel %vm371, %v377, %v139
  %v382 = vrot.slane %v358, 7
  %v383 = vsel %vm134, %v382, %v357
  %384 = vrot.lane.b32.xlu0 %v383, 112
  %v385 = vpop.permute.xlu0 %384
  %v387 = vsel %vm371, %v385, %v147
  %v388 = vld [vmem:[%s0 + $0x6] sm:$0x1]
  %v389 = vld [vmem:[%s0 + $0xe] sm:$0x1]
  %v390 = vpack.c.bf16 %v258, %v258
  %v392 = vsel %vm36, %v390, 0
  %394 = vmatprep.subr.bf16.mxu0 0
  %395 = vmatpush1.bf16.msra.mxu0 %v154
  %396 = vmatprep.subr.bf16.mxu0 0
  %397 = vmatpush1.bf16.msra.mxu0 0
  %398 = vmatprep.subr.bf16.mxu0 0
  %399 = vmatpush1.bf16.msra.mxu0 0
  %400 = vmatprep.subr.bf16.mxu0 0
  %401 = vmatpush1.bf16.msra.mxu0 0
  %402 = vmatprep.subr.bf16.mxu0 0
  %403 = vmatpush1.bf16.msra.mxu0 0
  %404 = vmatprep.subr.bf16.mxu0 0
  %405 = vmatpush1.bf16.msra.mxu0 0
  %406 = vmatprep.subr.bf16.mxu0 0
  %407 = vmatpush1.bf16.msra.mxu0 0
  %408 = vmatprep.subr.bf16.mxu0 0
  %409 = vmatpush1.bf16.msra.mxu0 0
  %410 = vmatprep.subr.bf16.mxu0 0
  %411 = vmatpush1.bf16.msra.mxu0 0
  %412 = vmatprep.subr.bf16.mxu0 0
  %413 = vmatpush1.bf16.msra.mxu0 0
  %414 = vmatprep.subr.bf16.mxu0 0
  %415 = vmatpush1.bf16.msra.mxu0 0
  %416 = vmatprep.subr.bf16.mxu0 0
  %417 = vmatpush1.bf16.msra.mxu0 0
  %418 = vmatprep.subr.bf16.mxu0 0
  %419 = vmatpush1.bf16.msra.mxu0 0
  %420 = vmatprep.subr.bf16.mxu0 0
  %421 = vmatpush1.bf16.msra.mxu0 0
  %422 = vmatprep.subr.bf16.mxu0 0
  %423 = vmatpush1.bf16.msra.mxu0 0
  %424 = vmatprep.subr.bf16.mxu0 0
  %425 = vmatpush1.bf16.msra.mxu0 0
  %426 = vmatprep.mubr.bf16.mxu0 0
  %427 = vmatmul.mubr.bf16.gmra.mrb[0].mxu0 %v392
  %v428 = vpop.f32.mrb[0].mxu0
  %v429 = vadd.f32 0.0, %v428
  %v430 = vpop.f32.mrb[0].mxu0
  %v431 = vpop.f32.mrb[0].mxu0
  %v432 = vpop.f32.mrb[0].mxu0
  %433 = vdwg.mxu0
  %v435 = vrot.slane %v429, 1
  %436 = vrot.lane.b32.xlu0 %v429, 64
  %v437 = vpop.permute.xlu0 %436
  %438 = vrot.lane.b32.xlu0 %v435, 64
  %v439 = vpop.permute.xlu0 %438
  %v442 = vadd.f32 %v388, %v437
  %v443 = vadd.f32 %v389, %v439
  %v444 = vmul.f32 %v442, 0.5
  %v445 = vmul.f32 %v443, 0.5
  %v446 = vtanh.pop %v444
  %v447 = vtanh.pop %v445
  %v448 = vmul.f32 %v446, 0.5
  %v449 = vmul.f32 %v447, 0.5
  %v450 = vadd.f32 %v448, 0.5
  %v451 = vadd.f32 %v449, 0.5
  %v452 = vtanh.pop %v442
  %v453 = vtanh.pop %v443
  %v455 = vrot.slane %v266, 1
  %456 = vrot.lane.b32.xlu0 %v266, 80
  %v457 = vpop.permute.xlu0 %456
  %458 = vrot.lane.b32.xlu0 %v455, 80
  %v459 = vpop.permute.xlu0 %458
  %v462 = vmul.f32 %v450, %v457
  %v463 = vmul.f32 %v451, %v459
  %466 = vrot.lane.b32.xlu0 %v452, 96
  %v467 = vpop.permute.xlu0 %466
  %468 = vrot.lane.b32.xlu0 %v453, 96
  %v469 = vpop.permute.xlu0 %468
  %v472 = vmul.f32 %v450, %v467
  %v473 = vmul.f32 %v451, %v469
  %476 = vrot.lane.b32.xlu0 %v472, 16
  %v477 = vpop.permute.xlu0 %476
  %478 = vrot.lane.b32.xlu0 %v473, 16
  %v479 = vpop.permute.xlu0 %478
  %v482 = vadd.f32 %v462, %v477
  %v483 = vadd.f32 %v463, %v479
  %v484 = vtanh.pop %v482
  %v485 = vtanh.pop %v483
  %488 = vrot.lane.b32.xlu0 %v484, 32
  %v489 = vpop.permute.xlu0 %488
  %490 = vrot.lane.b32.xlu0 %v485, 32
  %v491 = vpop.permute.xlu0 %490
  %v494 = vmul.f32 %v450, %v489
  %v495 = vmul.f32 %v451, %v491
  %vm496 = vcmp.gt.s32.totalorder %v27, 6
  %v499 = vrot.slane %v495, 7
  %v500 = vsel %vm134, %v499, %v494
  %501 = vrot.lane.b32.xlu0 %v500, 16
  %v502 = vpop.permute.xlu0 %501
  %v504 = vsel %vm496, %v502, %v258
  %v507 = vrot.slane %v483, 7
  %v508 = vsel %vm134, %v507, %v482
  %509 = vrot.lane.b32.xlu0 %v508, 48
  %v510 = vpop.permute.xlu0 %509
  %v512 = vsel %vm496, %v510, %v266
  %v513 = vld [vmem:[%s0 + $0x2] sm:$0x1]
  %v514 = vld [vmem:[%s0 + $0xa] sm:$0x1]
  %v515 = vpack.c.bf16 %v379, %v379
  %v517 = vsel %vm36, %v515, 0
  %519 = vmatprep.subr.bf16.mxu0 0
  %520 = vmatpush1.bf16.msra.mxu0 %v34
  %521 = vmatprep.subr.bf16.mxu0 0
  %522 = vmatpush1.bf16.msra.mxu0 0
  %523 = vmatprep.subr.bf16.mxu0 0
  %524 = vmatpush1.bf16.msra.mxu0 0
  %525 = vmatprep.subr.bf16.mxu0 0
  %526 = vmatpush1.bf16.msra.mxu0 0
  %527 = vmatprep.subr.bf16.mxu0 0
  %528 = vmatpush1.bf16.msra.mxu0 0
  %529 = vmatprep.subr.bf16.mxu0 0
  %530 = vmatpush1.bf16.msra.mxu0 0
  %531 = vmatprep.subr.bf16.mxu0 0
  %532 = vmatpush1.bf16.msra.mxu0 0
  %533 = vmatprep.subr.bf16.mxu0 0
  %534 = vmatpush1.bf16.msra.mxu0 0
  %535 = vmatprep.subr.bf16.mxu0 0
  %536 = vmatpush1.bf16.msra.mxu0 0
  %537 = vmatprep.subr.bf16.mxu0 0
  %538 = vmatpush1.bf16.msra.mxu0 0
  %539 = vmatprep.subr.bf16.mxu0 0
  %540 = vmatpush1.bf16.msra.mxu0 0
  %541 = vmatprep.subr.bf16.mxu0 0
  %542 = vmatpush1.bf16.msra.mxu0 0
  %543 = vmatprep.subr.bf16.mxu0 0
  %544 = vmatpush1.bf16.msra.mxu0 0
  %545 = vmatprep.subr.bf16.mxu0 0
  %546 = vmatpush1.bf16.msra.mxu0 0
  %547 = vmatprep.subr.bf16.mxu0 0
  %548 = vmatpush1.bf16.msra.mxu0 0
  %549 = vmatprep.subr.bf16.mxu0 0
  %550 = vmatpush1.bf16.msra.mxu0 0
  %551 = vmatprep.mubr.bf16.mxu0 0
  %552 = vmatmul.mubr.bf16.gmra.mrb[0].mxu0 %v517
  %v553 = vpop.f32.mrb[0].mxu0
  %v554 = vadd.f32 0.0, %v553
  %v555 = vpop.f32.mrb[0].mxu0
  %v556 = vpop.f32.mrb[0].mxu0
  %v557 = vpop.f32.mrb[0].mxu0
  %558 = vdwg.mxu0
  %v560 = vrot.slane %v554, 1
  %v563 = vadd.f32 %v513, %v554
  %v564 = vadd.f32 %v514, %v560
  %v565 = vmul.f32 %v563, 0.5
  %v566 = vmul.f32 %v564, 0.5
  %v567 = vtanh.pop %v565
  %v568 = vtanh.pop %v566
  %v569 = vmul.f32 %v567, 0.5
  %v570 = vmul.f32 %v568, 0.5
  %v571 = vadd.f32 %v569, 0.5
  %v572 = vadd.f32 %v570, 0.5
  %v573 = vtanh.pop %v563
  %v574 = vtanh.pop %v564
  %v576 = vrot.slane %v387, 1
  %577 = vrot.lane.b32.xlu0 %v387, 16
  %v578 = vpop.permute.xlu0 %577
  %579 = vrot.lane.b32.xlu0 %v576, 16
  %v580 = vpop.permute.xlu0 %579
  %v583 = vmul.f32 %v571, %v578
  %v584 = vmul.f32 %v572, %v580
  %587 = vrot.lane.b32.xlu0 %v573, 96
  %v588 = vpop.permute.xlu0 %587
  %589 = vrot.lane.b32.xlu0 %v574, 96
  %v590 = vpop.permute.xlu0 %589
  %v593 = vmul.f32 %v571, %v588
  %v594 = vmul.f32 %v572, %v590
  %597 = vrot.lane.b32.xlu0 %v593, 16
  %v598 = vpop.permute.xlu0 %597
  %599 = vrot.lane.b32.xlu0 %v594, 16
  %v600 = vpop.permute.xlu0 %599
  %v603 = vadd.f32 %v583, %v598
  %v604 = vadd.f32 %v584, %v600
  %v605 = vtanh.pop %v603
  %v606 = vtanh.pop %v604
  %609 = vrot.lane.b32.xlu0 %v605, 32
  %v610 = vpop.permute.xlu0 %609
  %611 = vrot.lane.b32.xlu0 %v606, 32
  %v612 = vpop.permute.xlu0 %611
  %v615 = vmul.f32 %v571, %v610
  %v616 = vmul.f32 %v572, %v612
  %vm617 = vcmp.gt.s32.totalorder %v27, 2
  %v620 = vrot.slane %v616, 7
  %v621 = vsel %vm134, %v620, %v615
  %622 = vrot.lane.b32.xlu0 %v621, 80
  %v623 = vpop.permute.xlu0 %622
  %v625 = vsel %vm617, %v623, %v379
  %v628 = vrot.slane %v604, 7
  %v629 = vsel %vm134, %v628, %v603
  %630 = vrot.lane.b32.xlu0 %v629, 112
  %v631 = vpop.permute.xlu0 %630
  %v633 = vsel %vm617, %v631, %v387
  %v634 = vld [vmem:[%s0 + $0x5] sm:$0x1]
  %v635 = vld [vmem:[%s0 + $0xd] sm:$0x1]
  %v636 = vpack.c.bf16 %v504, %v504
  %v638 = vsel %vm36, %v636, 0
  %640 = vmatprep.subr.bf16.mxu0 0
  %641 = vmatpush1.bf16.msra.mxu0 %v154
  %642 = vmatprep.subr.bf16.mxu0 0
  %643 = vmatpush1.bf16.msra.mxu0 0
  %644 = vmatprep.subr.bf16.mxu0 0
  %645 = vmatpush1.bf16.msra.mxu0 0
  %646 = vmatprep.subr.bf16.mxu0 0
  %647 = vmatpush1.bf16.msra.mxu0 0
  %648 = vmatprep.subr.bf16.mxu0 0
  %649 = vmatpush1.bf16.msra.mxu0 0
  %650 = vmatprep.subr.bf16.mxu0 0
  %651 = vmatpush1.bf16.msra.mxu0 0
  %652 = vmatprep.subr.bf16.mxu0 0
  %653 = vmatpush1.bf16.msra.mxu0 0
  %654 = vmatprep.subr.bf16.mxu0 0
  %655 = vmatpush1.bf16.msra.mxu0 0
  %656 = vmatprep.subr.bf16.mxu0 0
  %657 = vmatpush1.bf16.msra.mxu0 0
  %658 = vmatprep.subr.bf16.mxu0 0
  %659 = vmatpush1.bf16.msra.mxu0 0
  %660 = vmatprep.subr.bf16.mxu0 0
  %661 = vmatpush1.bf16.msra.mxu0 0
  %662 = vmatprep.subr.bf16.mxu0 0
  %663 = vmatpush1.bf16.msra.mxu0 0
  %664 = vmatprep.subr.bf16.mxu0 0
  %665 = vmatpush1.bf16.msra.mxu0 0
  %666 = vmatprep.subr.bf16.mxu0 0
  %667 = vmatpush1.bf16.msra.mxu0 0
  %668 = vmatprep.subr.bf16.mxu0 0
  %669 = vmatpush1.bf16.msra.mxu0 0
  %670 = vmatprep.subr.bf16.mxu0 0
  %671 = vmatpush1.bf16.msra.mxu0 0
  %672 = vmatprep.mubr.bf16.mxu0 0
  %673 = vmatmul.mubr.bf16.gmra.mrb[0].mxu0 %v638
  %v674 = vpop.f32.mrb[0].mxu0
  %v675 = vadd.f32 0.0, %v674
  %v676 = vpop.f32.mrb[0].mxu0
  %v677 = vpop.f32.mrb[0].mxu0
  %v678 = vpop.f32.mrb[0].mxu0
  %679 = vdwg.mxu0
  %v681 = vrot.slane %v675, 1
  %682 = vrot.lane.b32.xlu0 %v675, 64
  %v683 = vpop.permute.xlu0 %682
  %684 = vrot.lane.b32.xlu0 %v681, 64
  %v685 = vpop.permute.xlu0 %684
  %v688 = vadd.f32 %v634, %v683
  %v689 = vadd.f32 %v635, %v685
  %v690 = vmul.f32 %v688, 0.5
  %v691 = vmul.f32 %v689, 0.5
  %v692 = vtanh.pop %v690
  %v693 = vtanh.pop %v691
  %v694 = vmul.f32 %v692, 0.5
  %v695 = vmul.f32 %v693, 0.5
  %v696 = vadd.f32 %v694, 0.5
  %v697 = vadd.f32 %v695, 0.5
  %v698 = vtanh.pop %v688
  %v699 = vtanh.pop %v689
  %v701 = vrot.slane %v512, 1
  %702 = vrot.lane.b32.xlu0 %v512, 80
  %v703 = vpop.permute.xlu0 %702
  %704 = vrot.lane.b32.xlu0 %v701, 80
  %v705 = vpop.permute.xlu0 %704
  %v708 = vmul.f32 %v696, %v703
  %v709 = vmul.f32 %v697, %v705
  %712 = vrot.lane.b32.xlu0 %v698, 96
  %v713 = vpop.permute.xlu0 %712
  %714 = vrot.lane.b32.xlu0 %v699, 96
  %v715 = vpop.permute.xlu0 %714
  %v718 = vmul.f32 %v696, %v713
  %v719 = vmul.f32 %v697, %v715
  %722 = vrot.lane.b32.xlu0 %v718, 16
  %v723 = vpop.permute.xlu0 %722
  %724 = vrot.lane.b32.xlu0 %v719, 16
  %v725 = vpop.permute.xlu0 %724
  %v728 = vadd.f32 %v708, %v723
  %v729 = vadd.f32 %v709, %v725
  %v730 = vtanh.pop %v728
  %v731 = vtanh.pop %v729
  %734 = vrot.lane.b32.xlu0 %v730, 32
  %v735 = vpop.permute.xlu0 %734
  %736 = vrot.lane.b32.xlu0 %v731, 32
  %v737 = vpop.permute.xlu0 %736
  %v740 = vmul.f32 %v696, %v735
  %v741 = vmul.f32 %v697, %v737
  %vm742 = vcmp.gt.s32.totalorder %v27, 5
  %v745 = vrot.slane %v741, 7
  %v746 = vsel %vm134, %v745, %v740
  %747 = vrot.lane.b32.xlu0 %v746, 16
  %v748 = vpop.permute.xlu0 %747
  %v750 = vsel %vm742, %v748, %v504
  %v753 = vrot.slane %v729, 7
  %v754 = vsel %vm134, %v753, %v728
  %755 = vrot.lane.b32.xlu0 %v754, 48
  %v756 = vpop.permute.xlu0 %755
  %v758 = vsel %vm742, %v756, %v512
  %v759 = vld [vmem:[%s0 + $0x3] sm:$0x1]
  %v760 = vld [vmem:[%s0 + $0xb] sm:$0x1]
  %v761 = vpack.c.bf16 %v625, %v625
  %v763 = vsel %vm36, %v761, 0
  %765 = vmatprep.subr.bf16.mxu0 0
  %766 = vmatpush1.bf16.msra.mxu0 %v34
  %767 = vmatprep.subr.bf16.mxu0 0
  %768 = vmatpush1.bf16.msra.mxu0 0
  %769 = vmatprep.subr.bf16.mxu0 0
  %770 = vmatpush1.bf16.msra.mxu0 0
  %771 = vmatprep.subr.bf16.mxu0 0
  %772 = vmatpush1.bf16.msra.mxu0 0
  %773 = vmatprep.subr.bf16.mxu0 0
  %774 = vmatpush1.bf16.msra.mxu0 0
  %775 = vmatprep.subr.bf16.mxu0 0
  %776 = vmatpush1.bf16.msra.mxu0 0
  %777 = vmatprep.subr.bf16.mxu0 0
  %778 = vmatpush1.bf16.msra.mxu0 0
  %779 = vmatprep.subr.bf16.mxu0 0
  %780 = vmatpush1.bf16.msra.mxu0 0
  %781 = vmatprep.subr.bf16.mxu0 0
  %782 = vmatpush1.bf16.msra.mxu0 0
  %783 = vmatprep.subr.bf16.mxu0 0
  %784 = vmatpush1.bf16.msra.mxu0 0
  %785 = vmatprep.subr.bf16.mxu0 0
  %786 = vmatpush1.bf16.msra.mxu0 0
  %787 = vmatprep.subr.bf16.mxu0 0
  %788 = vmatpush1.bf16.msra.mxu0 0
  %789 = vmatprep.subr.bf16.mxu0 0
  %790 = vmatpush1.bf16.msra.mxu0 0
  %791 = vmatprep.subr.bf16.mxu0 0
  %792 = vmatpush1.bf16.msra.mxu0 0
  %793 = vmatprep.subr.bf16.mxu0 0
  %794 = vmatpush1.bf16.msra.mxu0 0
  %795 = vmatprep.subr.bf16.mxu0 0
  %796 = vmatpush1.bf16.msra.mxu0 0
  %797 = vmatprep.mubr.bf16.mxu0 0
  %798 = vmatmul.mubr.bf16.gmra.mrb[0].mxu0 %v763
  %v799 = vpop.f32.mrb[0].mxu0
  %v800 = vadd.f32 0.0, %v799
  %v801 = vpop.f32.mrb[0].mxu0
  %v802 = vpop.f32.mrb[0].mxu0
  %v803 = vpop.f32.mrb[0].mxu0
  %804 = vdwg.mxu0
  %v806 = vrot.slane %v800, 1
  %v809 = vadd.f32 %v759, %v800
  %v810 = vadd.f32 %v760, %v806
  %v811 = vmul.f32 %v809, 0.5
  %v812 = vmul.f32 %v810, 0.5
  %v813 = vtanh.pop %v811
  %v814 = vtanh.pop %v812
  %v815 = vmul.f32 %v813, 0.5
  %v816 = vmul.f32 %v814, 0.5
  %v817 = vadd.f32 %v815, 0.5
  %v818 = vadd.f32 %v816, 0.5
  %v819 = vtanh.pop %v809
  %v820 = vtanh.pop %v810
  %v822 = vrot.slane %v633, 1
  %823 = vrot.lane.b32.xlu0 %v633, 16
  %v824 = vpop.permute.xlu0 %823
  %825 = vrot.lane.b32.xlu0 %v822, 16
  %v826 = vpop.permute.xlu0 %825
  %v829 = vmul.f32 %v817, %v824
  %v830 = vmul.f32 %v818, %v826
  %833 = vrot.lane.b32.xlu0 %v819, 96
  %v834 = vpop.permute.xlu0 %833
  %835 = vrot.lane.b32.xlu0 %v820, 96
  %v836 = vpop.permute.xlu0 %835
  %v839 = vmul.f32 %v817, %v834
  %v840 = vmul.f32 %v818, %v836
  %843 = vrot.lane.b32.xlu0 %v839, 16
  %v844 = vpop.permute.xlu0 %843
  %845 = vrot.lane.b32.xlu0 %v840, 16
  %v846 = vpop.permute.xlu0 %845
  %v849 = vadd.f32 %v829, %v844
  %v850 = vadd.f32 %v830, %v846
  %v851 = vtanh.pop %v849
  %v852 = vtanh.pop %v850
  %855 = vrot.lane.b32.xlu0 %v851, 32
  %v856 = vpop.permute.xlu0 %855
  %857 = vrot.lane.b32.xlu0 %v852, 32
  %v858 = vpop.permute.xlu0 %857
  %v861 = vmul.f32 %v817, %v856
  %v862 = vmul.f32 %v818, %v858
  %vm863 = vcmp.gt.s32.totalorder %v27, 3
  %v866 = vrot.slane %v862, 7
  %v867 = vsel %vm134, %v866, %v861
  %868 = vrot.lane.b32.xlu0 %v867, 80
  %v869 = vpop.permute.xlu0 %868
  %v871 = vsel %vm863, %v869, %v625
  %v874 = vrot.slane %v850, 7
  %v875 = vsel %vm134, %v874, %v849
  %876 = vrot.lane.b32.xlu0 %v875, 112
  %v877 = vpop.permute.xlu0 %876
  %v879 = vsel %vm863, %v877, %v633
  %v880 = vld [vmem:[%s0 + $0x4] sm:$0x1]
  %v881 = vld [vmem:[%s0 + $0xc] sm:$0x1]
  %v882 = vpack.c.bf16 %v750, %v750
  %v884 = vsel %vm36, %v882, 0
  %886 = vmatprep.subr.bf16.mxu0 0
  %887 = vmatpush1.bf16.msra.mxu0 %v154
  %888 = vmatprep.subr.bf16.mxu0 0
  %889 = vmatpush1.bf16.msra.mxu0 0
  %890 = vmatprep.subr.bf16.mxu0 0
  %891 = vmatpush1.bf16.msra.mxu0 0
  %892 = vmatprep.subr.bf16.mxu0 0
  %893 = vmatpush1.bf16.msra.mxu0 0
  %894 = vmatprep.subr.bf16.mxu0 0
  %895 = vmatpush1.bf16.msra.mxu0 0
  %896 = vmatprep.subr.bf16.mxu0 0
  %897 = vmatpush1.bf16.msra.mxu0 0
  %898 = vmatprep.subr.bf16.mxu0 0
  %899 = vmatpush1.bf16.msra.mxu0 0
  %900 = vmatprep.subr.bf16.mxu0 0
  %901 = vmatpush1.bf16.msra.mxu0 0
  %902 = vmatprep.subr.bf16.mxu0 0
  %903 = vmatpush1.bf16.msra.mxu0 0
  %904 = vmatprep.subr.bf16.mxu0 0
  %905 = vmatpush1.bf16.msra.mxu0 0
  %906 = vmatprep.subr.bf16.mxu0 0
  %907 = vmatpush1.bf16.msra.mxu0 0
  %908 = vmatprep.subr.bf16.mxu0 0
  %909 = vmatpush1.bf16.msra.mxu0 0
  %910 = vmatprep.subr.bf16.mxu0 0
  %911 = vmatpush1.bf16.msra.mxu0 0
  %912 = vmatprep.subr.bf16.mxu0 0
  %913 = vmatpush1.bf16.msra.mxu0 0
  %914 = vmatprep.subr.bf16.mxu0 0
  %915 = vmatpush1.bf16.msra.mxu0 0
  %916 = vmatprep.subr.bf16.mxu0 0
  %917 = vmatpush1.bf16.msra.mxu0 0
  %918 = vmatprep.mubr.bf16.mxu0 0
  %919 = vmatmul.mubr.bf16.gmra.mrb[0].mxu0 %v884
  %v920 = vpop.f32.mrb[0].mxu0
  %v921 = vadd.f32 0.0, %v920
  %v922 = vpop.f32.mrb[0].mxu0
  %v923 = vpop.f32.mrb[0].mxu0
  %v924 = vpop.f32.mrb[0].mxu0
  %925 = vdwg.mxu0
  %v927 = vrot.slane %v921, 1
  %928 = vrot.lane.b32.xlu0 %v921, 64
  %v929 = vpop.permute.xlu0 %928
  %930 = vrot.lane.b32.xlu0 %v927, 64
  %v931 = vpop.permute.xlu0 %930
  %v934 = vadd.f32 %v880, %v929
  %v935 = vadd.f32 %v881, %v931
  %v936 = vmul.f32 %v934, 0.5
  %v937 = vmul.f32 %v935, 0.5
  %v938 = vtanh.pop %v936
  %v939 = vtanh.pop %v937
  %v940 = vmul.f32 %v938, 0.5
  %v941 = vmul.f32 %v939, 0.5
  %v942 = vadd.f32 %v940, 0.5
  %v943 = vadd.f32 %v941, 0.5
  %v944 = vtanh.pop %v934
  %v945 = vtanh.pop %v935
  %v947 = vrot.slane %v758, 1
  %948 = vrot.lane.b32.xlu0 %v758, 80
  %v949 = vpop.permute.xlu0 %948
  %950 = vrot.lane.b32.xlu0 %v947, 80
  %v951 = vpop.permute.xlu0 %950
  %v954 = vmul.f32 %v942, %v949
  %v955 = vmul.f32 %v943, %v951
  %958 = vrot.lane.b32.xlu0 %v944, 96
  %v959 = vpop.permute.xlu0 %958
  %960 = vrot.lane.b32.xlu0 %v945, 96
  %v961 = vpop.permute.xlu0 %960
  %v964 = vmul.f32 %v942, %v959
  %v965 = vmul.f32 %v943, %v961
  %968 = vrot.lane.b32.xlu0 %v964, 16
  %v969 = vpop.permute.xlu0 %968
  %970 = vrot.lane.b32.xlu0 %v965, 16
  %v971 = vpop.permute.xlu0 %970
  %v974 = vadd.f32 %v954, %v969
  %v975 = vadd.f32 %v955, %v971
  %v976 = vtanh.pop %v974
  %v977 = vtanh.pop %v975
  %980 = vrot.lane.b32.xlu0 %v976, 32
  %v981 = vpop.permute.xlu0 %980
  %982 = vrot.lane.b32.xlu0 %v977, 32
  %v983 = vpop.permute.xlu0 %982
  %v986 = vmul.f32 %v942, %v981
  %v987 = vmul.f32 %v943, %v983
  %vm988 = vcmp.gt.s32.totalorder %v27, 4
  %v991 = vrot.slane %v987, 7
  %v992 = vsel %vm134, %v991, %v986
  %993 = vrot.lane.b32.xlu0 %v992, 16
  %v994 = vpop.permute.xlu0 %993
  %v996 = vsel %vm988, %v994, %v750
  %v999 = vrot.slane %v975, 7
  %v1000 = vsel %vm134, %v999, %v974
  %1001 = vrot.lane.b32.xlu0 %v1000, 48
  %v1002 = vpop.permute.xlu0 %1001
  %v1004 = vsel %vm988, %v1002, %v758
  %v1005 = vpack.c.bf16 %v871, %v871
  %v1007 = vsel %vm36, %v1005, 0
  %1009 = vmatprep.subr.bf16.mxu0 0
  %1010 = vmatpush1.bf16.msra.mxu0 %v34
  %1011 = vmatprep.subr.bf16.mxu0 0
  %1012 = vmatpush1.bf16.msra.mxu0 0
  %1013 = vmatprep.subr.bf16.mxu0 0
  %1014 = vmatpush1.bf16.msra.mxu0 0
  %1015 = vmatprep.subr.bf16.mxu0 0
  %1016 = vmatpush1.bf16.msra.mxu0 0
  %1017 = vmatprep.subr.bf16.mxu0 0
  %1018 = vmatpush1.bf16.msra.mxu0 0
  %1019 = vmatprep.subr.bf16.mxu0 0
  %1020 = vmatpush1.bf16.msra.mxu0 0
  %1021 = vmatprep.subr.bf16.mxu0 0
  %1022 = vmatpush1.bf16.msra.mxu0 0
  %1023 = vmatprep.subr.bf16.mxu0 0
  %1024 = vmatpush1.bf16.msra.mxu0 0
  %1025 = vmatprep.subr.bf16.mxu0 0
  %1026 = vmatpush1.bf16.msra.mxu0 0
  %1027 = vmatprep.subr.bf16.mxu0 0
  %1028 = vmatpush1.bf16.msra.mxu0 0
  %1029 = vmatprep.subr.bf16.mxu0 0
  %1030 = vmatpush1.bf16.msra.mxu0 0
  %1031 = vmatprep.subr.bf16.mxu0 0
  %1032 = vmatpush1.bf16.msra.mxu0 0
  %1033 = vmatprep.subr.bf16.mxu0 0
  %1034 = vmatpush1.bf16.msra.mxu0 0
  %1035 = vmatprep.subr.bf16.mxu0 0
  %1036 = vmatpush1.bf16.msra.mxu0 0
  %1037 = vmatprep.subr.bf16.mxu0 0
  %1038 = vmatpush1.bf16.msra.mxu0 0
  %1039 = vmatprep.subr.bf16.mxu0 0
  %1040 = vmatpush1.bf16.msra.mxu0 0
  %1041 = vmatprep.mubr.bf16.mxu0 0
  %1042 = vmatmul.mubr.bf16.gmra.mrb[0].mxu0 %v1007
  %v1043 = vpop.f32.mrb[0].mxu0
  %v1044 = vadd.f32 0.0, %v1043
  %v1045 = vpop.f32.mrb[0].mxu0
  %v1046 = vpop.f32.mrb[0].mxu0
  %v1047 = vpop.f32.mrb[0].mxu0
  %1048 = vdwg.mxu0
  %v1050 = vrot.slane %v1044, 1
  %v1053 = vadd.f32 %v880, %v1044
  %v1054 = vadd.f32 %v881, %v1050
  %v1055 = vmul.f32 %v1053, 0.5
  %v1056 = vmul.f32 %v1054, 0.5
  %v1057 = vtanh.pop %v1055
  %v1058 = vtanh.pop %v1056
  %v1059 = vmul.f32 %v1057, 0.5
  %v1060 = vmul.f32 %v1058, 0.5
  %v1061 = vadd.f32 %v1059, 0.5
  %v1062 = vadd.f32 %v1060, 0.5
  %v1063 = vtanh.pop %v1053
  %v1064 = vtanh.pop %v1054
  %v1066 = vrot.slane %v879, 1
  %1067 = vrot.lane.b32.xlu0 %v879, 16
  %v1068 = vpop.permute.xlu0 %1067
  %1069 = vrot.lane.b32.xlu0 %v1066, 16
  %v1070 = vpop.permute.xlu0 %1069
  %v1073 = vmul.f32 %v1061, %v1068
  %v1074 = vmul.f32 %v1062, %v1070
  %1077 = vrot.lane.b32.xlu0 %v1063, 96
  %v1078 = vpop.permute.xlu0 %1077
  %1079 = vrot.lane.b32.xlu0 %v1064, 96
  %v1080 = vpop.permute.xlu0 %1079
  %v1083 = vmul.f32 %v1061, %v1078
  %v1084 = vmul.f32 %v1062, %v1080
  %1087 = vrot.lane.b32.xlu0 %v1083, 16
  %v1088 = vpop.permute.xlu0 %1087
  %1089 = vrot.lane.b32.xlu0 %v1084, 16
  %v1090 = vpop.permute.xlu0 %1089
  %v1093 = vadd.f32 %v1073, %v1088
  %v1094 = vadd.f32 %v1074, %v1090
  %v1095 = vtanh.pop %v1093
  %v1096 = vtanh.pop %v1094
  %1099 = vrot.lane.b32.xlu0 %v1095, 32
  %v1100 = vpop.permute.xlu0 %1099
  %1101 = vrot.lane.b32.xlu0 %v1096, 32
  %v1102 = vpop.permute.xlu0 %1101
  %v1105 = vmul.f32 %v1061, %v1100
  %v1106 = vmul.f32 %v1062, %v1102
  %v1109 = vrot.slane %v1106, 7
  %v1110 = vsel %vm134, %v1109, %v1105
  %1111 = vrot.lane.b32.xlu0 %v1110, 80
  %v1112 = vpop.permute.xlu0 %1111
  %v1114 = vsel %vm988, %v1112, %v871
  %v1117 = vrot.slane %v1094, 7
  %v1118 = vsel %vm134, %v1117, %v1093
  %1119 = vrot.lane.b32.xlu0 %v1118, 112
  %v1120 = vpop.permute.xlu0 %1119
  %v1122 = vsel %vm988, %v1120, %v879
  %v1123 = vpack.c.bf16 %v996, %v996
  %v1125 = vsel %vm36, %v1123, 0
  %1127 = vmatprep.subr.bf16.mxu0 0
  %1128 = vmatpush1.bf16.msra.mxu0 %v154
  %1129 = vmatprep.subr.bf16.mxu0 0
  %1130 = vmatpush1.bf16.msra.mxu0 0
  %1131 = vmatprep.subr.bf16.mxu0 0
  %1132 = vmatpush1.bf16.msra.mxu0 0
  %1133 = vmatprep.subr.bf16.mxu0 0
  %1134 = vmatpush1.bf16.msra.mxu0 0
  %1135 = vmatprep.subr.bf16.mxu0 0
  %1136 = vmatpush1.bf16.msra.mxu0 0
  %1137 = vmatprep.subr.bf16.mxu0 0
  %1138 = vmatpush1.bf16.msra.mxu0 0
  %1139 = vmatprep.subr.bf16.mxu0 0
  %1140 = vmatpush1.bf16.msra.mxu0 0
  %1141 = vmatprep.subr.bf16.mxu0 0
  %1142 = vmatpush1.bf16.msra.mxu0 0
  %1143 = vmatprep.subr.bf16.mxu0 0
  %1144 = vmatpush1.bf16.msra.mxu0 0
  %1145 = vmatprep.subr.bf16.mxu0 0
  %1146 = vmatpush1.bf16.msra.mxu0 0
  %1147 = vmatprep.subr.bf16.mxu0 0
  %1148 = vmatpush1.bf16.msra.mxu0 0
  %1149 = vmatprep.subr.bf16.mxu0 0
  %1150 = vmatpush1.bf16.msra.mxu0 0
  %1151 = vmatprep.subr.bf16.mxu0 0
  %1152 = vmatpush1.bf16.msra.mxu0 0
  %1153 = vmatprep.subr.bf16.mxu0 0
  %1154 = vmatpush1.bf16.msra.mxu0 0
  %1155 = vmatprep.subr.bf16.mxu0 0
  %1156 = vmatpush1.bf16.msra.mxu0 0
  %1157 = vmatprep.subr.bf16.mxu0 0
  %1158 = vmatpush1.bf16.msra.mxu0 0
  %1159 = vmatprep.mubr.bf16.mxu0 0
  %1160 = vmatmul.mubr.bf16.gmra.mrb[0].mxu0 %v1125
  %v1161 = vpop.f32.mrb[0].mxu0
  %v1162 = vadd.f32 0.0, %v1161
  %v1163 = vpop.f32.mrb[0].mxu0
  %v1164 = vpop.f32.mrb[0].mxu0
  %v1165 = vpop.f32.mrb[0].mxu0
  %1166 = vdwg.mxu0
  %v1168 = vrot.slane %v1162, 1
  %1169 = vrot.lane.b32.xlu0 %v1162, 64
  %v1170 = vpop.permute.xlu0 %1169
  %1171 = vrot.lane.b32.xlu0 %v1168, 64
  %v1172 = vpop.permute.xlu0 %1171
  %v1175 = vadd.f32 %v759, %v1170
  %v1176 = vadd.f32 %v760, %v1172
  %v1177 = vmul.f32 %v1175, 0.5
  %v1178 = vmul.f32 %v1176, 0.5
  %v1179 = vtanh.pop %v1177
  %v1180 = vtanh.pop %v1178
  %v1181 = vmul.f32 %v1179, 0.5
  %v1182 = vmul.f32 %v1180, 0.5
  %v1183 = vadd.f32 %v1181, 0.5
  %v1184 = vadd.f32 %v1182, 0.5
  %v1185 = vtanh.pop %v1175
  %v1186 = vtanh.pop %v1176
  %v1188 = vrot.slane %v1004, 1
  %1189 = vrot.lane.b32.xlu0 %v1004, 80
  %v1190 = vpop.permute.xlu0 %1189
  %1191 = vrot.lane.b32.xlu0 %v1188, 80
  %v1192 = vpop.permute.xlu0 %1191
  %v1195 = vmul.f32 %v1183, %v1190
  %v1196 = vmul.f32 %v1184, %v1192
  %1199 = vrot.lane.b32.xlu0 %v1185, 96
  %v1200 = vpop.permute.xlu0 %1199
  %1201 = vrot.lane.b32.xlu0 %v1186, 96
  %v1202 = vpop.permute.xlu0 %1201
  %v1205 = vmul.f32 %v1183, %v1200
  %v1206 = vmul.f32 %v1184, %v1202
  %1209 = vrot.lane.b32.xlu0 %v1205, 16
  %v1210 = vpop.permute.xlu0 %1209
  %1211 = vrot.lane.b32.xlu0 %v1206, 16
  %v1212 = vpop.permute.xlu0 %1211
  %v1215 = vadd.f32 %v1195, %v1210
  %v1216 = vadd.f32 %v1196, %v1212
  %v1217 = vtanh.pop %v1215
  %v1218 = vtanh.pop %v1216
  %1221 = vrot.lane.b32.xlu0 %v1217, 32
  %v1222 = vpop.permute.xlu0 %1221
  %1223 = vrot.lane.b32.xlu0 %v1218, 32
  %v1224 = vpop.permute.xlu0 %1223
  %v1227 = vmul.f32 %v1183, %v1222
  %v1228 = vmul.f32 %v1184, %v1224
  %v1231 = vrot.slane %v1228, 7
  %v1232 = vsel %vm134, %v1231, %v1227
  %1233 = vrot.lane.b32.xlu0 %v1232, 16
  %v1234 = vpop.permute.xlu0 %1233
  %v1236 = vsel %vm863, %v1234, %v996
  %v1239 = vrot.slane %v1216, 7
  %v1240 = vsel %vm134, %v1239, %v1215
  %1241 = vrot.lane.b32.xlu0 %v1240, 48
  %v1242 = vpop.permute.xlu0 %1241
  %v1244 = vsel %vm863, %v1242, %v1004
  %v1245 = vpack.c.bf16 %v1114, %v1114
  %v1247 = vsel %vm36, %v1245, 0
  %1249 = vmatprep.subr.bf16.mxu0 0
  %1250 = vmatpush1.bf16.msra.mxu0 %v34
  %1251 = vmatprep.subr.bf16.mxu0 0
  %1252 = vmatpush1.bf16.msra.mxu0 0
  %1253 = vmatprep.subr.bf16.mxu0 0
  %1254 = vmatpush1.bf16.msra.mxu0 0
  %1255 = vmatprep.subr.bf16.mxu0 0
  %1256 = vmatpush1.bf16.msra.mxu0 0
  %1257 = vmatprep.subr.bf16.mxu0 0
  %1258 = vmatpush1.bf16.msra.mxu0 0
  %1259 = vmatprep.subr.bf16.mxu0 0
  %1260 = vmatpush1.bf16.msra.mxu0 0
  %1261 = vmatprep.subr.bf16.mxu0 0
  %1262 = vmatpush1.bf16.msra.mxu0 0
  %1263 = vmatprep.subr.bf16.mxu0 0
  %1264 = vmatpush1.bf16.msra.mxu0 0
  %1265 = vmatprep.subr.bf16.mxu0 0
  %1266 = vmatpush1.bf16.msra.mxu0 0
  %1267 = vmatprep.subr.bf16.mxu0 0
  %1268 = vmatpush1.bf16.msra.mxu0 0
  %1269 = vmatprep.subr.bf16.mxu0 0
  %1270 = vmatpush1.bf16.msra.mxu0 0
  %1271 = vmatprep.subr.bf16.mxu0 0
  %1272 = vmatpush1.bf16.msra.mxu0 0
  %1273 = vmatprep.subr.bf16.mxu0 0
  %1274 = vmatpush1.bf16.msra.mxu0 0
  %1275 = vmatprep.subr.bf16.mxu0 0
  %1276 = vmatpush1.bf16.msra.mxu0 0
  %1277 = vmatprep.subr.bf16.mxu0 0
  %1278 = vmatpush1.bf16.msra.mxu0 0
  %1279 = vmatprep.subr.bf16.mxu0 0
  %1280 = vmatpush1.bf16.msra.mxu0 0
  %1281 = vmatprep.mubr.bf16.mxu0 0
  %1282 = vmatmul.mubr.bf16.gmra.mrb[0].mxu0 %v1247
  %v1283 = vpop.f32.mrb[0].mxu0
  %v1284 = vadd.f32 0.0, %v1283
  %v1285 = vpop.f32.mrb[0].mxu0
  %v1286 = vpop.f32.mrb[0].mxu0
  %v1287 = vpop.f32.mrb[0].mxu0
  %1288 = vdwg.mxu0
  %v1290 = vrot.slane %v1284, 1
  %v1293 = vadd.f32 %v634, %v1284
  %v1294 = vadd.f32 %v635, %v1290
  %v1295 = vmul.f32 %v1293, 0.5
  %v1296 = vmul.f32 %v1294, 0.5
  %v1297 = vtanh.pop %v1295
  %v1298 = vtanh.pop %v1296
  %v1299 = vmul.f32 %v1297, 0.5
  %v1300 = vmul.f32 %v1298, 0.5
  %v1301 = vadd.f32 %v1299, 0.5
  %v1302 = vadd.f32 %v1300, 0.5
  %v1303 = vtanh.pop %v1293
  %v1304 = vtanh.pop %v1294
  %v1306 = vrot.slane %v1122, 1
  %1307 = vrot.lane.b32.xlu0 %v1122, 16
  %v1308 = vpop.permute.xlu0 %1307
  %1309 = vrot.lane.b32.xlu0 %v1306, 16
  %v1310 = vpop.permute.xlu0 %1309
  %v1313 = vmul.f32 %v1301, %v1308
  %v1314 = vmul.f32 %v1302, %v1310
  %1317 = vrot.lane.b32.xlu0 %v1303, 96
  %v1318 = vpop.permute.xlu0 %1317
  %1319 = vrot.lane.b32.xlu0 %v1304, 96
  %v1320 = vpop.permute.xlu0 %1319
  %v1323 = vmul.f32 %v1301, %v1318
  %v1324 = vmul.f32 %v1302, %v1320
  %1327 = vrot.lane.b32.xlu0 %v1323, 16
  %v1328 = vpop.permute.xlu0 %1327
  %1329 = vrot.lane.b32.xlu0 %v1324, 16
  %v1330 = vpop.permute.xlu0 %1329
  %v1333 = vadd.f32 %v1313, %v1328
  %v1334 = vadd.f32 %v1314, %v1330
  %v1335 = vtanh.pop %v1333
  %v1336 = vtanh.pop %v1334
  %1339 = vrot.lane.b32.xlu0 %v1335, 32
  %v1340 = vpop.permute.xlu0 %1339
  %1341 = vrot.lane.b32.xlu0 %v1336, 32
  %v1342 = vpop.permute.xlu0 %1341
  %v1345 = vmul.f32 %v1301, %v1340
  %v1346 = vmul.f32 %v1302, %v1342
  %v1349 = vrot.slane %v1346, 7
  %v1350 = vsel %vm134, %v1349, %v1345
  %1351 = vrot.lane.b32.xlu0 %v1350, 80
  %v1352 = vpop.permute.xlu0 %1351
  %v1354 = vsel %vm742, %v1352, %v1114
  %v1357 = vrot.slane %v1334, 7
  %v1358 = vsel %vm134, %v1357, %v1333
  %1359 = vrot.lane.b32.xlu0 %v1358, 112
  %v1360 = vpop.permute.xlu0 %1359
  %v1362 = vsel %vm742, %v1360, %v1122
  %v1363 = vpack.c.bf16 %v1236, %v1236
  %v1365 = vsel %vm36, %v1363, 0
  %1367 = vmatprep.subr.bf16.mxu0 0
  %1368 = vmatpush1.bf16.msra.mxu0 %v154
  %1369 = vmatprep.subr.bf16.mxu0 0
  %1370 = vmatpush1.bf16.msra.mxu0 0
  %1371 = vmatprep.subr.bf16.mxu0 0
  %1372 = vmatpush1.bf16.msra.mxu0 0
  %1373 = vmatprep.subr.bf16.mxu0 0
  %1374 = vmatpush1.bf16.msra.mxu0 0
  %1375 = vmatprep.subr.bf16.mxu0 0
  %1376 = vmatpush1.bf16.msra.mxu0 0
  %1377 = vmatprep.subr.bf16.mxu0 0
  %1378 = vmatpush1.bf16.msra.mxu0 0
  %1379 = vmatprep.subr.bf16.mxu0 0
  %1380 = vmatpush1.bf16.msra.mxu0 0
  %1381 = vmatprep.subr.bf16.mxu0 0
  %1382 = vmatpush1.bf16.msra.mxu0 0
  %1383 = vmatprep.subr.bf16.mxu0 0
  %1384 = vmatpush1.bf16.msra.mxu0 0
  %1385 = vmatprep.subr.bf16.mxu0 0
  %1386 = vmatpush1.bf16.msra.mxu0 0
  %1387 = vmatprep.subr.bf16.mxu0 0
  %1388 = vmatpush1.bf16.msra.mxu0 0
  %1389 = vmatprep.subr.bf16.mxu0 0
  %1390 = vmatpush1.bf16.msra.mxu0 0
  %1391 = vmatprep.subr.bf16.mxu0 0
  %1392 = vmatpush1.bf16.msra.mxu0 0
  %1393 = vmatprep.subr.bf16.mxu0 0
  %1394 = vmatpush1.bf16.msra.mxu0 0
  %1395 = vmatprep.subr.bf16.mxu0 0
  %1396 = vmatpush1.bf16.msra.mxu0 0
  %1397 = vmatprep.subr.bf16.mxu0 0
  %1398 = vmatpush1.bf16.msra.mxu0 0
  %1399 = vmatprep.mubr.bf16.mxu0 0
  %1400 = vmatmul.mubr.bf16.gmra.mrb[0].mxu0 %v1365
  %v1401 = vpop.f32.mrb[0].mxu0
  %v1402 = vadd.f32 0.0, %v1401
  %v1403 = vpop.f32.mrb[0].mxu0
  %v1404 = vpop.f32.mrb[0].mxu0
  %v1405 = vpop.f32.mrb[0].mxu0
  %1406 = vdwg.mxu0
  %v1408 = vrot.slane %v1402, 1
  %1409 = vrot.lane.b32.xlu0 %v1402, 64
  %v1410 = vpop.permute.xlu0 %1409
  %1411 = vrot.lane.b32.xlu0 %v1408, 64
  %v1412 = vpop.permute.xlu0 %1411
  %v1415 = vadd.f32 %v513, %v1410
  %v1416 = vadd.f32 %v514, %v1412
  %v1417 = vmul.f32 %v1415, 0.5
  %v1418 = vmul.f32 %v1416, 0.5
  %v1419 = vtanh.pop %v1417
  %v1420 = vtanh.pop %v1418
  %v1421 = vmul.f32 %v1419, 0.5
  %v1422 = vmul.f32 %v1420, 0.5
  %v1423 = vadd.f32 %v1421, 0.5
  %v1424 = vadd.f32 %v1422, 0.5
  %v1425 = vtanh.pop %v1415
  %v1426 = vtanh.pop %v1416
  %v1428 = vrot.slane %v1244, 1
  %1429 = vrot.lane.b32.xlu0 %v1244, 80
  %v1430 = vpop.permute.xlu0 %1429
  %1431 = vrot.lane.b32.xlu0 %v1428, 80
  %v1432 = vpop.permute.xlu0 %1431
  %v1435 = vmul.f32 %v1423, %v1430
  %v1436 = vmul.f32 %v1424, %v1432
  %1439 = vrot.lane.b32.xlu0 %v1425, 96
  %v1440 = vpop.permute.xlu0 %1439
  %1441 = vrot.lane.b32.xlu0 %v1426, 96
  %v1442 = vpop.permute.xlu0 %1441
  %v1445 = vmul.f32 %v1423, %v1440
  %v1446 = vmul.f32 %v1424, %v1442
  %1449 = vrot.lane.b32.xlu0 %v1445, 16
  %v1450 = vpop.permute.xlu0 %1449
  %1451 = vrot.lane.b32.xlu0 %v1446, 16
  %v1452 = vpop.permute.xlu0 %1451
  %v1455 = vadd.f32 %v1435, %v1450
  %v1456 = vadd.f32 %v1436, %v1452
  %v1457 = vtanh.pop %v1455
  %v1458 = vtanh.pop %v1456
  %1461 = vrot.lane.b32.xlu0 %v1457, 32
  %v1462 = vpop.permute.xlu0 %1461
  %1463 = vrot.lane.b32.xlu0 %v1458, 32
  %v1464 = vpop.permute.xlu0 %1463
  %v1467 = vmul.f32 %v1423, %v1462
  %v1468 = vmul.f32 %v1424, %v1464
  %v1471 = vrot.slane %v1468, 7
  %v1472 = vsel %vm134, %v1471, %v1467
  %1473 = vrot.lane.b32.xlu0 %v1472, 16
  %v1474 = vpop.permute.xlu0 %1473
  %v1476 = vsel %vm617, %v1474, %v1236
  %v1479 = vrot.slane %v1456, 7
  %v1480 = vsel %vm134, %v1479, %v1455
  %1481 = vrot.lane.b32.xlu0 %v1480, 48
  %v1482 = vpop.permute.xlu0 %1481
  %v1484 = vsel %vm617, %v1482, %v1244
  %v1485 = vpack.c.bf16 %v1354, %v1354
  %v1487 = vsel %vm36, %v1485, 0
  %1489 = vmatprep.subr.bf16.mxu0 0
  %1490 = vmatpush1.bf16.msra.mxu0 %v34
  %1491 = vmatprep.subr.bf16.mxu0 0
  %1492 = vmatpush1.bf16.msra.mxu0 0
  %1493 = vmatprep.subr.bf16.mxu0 0
  %1494 = vmatpush1.bf16.msra.mxu0 0
  %1495 = vmatprep.subr.bf16.mxu0 0
  %1496 = vmatpush1.bf16.msra.mxu0 0
  %1497 = vmatprep.subr.bf16.mxu0 0
  %1498 = vmatpush1.bf16.msra.mxu0 0
  %1499 = vmatprep.subr.bf16.mxu0 0
  %1500 = vmatpush1.bf16.msra.mxu0 0
  %1501 = vmatprep.subr.bf16.mxu0 0
  %1502 = vmatpush1.bf16.msra.mxu0 0
  %1503 = vmatprep.subr.bf16.mxu0 0
  %1504 = vmatpush1.bf16.msra.mxu0 0
  %1505 = vmatprep.subr.bf16.mxu0 0
  %1506 = vmatpush1.bf16.msra.mxu0 0
  %1507 = vmatprep.subr.bf16.mxu0 0
  %1508 = vmatpush1.bf16.msra.mxu0 0
  %1509 = vmatprep.subr.bf16.mxu0 0
  %1510 = vmatpush1.bf16.msra.mxu0 0
  %1511 = vmatprep.subr.bf16.mxu0 0
  %1512 = vmatpush1.bf16.msra.mxu0 0
  %1513 = vmatprep.subr.bf16.mxu0 0
  %1514 = vmatpush1.bf16.msra.mxu0 0
  %1515 = vmatprep.subr.bf16.mxu0 0
  %1516 = vmatpush1.bf16.msra.mxu0 0
  %1517 = vmatprep.subr.bf16.mxu0 0
  %1518 = vmatpush1.bf16.msra.mxu0 0
  %1519 = vmatprep.subr.bf16.mxu0 0
  %1520 = vmatpush1.bf16.msra.mxu0 0
  %1521 = vmatprep.mubr.bf16.mxu0 0
  %1522 = vmatmul.mubr.bf16.gmra.mrb[0].mxu0 %v1487
  %v1523 = vpop.f32.mrb[0].mxu0
  %v1524 = vadd.f32 0.0, %v1523
  %v1525 = vpop.f32.mrb[0].mxu0
  %v1526 = vpop.f32.mrb[0].mxu0
  %v1527 = vpop.f32.mrb[0].mxu0
  %1528 = vdwg.mxu0
  %v1530 = vrot.slane %v1524, 1
  %v1533 = vadd.f32 %v388, %v1524
  %v1534 = vadd.f32 %v389, %v1530
  %v1535 = vmul.f32 %v1533, 0.5
  %v1536 = vmul.f32 %v1534, 0.5
  %v1537 = vtanh.pop %v1535
  %v1538 = vtanh.pop %v1536
  %v1539 = vmul.f32 %v1537, 0.5
  %v1540 = vmul.f32 %v1538, 0.5
  %v1541 = vadd.f32 %v1539, 0.5
  %v1542 = vadd.f32 %v1540, 0.5
  %v1543 = vtanh.pop %v1533
  %v1544 = vtanh.pop %v1534
  %v1546 = vrot.slane %v1362, 1
  %1547 = vrot.lane.b32.xlu0 %v1362, 16
  %v1548 = vpop.permute.xlu0 %1547
  %1549 = vrot.lane.b32.xlu0 %v1546, 16
  %v1550 = vpop.permute.xlu0 %1549
  %v1553 = vmul.f32 %v1541, %v1548
  %v1554 = vmul.f32 %v1542, %v1550
  %1557 = vrot.lane.b32.xlu0 %v1543, 96
  %v1558 = vpop.permute.xlu0 %1557
  %1559 = vrot.lane.b32.xlu0 %v1544, 96
  %v1560 = vpop.permute.xlu0 %1559
  %v1563 = vmul.f32 %v1541, %v1558
  %v1564 = vmul.f32 %v1542, %v1560
  %1567 = vrot.lane.b32.xlu0 %v1563, 16
  %v1568 = vpop.permute.xlu0 %1567
  %1569 = vrot.lane.b32.xlu0 %v1564, 16
  %v1570 = vpop.permute.xlu0 %1569
  %v1573 = vadd.f32 %v1553, %v1568
  %v1574 = vadd.f32 %v1554, %v1570
  %v1575 = vtanh.pop %v1573
  %v1576 = vtanh.pop %v1574
  %1579 = vrot.lane.b32.xlu0 %v1575, 32
  %v1580 = vpop.permute.xlu0 %1579
  %1581 = vrot.lane.b32.xlu0 %v1576, 32
  %v1582 = vpop.permute.xlu0 %1581
  %v1585 = vmul.f32 %v1541, %v1580
  %v1586 = vmul.f32 %v1542, %v1582
  %v1589 = vrot.slane %v1586, 7
  %v1590 = vsel %vm134, %v1589, %v1585
  %1591 = vrot.lane.b32.xlu0 %v1590, 80
  %v1592 = vpop.permute.xlu0 %1591
  %v1594 = vsel %vm496, %v1592, %v1354
  %v1597 = vrot.slane %v1574, 7
  %v1598 = vsel %vm134, %v1597, %v1573
  %1599 = vrot.lane.b32.xlu0 %v1598, 112
  %v1600 = vpop.permute.xlu0 %1599
  %v1602 = vsel %vm496, %v1600, %v1362
  %v1603 = vpack.c.bf16 %v1476, %v1476
  %v1605 = vsel %vm36, %v1603, 0
  %1607 = vmatprep.subr.bf16.mxu0 0
  %1608 = vmatpush1.bf16.msra.mxu0 %v154
  %1609 = vmatprep.subr.bf16.mxu0 0
  %1610 = vmatpush1.bf16.msra.mxu0 0
  %1611 = vmatprep.subr.bf16.mxu0 0
  %1612 = vmatpush1.bf16.msra.mxu0 0
  %1613 = vmatprep.subr.bf16.mxu0 0
  %1614 = vmatpush1.bf16.msra.mxu0 0
  %1615 = vmatprep.subr.bf16.mxu0 0
  %1616 = vmatpush1.bf16.msra.mxu0 0
  %1617 = vmatprep.subr.bf16.mxu0 0
  %1618 = vmatpush1.bf16.msra.mxu0 0
  %1619 = vmatprep.subr.bf16.mxu0 0
  %1620 = vmatpush1.bf16.msra.mxu0 0
  %1621 = vmatprep.subr.bf16.mxu0 0
  %1622 = vmatpush1.bf16.msra.mxu0 0
  %1623 = vmatprep.subr.bf16.mxu0 0
  %1624 = vmatpush1.bf16.msra.mxu0 0
  %1625 = vmatprep.subr.bf16.mxu0 0
  %1626 = vmatpush1.bf16.msra.mxu0 0
  %1627 = vmatprep.subr.bf16.mxu0 0
  %1628 = vmatpush1.bf16.msra.mxu0 0
  %1629 = vmatprep.subr.bf16.mxu0 0
  %1630 = vmatpush1.bf16.msra.mxu0 0
  %1631 = vmatprep.subr.bf16.mxu0 0
  %1632 = vmatpush1.bf16.msra.mxu0 0
  %1633 = vmatprep.subr.bf16.mxu0 0
  %1634 = vmatpush1.bf16.msra.mxu0 0
  %1635 = vmatprep.subr.bf16.mxu0 0
  %1636 = vmatpush1.bf16.msra.mxu0 0
  %1637 = vmatprep.subr.bf16.mxu0 0
  %1638 = vmatpush1.bf16.msra.mxu0 0
  %1639 = vmatprep.mubr.bf16.mxu0 0
  %1640 = vmatmul.mubr.bf16.gmra.mrb[0].mxu0 %v1605
  %v1641 = vpop.f32.mrb[0].mxu0
  %v1642 = vadd.f32 0.0, %v1641
  %v1643 = vpop.f32.mrb[0].mxu0
  %v1644 = vpop.f32.mrb[0].mxu0
  %v1645 = vpop.f32.mrb[0].mxu0
  %1646 = vdwg.mxu0
  %v1648 = vrot.slane %v1642, 1
  %1649 = vrot.lane.b32.xlu0 %v1642, 64
  %v1650 = vpop.permute.xlu0 %1649
  %1651 = vrot.lane.b32.xlu0 %v1648, 64
  %v1652 = vpop.permute.xlu0 %1651
  %v1655 = vadd.f32 %v267, %v1650
  %v1656 = vadd.f32 %v268, %v1652
  %v1657 = vmul.f32 %v1655, 0.5
  %v1658 = vmul.f32 %v1656, 0.5
  %v1659 = vtanh.pop %v1657
  %v1660 = vtanh.pop %v1658
  %v1661 = vmul.f32 %v1659, 0.5
  %v1662 = vmul.f32 %v1660, 0.5
  %v1663 = vadd.f32 %v1661, 0.5
  %v1664 = vadd.f32 %v1662, 0.5
  %v1665 = vtanh.pop %v1655
  %v1666 = vtanh.pop %v1656
  %v1668 = vrot.slane %v1484, 1
  %1669 = vrot.lane.b32.xlu0 %v1484, 80
  %v1670 = vpop.permute.xlu0 %1669
  %1671 = vrot.lane.b32.xlu0 %v1668, 80
  %v1672 = vpop.permute.xlu0 %1671
  %v1675 = vmul.f32 %v1663, %v1670
  %v1676 = vmul.f32 %v1664, %v1672
  %1679 = vrot.lane.b32.xlu0 %v1665, 96
  %v1680 = vpop.permute.xlu0 %1679
  %1681 = vrot.lane.b32.xlu0 %v1666, 96
  %v1682 = vpop.permute.xlu0 %1681
  %v1685 = vmul.f32 %v1663, %v1680
  %v1686 = vmul.f32 %v1664, %v1682
  %1689 = vrot.lane.b32.xlu0 %v1685, 16
  %v1690 = vpop.permute.xlu0 %1689
  %1691 = vrot.lane.b32.xlu0 %v1686, 16
  %v1692 = vpop.permute.xlu0 %1691
  %v1695 = vadd.f32 %v1675, %v1690
  %v1696 = vadd.f32 %v1676, %v1692
  %v1697 = vtanh.pop %v1695
  %v1698 = vtanh.pop %v1696
  %1701 = vrot.lane.b32.xlu0 %v1697, 32
  %v1702 = vpop.permute.xlu0 %1701
  %1703 = vrot.lane.b32.xlu0 %v1698, 32
  %v1704 = vpop.permute.xlu0 %1703
  %v1707 = vmul.f32 %v1663, %v1702
  %v1708 = vmul.f32 %v1664, %v1704
  %v1711 = vrot.slane %v1708, 7
  %v1712 = vsel %vm134, %v1711, %v1707
  %1713 = vrot.lane.b32.xlu0 %v1712, 16
  %v1714 = vpop.permute.xlu0 %1713
  %v1716 = vsel %vm371, %v1714, %v1476
  %v1719 = vrot.slane %v1696, 7
  %v1720 = vsel %vm134, %v1719, %v1695
  %1721 = vrot.lane.b32.xlu0 %v1720, 48
  %v1722 = vpop.permute.xlu0 %1721
  %v1724 = vsel %vm371, %v1722, %v1484
  %v1725 = vpack.c.bf16 %v1594, %v1594
  %v1727 = vsel %vm36, %v1725, 0
  %1729 = vmatprep.subr.bf16.mxu0 0
  %1730 = vmatpush1.bf16.msra.mxu0 %v34
  %1731 = vmatprep.subr.bf16.mxu0 0
  %1732 = vmatpush1.bf16.msra.mxu0 0
  %1733 = vmatprep.subr.bf16.mxu0 0
  %1734 = vmatpush1.bf16.msra.mxu0 0
  %1735 = vmatprep.subr.bf16.mxu0 0
  %1736 = vmatpush1.bf16.msra.mxu0 0
  %1737 = vmatprep.subr.bf16.mxu0 0
  %1738 = vmatpush1.bf16.msra.mxu0 0
  %1739 = vmatprep.subr.bf16.mxu0 0
  %1740 = vmatpush1.bf16.msra.mxu0 0
  %1741 = vmatprep.subr.bf16.mxu0 0
  %1742 = vmatpush1.bf16.msra.mxu0 0
  %1743 = vmatprep.subr.bf16.mxu0 0
  %1744 = vmatpush1.bf16.msra.mxu0 0
  %1745 = vmatprep.subr.bf16.mxu0 0
  %1746 = vmatpush1.bf16.msra.mxu0 0
  %1747 = vmatprep.subr.bf16.mxu0 0
  %1748 = vmatpush1.bf16.msra.mxu0 0
  %1749 = vmatprep.subr.bf16.mxu0 0
  %1750 = vmatpush1.bf16.msra.mxu0 0
  %1751 = vmatprep.subr.bf16.mxu0 0
  %1752 = vmatpush1.bf16.msra.mxu0 0
  %1753 = vmatprep.subr.bf16.mxu0 0
  %1754 = vmatpush1.bf16.msra.mxu0 0
  %1755 = vmatprep.subr.bf16.mxu0 0
  %1756 = vmatpush1.bf16.msra.mxu0 0
  %1757 = vmatprep.subr.bf16.mxu0 0
  %1758 = vmatpush1.bf16.msra.mxu0 0
  %1759 = vmatprep.subr.bf16.mxu0 0
  %1760 = vmatpush1.bf16.msra.mxu0 0
  %1761 = vmatprep.mubr.bf16.mxu0 0
  %1762 = vmatmul.mubr.bf16.gmra.mrb[0].mxu0 %v1727
  %v1763 = vpop.f32.mrb[0].mxu0
  %v1764 = vadd.f32 0.0, %v1763
  %v1765 = vpop.f32.mrb[0].mxu0
  %v1766 = vpop.f32.mrb[0].mxu0
  %v1767 = vpop.f32.mrb[0].mxu0
  %1768 = vdwg.mxu0
  %v1770 = vrot.slane %v1764, 1
  %v1773 = vadd.f32 %v148, %v1764
  %v1774 = vadd.f32 %v149, %v1770
  %v1775 = vmul.f32 %v1773, 0.5
  %v1776 = vmul.f32 %v1774, 0.5
  %v1777 = vtanh.pop %v1775
  %v1778 = vtanh.pop %v1776
  %v1779 = vmul.f32 %v1777, 0.5
  %v1780 = vmul.f32 %v1778, 0.5
  %v1781 = vadd.f32 %v1779, 0.5
  %v1782 = vadd.f32 %v1780, 0.5
  %v1783 = vtanh.pop %v1773
  %v1784 = vtanh.pop %v1774
  %v1786 = vrot.slane %v1602, 1
  %1787 = vrot.lane.b32.xlu0 %v1602, 16
  %v1788 = vpop.permute.xlu0 %1787
  %1789 = vrot.lane.b32.xlu0 %v1786, 16
  %v1790 = vpop.permute.xlu0 %1789
  %v1793 = vmul.f32 %v1781, %v1788
  %v1794 = vmul.f32 %v1782, %v1790
  %1797 = vrot.lane.b32.xlu0 %v1783, 96
  %v1798 = vpop.permute.xlu0 %1797
  %1799 = vrot.lane.b32.xlu0 %v1784, 96
  %v1800 = vpop.permute.xlu0 %1799
  %v1803 = vmul.f32 %v1781, %v1798
  %v1804 = vmul.f32 %v1782, %v1800
  %1807 = vrot.lane.b32.xlu0 %v1803, 16
  %v1808 = vpop.permute.xlu0 %1807
  %1809 = vrot.lane.b32.xlu0 %v1804, 16
  %v1810 = vpop.permute.xlu0 %1809
  %v1813 = vadd.f32 %v1793, %v1808
  %v1814 = vadd.f32 %v1794, %v1810
  %v1815 = vtanh.pop %v1813
  %v1816 = vtanh.pop %v1814
  %1819 = vrot.lane.b32.xlu0 %v1815, 32
  %v1820 = vpop.permute.xlu0 %1819
  %1821 = vrot.lane.b32.xlu0 %v1816, 32
  %v1822 = vpop.permute.xlu0 %1821
  %v1825 = vmul.f32 %v1781, %v1820
  %v1826 = vmul.f32 %v1782, %v1822
  %v1829 = vrot.slane %v1826, 7
  %v1830 = vsel %vm134, %v1829, %v1825
  %1831 = vrot.lane.b32.xlu0 %v1830, 80
  %v1832 = vpop.permute.xlu0 %1831
  %v1834 = vsel %vm250, %v1832, %v1594
  %v1837 = vrot.slane %v1814, 7
  %v1838 = vsel %vm134, %v1837, %v1813
  %1839 = vrot.lane.b32.xlu0 %v1838, 112
  %v1840 = vpop.permute.xlu0 %1839
  %v1842 = vsel %vm250, %v1840, %v1602
  %v1843 = vpack.c.bf16 %v1716, %v1716
  %v1845 = vsel %vm36, %v1843, 0
  %1847 = vmatprep.subr.bf16.mxu0 0
  %1848 = vmatpush1.bf16.msra.mxu0 %v154
  %1849 = vmatprep.subr.bf16.mxu0 0
  %1850 = vmatpush1.bf16.msra.mxu0 0
  %1851 = vmatprep.subr.bf16.mxu0 0
  %1852 = vmatpush1.bf16.msra.mxu0 0
  %1853 = vmatprep.subr.bf16.mxu0 0
  %1854 = vmatpush1.bf16.msra.mxu0 0
  %1855 = vmatprep.subr.bf16.mxu0 0
  %1856 = vmatpush1.bf16.msra.mxu0 0
  %1857 = vmatprep.subr.bf16.mxu0 0
  %1858 = vmatpush1.bf16.msra.mxu0 0
  %1859 = vmatprep.subr.bf16.mxu0 0
  %1860 = vmatpush1.bf16.msra.mxu0 0
  %1861 = vmatprep.subr.bf16.mxu0 0
  %1862 = vmatpush1.bf16.msra.mxu0 0
  %1863 = vmatprep.subr.bf16.mxu0 0
  %1864 = vmatpush1.bf16.msra.mxu0 0
  %1865 = vmatprep.subr.bf16.mxu0 0
  %1866 = vmatpush1.bf16.msra.mxu0 0
  %1867 = vmatprep.subr.bf16.mxu0 0
  %1868 = vmatpush1.bf16.msra.mxu0 0
  %1869 = vmatprep.subr.bf16.mxu0 0
  %1870 = vmatpush1.bf16.msra.mxu0 0
  %1871 = vmatprep.subr.bf16.mxu0 0
  %1872 = vmatpush1.bf16.msra.mxu0 0
  %1873 = vmatprep.subr.bf16.mxu0 0
  %1874 = vmatpush1.bf16.msra.mxu0 0
  %1875 = vmatprep.subr.bf16.mxu0 0
  %1876 = vmatpush1.bf16.msra.mxu0 0
  %1877 = vmatprep.subr.bf16.mxu0 0
  %1878 = vmatpush1.bf16.msra.mxu0 0
  %1879 = vmatprep.mubr.bf16.mxu0 0
  %1880 = vmatmul.mubr.bf16.gmra.mrb[0].mxu0 %v1845
  %v1881 = vpop.f32.mrb[0].mxu0
  %v1882 = vadd.f32 0.0, %v1881
  %v1883 = vpop.f32.mrb[0].mxu0
  %v1884 = vpop.f32.mrb[0].mxu0
  %v1885 = vpop.f32.mrb[0].mxu0
  %1886 = vdwg.mxu0
  %v1888 = vrot.slane %v1882, 1
  %1889 = vrot.lane.b32.xlu0 %v1882, 64
  %v1890 = vpop.permute.xlu0 %1889
  %1891 = vrot.lane.b32.xlu0 %v1888, 64
  %v1892 = vpop.permute.xlu0 %1891
  %v1895 = vadd.f32 %v28, %v1890
  %v1896 = vadd.f32 %v29, %v1892
  %v1897 = vmul.f32 %v1895, 0.5
  %v1898 = vmul.f32 %v1896, 0.5
  %v1899 = vtanh.pop %v1897
  %v1900 = vtanh.pop %v1898
  %v1901 = vmul.f32 %v1899, 0.5
  %v1902 = vmul.f32 %v1900, 0.5
  %v1903 = vadd.f32 %v1901, 0.5
  %v1904 = vadd.f32 %v1902, 0.5
  %v1905 = vtanh.pop %v1895
  %v1906 = vtanh.pop %v1896
  %v1908 = vrot.slane %v1724, 1
  %1909 = vrot.lane.b32.xlu0 %v1724, 80
  %v1910 = vpop.permute.xlu0 %1909
  %1911 = vrot.lane.b32.xlu0 %v1908, 80
  %v1912 = vpop.permute.xlu0 %1911
  %v1915 = vmul.f32 %v1903, %v1910
  %v1916 = vmul.f32 %v1904, %v1912
  %1919 = vrot.lane.b32.xlu0 %v1905, 96
  %v1920 = vpop.permute.xlu0 %1919
  %1921 = vrot.lane.b32.xlu0 %v1906, 96
  %v1922 = vpop.permute.xlu0 %1921
  %v1925 = vmul.f32 %v1903, %v1920
  %v1926 = vmul.f32 %v1904, %v1922
  %1929 = vrot.lane.b32.xlu0 %v1925, 16
  %v1930 = vpop.permute.xlu0 %1929
  %1931 = vrot.lane.b32.xlu0 %v1926, 16
  %v1932 = vpop.permute.xlu0 %1931
  %v1935 = vadd.f32 %v1915, %v1930
  %v1936 = vadd.f32 %v1916, %v1932
  %v1937 = vtanh.pop %v1935
  %v1938 = vtanh.pop %v1936
  %1941 = vrot.lane.b32.xlu0 %v1937, 32
  %v1942 = vpop.permute.xlu0 %1941
  %1943 = vrot.lane.b32.xlu0 %v1938, 32
  %v1944 = vpop.permute.xlu0 %1943
  %v1947 = vmul.f32 %v1903, %v1942
  %v1948 = vmul.f32 %v1904, %v1944
  %v1951 = vrot.slane %v1948, 7
  %v1952 = vsel %vm134, %v1951, %v1947
  %1953 = vrot.lane.b32.xlu0 %v1952, 16
  %v1954 = vpop.permute.xlu0 %1953
  %v1956 = vsel %vm130, %v1954, %v1716
  %v1959 = vrot.slane %v1936, 7
  %v1960 = vsel %vm134, %v1959, %v1935
  %1961 = vrot.lane.b32.xlu0 %v1960, 48
  %v1962 = vpop.permute.xlu0 %1961
  %v1964 = vsel %vm130, %v1962, %v1724
  %1966 = vrot.lane.b32.xlu0 %v1956, 16
  %v1967 = vpop.permute.xlu0 %1966
  %v1969 = vsel %vm36, %v1834, %v1967
  %vm1970 = vcmask 254976
  %1971 = vst.msk [vmem:[%s4] sm:$0x3] %vm1970, %v1969
  %1973 = vrot.lane.b32.xlu0 %v1964, 16
  %v1974 = vpop.permute.xlu0 %1973
  %v1976 = vsel %vm36, %v1842, %v1974
  %1977 = vst.msk [vmem:[%s5] sm:$0x3] %vm1970, %v1976
  // Predicated region
  $region18: #{seq2seq_forward.6} parent=0 // pred_check
    _
  $region19: #{seq2seq_forward.6} parent=0 // pred_check_branch
    %1979 = sbr.rel (0) target = $region21
  $region20: #{seq2seq_forward.6} parent=0 // pred_region
    _
  $region21: #{seq2seq_forward.6} parent=0 // pred_fallthru
    _
  // Predicated region
  $region22: #{seq2seq_forward.6} parent=0 // pred_check
    _
  $region23: #{seq2seq_forward.6} parent=0 // pred_check_branch
    %1981 = sbr.rel (0) target = $region25
  $region24: #{seq2seq_forward.6} parent=0 // pred_region
    _
  $region25: #{seq2seq_forward.6} parent=0 // pred_fallthru
    _
  // Predicated region
  $region26: #{seq2seq_forward.6} parent=0 // pred_check
    _
  $region27: #{seq2seq_forward.6} parent=0 // pred_check_branch
    %1983 = sbr.rel (0) target = $region29
  $region28: #{seq2seq_forward.6} parent=0 // pred_region
    _
  $region29: #{seq2seq_forward.6} parent=0 // pred_fallthru
    _
  // Predicated region
  $region30: #{seq2seq_forward.6} parent=0 // pred_check
    _
  $region31: #{seq2seq_forward.6} parent=0 // pred_check_branch
    %1985 = sbr.rel (0) target = $region33
  $region32: #{seq2seq_forward.6} parent=0 // pred_region
    _
  $region33: #{seq2seq_forward.6} parent=0 // pred_fallthru
    _

</llo_original>
